<compile_context>
chip_gen: v7x
topology: tpu7x:2x2x1
jax: 0.10.0
libtpu: 0.0.40
codegen_flags: <defaults>
</compile_context>

<pallas_src>
import functools

import jax
import jax.numpy as jnp
from jax import lax
from jax.experimental import pallas as pl
from jax.experimental.pallas import tpu as pltpu

_I32_MIN = -(2 ** 31)
_CQ = 8                      # queries per MXU chunk (divides every tq; tq % 16 == 0)


def _round_up(x, m):
    return ((x + m - 1) // m) * m


# ---------------------------------------------------------------------------
# glue: index math / patch gathering (no FLOPs)
# ---------------------------------------------------------------------------
def _reflect(idx, lim):
    """stnls-style reflection: -1 -> 1, lim -> lim-2, ..."""
    idx = jnp.where(idx < 0, -idx, idx)
    idx = jnp.where(idx >= lim, 2 * (lim - 1) - idx, idx)
    return idx


def _split_heads(vid, nheads):
    B, T, C, H, W = vid.shape
    Ch = C // nheads
    v = vid.reshape(B, T, nheads, Ch, H, W)
    v = jnp.transpose(v, (0, 2, 1, 3, 4, 5))           # (B, HD, T, Ch, H, W)
    return v.reshape(B * nheads, T, Ch, H * W)          # flatten spatial


def _build_patches(vid0, vid1, *, k, ps, ws, wt, nheads, stride0, stride1, dilation):
    B, T, C, H, W = vid0.shape
    HD = nheads
    Ch = C // nheads
    BH = B * HD

    nH0 = (H - 1) // stride0 + 1
    nW0 = (W - 1) // stride0 + 1
    Q = T * nH0 * nW0
    st = min(T, 2 * wt + 1)
    Lc = st * ws * ws
    D = Ch * ps * ps                                     # pt = 1
    psHalf = ps // 2
    wsHalf = (ws - 1) // 2

    Dp = _round_up(D, 128)                               # features on lanes
    Lcp = _round_up(Lc, 16)                              # candidates on (bf16) sublanes

    # query coordinates
    tt, hh, ww = jnp.meshgrid(jnp.arange(T),
                              jnp.arange(nH0) * stride0,
                              jnp.arange(nW0) * stride0, indexing="ij")
    q_ti, q_h, q_w = tt.reshape(-1), hh.reshape(-1), ww.reshape(-1)   # (Q,)

    p_off = dilation * (jnp.arange(ps) - psHalf)         # centered patch (use_adj)
    w_off = stride1 * (jnp.arange(ws) - wsHalf)          # centered search window

    # bf16 patches halve the dominant HBM stream; MXU accumulates in f32 in-kernel
    vid0h = _split_heads(vid0.astype(jnp.bfloat16), nheads)   # (BH, T, Ch, H*W)
    vid1h = _split_heads(vid1.astype(jnp.bfloat16), nheads)

    # ---- query patches P0 ------------------------------------------------
    r0 = _reflect(q_h[:, None] + p_off[None, :], H)      # (Q, ps)
    c0 = _reflect(q_w[:, None] + p_off[None, :], W)      # (Q, ps)
    pix0 = (r0[:, :, None] * W + c0[:, None, :]).reshape(Q, ps * ps)

    v0q = jnp.take(vid0h, q_ti, axis=1)                  # (BH, Q, Ch, H*W)
    idx0 = jnp.broadcast_to(pix0[None, :, None, :], (BH, Q, Ch, ps * ps))
    P0 = jnp.take_along_axis(v0q, idx0, axis=3)          # (BH, Q, Ch, ps*ps)
    P0 = P0.reshape(BH, Q, D)

    # ---- candidate patches PC ---------------------------------------------
    ch = _reflect(q_h[:, None] + w_off[None, :], H)      # (Q, ws) candidate centers
    cw = _reflect(q_w[:, None] + w_off[None, :], W)      # (Q, ws)
    rr = _reflect(ch[:, :, None] + p_off[None, None, :], H)   # (Q, ws, ps)
    cc = _reflect(cw[:, :, None] + p_off[None, None, :], W)   # (Q, ws, ps)
    pix1 = (rr[:, :, None, :, None] * W + cc[:, None, :, None, :])   # (Q, ws, ws, ps, ps)
    pix1 = pix1.reshape(Q, ws * ws * ps * ps)

    t_start = jnp.clip(q_ti - wt, 0, T - st)             # (Q,)
    t1 = t_start[:, None] + jnp.arange(st)[None, :]      # (Q, st)

    v1q = jnp.take(vid1h, t1.reshape(-1), axis=1)        # (BH, Q*st, Ch, H*W)
    v1q = v1q.reshape(BH, Q, st, Ch, H * W)
    idx1 = jnp.broadcast_to(pix1[None, :, None, None, :],
                            (BH, Q, st, Ch, ws * ws * ps * ps))
    PC = jnp.take_along_axis(v1q, idx1, axis=4)          # (BH, Q, st, Ch, ws*ws*ps*ps)
    PC = PC.reshape(BH, Q, st, Ch, ws * ws, ps * ps)
    PC = jnp.transpose(PC, (0, 1, 2, 4, 3, 5))           # (BH, Q, st, ws*ws, Ch, ps*ps)
    PC = PC.reshape(BH, Q, Lc, D)

    # ---- zero-pad feature dim to 128-lane multiple, candidates to 16-sublane ----
    if Dp > D:
        P0 = jnp.pad(P0, ((0, 0), (0, 0), (0, Dp - D)))
        PC = jnp.pad(PC, ((0, 0), (0, 0), (0, 0), (0, Dp - D)))
    if Lcp > Lc:
        PC = jnp.pad(PC, ((0, 0), (0, 0), (0, Lcp - Lc), (0, 0)))

    # ---- candidate coordinates (t, h, w) -----------------------------------
    t_c = jnp.broadcast_to(t1[:, :, None, None], (Q, st, ws, ws))
    h_c = jnp.broadcast_to(ch[:, None, :, None], (Q, st, ws, ws))
    w_c = jnp.broadcast_to(cw[:, None, None, :], (Q, st, ws, ws))
    coords = jnp.stack([t_c, h_c, w_c], axis=-1).reshape(Q, Lc, 3).astype(jnp.int32)

    meta = dict(B=B, HD=HD, BH=BH, Q=Q, Lc=Lc, Lcp=Lcp, D=D, Dp=Dp, k=k)
    return P0, PC, coords, meta


# ---------------------------------------------------------------------------
# Pallas kernel: MXU patch inner products + iterative top-k
# ---------------------------------------------------------------------------
def _nl_topk_kernel(p0_ref, pc_ref, dist_ref, idx_ref, d_sc, *,
                    kp, n_valid, lane_bits, cq):
    # p0_ref: (tq, Dp) bf16        pc_ref: (tq, Lcp, Dp) bf16
    # dist_ref: (tq, kp) f32       idx_ref: (tq, kp) i32
    # d_sc: (tq, Lcp) f32 scratch (all dot products of this query tile)
    tq, Lcp = d_sc.shape
    Dp = p0_ref.shape[-1]
    n_chunks = tq // cq

    # ---- hot path 1: patch dot products on the MXU (bf16 in, f32 accumulate).
    # Per cq-query chunk: flatten PC to (cq*Lcp, Dp), contract against the cq
    # query patches (contraction on dim 1 of both, i.e. A @ B^T) -> (cq*Lcp, cq)
    # cross products, then keep each query's own column with a hoisted one-hot.
    # The cq-fold redundancy is free on the MXU (only cq of its 128/256 columns
    # are in use either way).  Lcp % 8 == 0, so the reshapes are pure views.
    onehot = (lax.broadcasted_iota(jnp.int32, (cq, 1, cq), 0) ==
              lax.broadcasted_iota(jnp.int32, (cq, 1, cq), 2))
    onehot = jnp.broadcast_to(onehot, (cq, Lcp, cq)).astype(jnp.float32)

    def _chunk(ci, carry):
        i0 = pl.multiple_of(ci * cq, cq)
        p0c = p0_ref[pl.ds(i0, cq), :]                         # (cq, Dp) bf16
        pcc = pc_ref[pl.ds(i0, cq), :, :]                      # (cq, Lcp, Dp) bf16
        pc2d = pcc.reshape(cq * Lcp, Dp)                       # sublane-aligned view
        m = lax.dot_general(pc2d, p0c, (((1,), (1,)), ((), ())),
                            preferred_element_type=jnp.float32)    # (cq*Lcp, cq)
        m3 = m.reshape(cq, Lcp, cq)                            # aligned split view
        d_sc[pl.ds(i0, cq), :] = jnp.sum(m3 * onehot, axis=-1)  # (cq, Lcp)
        return carry

    lax.fori_loop(0, n_chunks, _chunk, 0)
    # TODO(synk): the d_sc store/reload (~tq*Lcp*4 bytes per tile) could be
    # dropped once a single-pass matmul produces the whole (tq, Lcp) block.

    d = d_sc[...]                                              # (tq, Lcp) f32 exact

    # ---- hot path 2: top-k.  Argmax uses ONE cross-candidate reduction per
    # step on a packed (value-bits | inverted candidate id) int32 key; the
    # emitted value is re-gathered exactly from d with a masked max (key
    # quantization only affects tie-breaking among near-equal candidates).
    flip = jnp.int32(0x7FFFFFFF)
    hi_mask = jnp.int32(-(1 << lane_bits))
    lo_mask = jnp.int32((1 << lane_bits) - 1)

    cid = lax.broadcasted_iota(jnp.int32, d.shape, 1)          # candidate ids
    valid = cid < n_valid
    bits = pltpu.bitcast(d, jnp.int32)
    mono = jnp.where(bits >= 0, bits, bits ^ flip)             # order-preserving
    key = (mono & hi_mask) | (lo_mask - cid)                   # ties -> lowest id
    key = jnp.where(valid, key, jnp.int32(_I32_MIN))           # mask padded cands
    dm = jnp.where(valid, d, -jnp.inf)                         # exact-value source

    vals, sels = [], []
    for _ in range(kp):                                        # kp small & static
        best = jnp.max(key, axis=1, keepdims=True)             # (tq, 1)
        sel = lo_mask - (best & lo_mask)                       # argmax candidate id
        hit = cid == sel
        vals.append(jnp.max(jnp.where(hit, dm, -jnp.inf),
                            axis=1, keepdims=True))            # exact f32 value
        sels.append(sel)
        key = jnp.where(hit, jnp.int32(_I32_MIN), key)         # knock out winner

    dist_ref[...] = jnp.concatenate(vals, axis=1)              # (tq, kp)
    idx_ref[...] = jnp.concatenate(sels, axis=1)


# ---------------------------------------------------------------------------
# tile / VMEM selection (generation-aware)
# ---------------------------------------------------------------------------
def _vmem_capacity_bytes():
    try:
        cap = int(pltpu.get_tpu_info().vmem_capacity_bytes)
        if cap > 0:
            return cap
    except Exception:
        pass
    return 64 << 20                     # conservative fallback (v7x per-core VMEM)


def _tile_vmem_bytes(tq, Lcp, Dp, kp, cq=_CQ):
    pc_blk = tq * Lcp * Dp * 2          # bf16 candidate block
    p0_blk = tq * Dp * 2                # bf16 query block
    out_blk = 2 * tq * kp * 4           # f32 dists + i32 inds
    pipelined = 2 * (pc_blk + p0_blk + out_blk)   # Pallas double-buffers each stream
    d_scratch = tq * Lcp * 4            # f32 dot-product scratch
    mm_tmp = 2 * cq * Lcp * cq * 4 + cq * Lcp * Dp * 2 + (1 << 20)  # chunk temporaries
    return pipelined + d_scratch + mm_tmp


def _pick_tile(Q, Lcp, Dp, kp):
    cap = _vmem_capacity_bytes()
    budget = int(cap * 0.80)            # leave headroom for Mosaic internal scratch
    q16 = _round_up(max(Q, 16), 16)
    cands = [t for t in range(256, 15, -16)
             if t <= q16 and _tile_vmem_bytes(t, Lcp, Dp, kp) <= budget]
    if not cands:
        cands = [16]
    # minimize query padding first, then prefer the biggest tile
    tq = min(cands, key=lambda t: (_round_up(Q, t), -t))
    need = _tile_vmem_bytes(tq, Lcp, Dp, kp)
    vmem_limit = int(min(max(need + (8 << 20), 32 << 20), int(cap * 0.85)))
    return tq, vmem_limit


def _run_topk(P0, PC, *, k, Q, Lc, Lcp, Dp, BH):
    kp = max(8, _round_up(k, 8))        # k outputs are f32/i32 -> 8-sublane pad is fine
    tq, vmem_limit = _pick_tile(Q, Lcp, Dp, kp)
    Qp = _round_up(Q, tq)

    if Qp > Q:                          # pad query dim so the grid tiles evenly
        P0 = jnp.pad(P0, ((0, 0), (0, Qp - Q), (0, 0)))
        PC = jnp.pad(PC, ((0, 0), (0, Qp - Q), (0, 0), (0, 0)))

    lane_bits = max(1, (Lcp - 1).bit_length())

    dists_p, idx_p = pl.pallas_call(
        functools.partial(_nl_topk_kernel, kp=kp, n_valid=Lc,
                          lane_bits=lane_bits, cq=_CQ),
        out_shape=(jax.ShapeDtypeStruct((BH, Qp, kp), jnp.float32),
                   jax.ShapeDtypeStruct((BH, Qp, kp), jnp.int32)),
        grid_spec=pltpu.PrefetchScalarGridSpec(
            num_scalar_prefetch=0,
            grid=(BH, Qp // tq),
            in_specs=[
                pl.BlockSpec((None, tq, Dp), lambda b, q: (b, q, 0)),
                pl.BlockSpec((None, tq, Lcp, Dp), lambda b, q: (b, q, 0, 0)),
            ],
            out_specs=[
                pl.BlockSpec((None, tq, kp), lambda b, q: (b, q, 0)),
                pl.BlockSpec((None, tq, kp), lambda b, q: (b, q, 0)),
            ],
            scratch_shapes=[pltpu.VMEM((tq, Lcp), jnp.float32)],
        ),
        compiler_params=pltpu.CompilerParams(
            dimension_semantics=("parallel", "parallel"),
            vmem_limit_bytes=vmem_limit),
    )(P0, PC)

    return dists_p[:, :Q, :k], idx_p[:, :Q, :k]


# ---------------------------------------------------------------------------
# NLSearch.forward
# ---------------------------------------------------------------------------
def nl_search_forward(vid0, vid1, *, k=7, ps=7, ws=8, wt=1, nheads=1,
                      stride0=4, stride1=1, dilation=1):
    P0, PC, coords, m = _build_patches(
        vid0, vid1, k=k, ps=ps, ws=ws, wt=wt, nheads=nheads,
        stride0=stride0, stride1=stride1, dilation=dilation)
    B, HD, BH, Q, Lc = m["B"], m["HD"], m["BH"], m["Q"], m["Lc"]

    dists, idx = _run_topk(P0, PC, k=k, Q=Q, Lc=Lc, Lcp=m["Lcp"],
                           Dp=m["Dp"], BH=BH)

    # flat candidate index -> (t, h, w)
    idx = jnp.clip(idx, 0, Lc - 1)
    inds = coords[jnp.arange(Q)[None, :, None], idx]        # (BH, Q, k, 3)

    dists = dists.reshape(B, HD, Q, k)
    inds = inds.reshape(B, HD, Q, k, 3)
    return dists, inds


# ---------------------------------------------------------------------------
if __name__ == "__main__":
    key = jax.random.PRNGKey(0)
    k0, k1 = jax.random.split(key)
    B, T, C, H, W = 2, 3, 4, 16, 16
    vid0 = jax.random.normal(k0, (B, T, C, H, W), dtype=jnp.float32)
    vid1 = jax.random.normal(k1, (B, T, C, H, W), dtype=jnp.float32)

    dists, inds = nl_search_forward(vid0, vid1)
    dists, inds = jax.block_until_ready((dists, inds))

    # shape / dtype checks (Q = T * ceil(H/4) * ceil(W/4) = 3*4*4 = 48)
    assert dists.shape == (B, 1, 48, 7) and dists.dtype == jnp.float32
    assert inds.shape == (B, 1, 48, 7, 3) and inds.dtype == jnp.int32

    # pure-JAX reference on the same bf16 patches the kernel consumes
    P0, PC, coords, m = _build_patches(
        vid0, vid1, k=7, ps=7, ws=8, wt=1, nheads=1,
        stride0=4, stride1=1, dilation=1)
    d_ref = jnp.einsum("bqld,bqd->bql",
                       PC.astype(jnp.float32), P0.astype(jnp.float32))[:, :, :m["Lc"]]
    top_ref = jax.lax.top_k(d_ref, 7)[0].reshape(B, 1, 48, 7)
    assert jnp.allclose(dists, top_ref, rtol=1e-3, atol=1e-3), "mismatch vs reference"
    assert bool(jnp.all(jnp.isfinite(dists)))

    print("KERNEL_OK")
</pallas_src>

<mosaic_0001>
module attributes {stable_mosaic.version = 11 : i64} {
  func.func @_nl_topk_kernel(%arg0: i32, %arg1: i32, %arg2: memref<1x48x256xbf16, #tpu.memory_space<vmem>>, %arg3: memref<1x48x192x256xbf16, #tpu.memory_space<vmem>>, %arg4: memref<1x48x8xf32, #tpu.memory_space<vmem>>, %arg5: memref<1x48x8xi32, #tpu.memory_space<vmem>>, %arg6: memref<48x192xf32, #tpu.memory_space<vmem>>) attributes {dimension_semantics = [#tpu.dimension_semantics<parallel>, #tpu.dimension_semantics<parallel>], iteration_bounds = array<i64: 2, 1>, scalar_prefetch = 0 : i64, scratch_operands = 1 : i64, tpu.core_type = #tpu.core_type<tc>, window_params = [{transform_indices = @transform_0, window_bounds = array<i64: 1, 48, 256>}, {transform_indices = @transform_1, window_bounds = array<i64: 1, 48, 192, 256>}, {transform_indices = @transform_2, window_bounds = array<i64: 1, 48, 8>}, {transform_indices = @transform_3, window_bounds = array<i64: 1, 48, 8>}]} {
    %0 = tpu.iota {dimensions = array<i32: 0>} : vector<8x1x8xi32>
    %1 = tpu.iota {dimensions = array<i32: 2>} : vector<8x1x8xi32>
    %2 = arith.cmpi eq, %0, %1 : vector<8x1x8xi32>
    %3 = vector.shape_cast %2 : vector<8x1x8xi1> to vector<8x1x8xi1>
    %4 = vector.broadcast %3 : vector<8x1x8xi1> to vector<8x192x8xi1>
    %5 = arith.extui %4 : vector<8x192x8xi1> to vector<8x192x8xi32>
    %6 = arith.sitofp %5 : vector<8x192x8xi32> to vector<8x192x8xf32>
    %c0_i32 = arith.constant 0 : i32
    %c6_i32 = arith.constant 6 : i32
    %7 = arith.addi %c0_i32, %c6_i32 : i32
    %c1_i32 = arith.constant 1 : i32
    scf.for %arg7 = %c0_i32 to %7 step %c1_i32  : i32 {
      %c8_i32 = arith.constant 8 : i32
      %145 = arith.muli %arg7, %c8_i32 : i32
      %146 = tpu.assume_multiple %145, 8 : i32
      %c0_56 = arith.constant 0 : index
      %147 = arith.index_cast %146 : i32 to index
      %c0_57 = arith.constant 0 : index
      %148 = vector.load %arg2[%c0_56, %147, %c0_57] : memref<1x48x256xbf16, #tpu.memory_space<vmem>>, vector<1x8x256xbf16>
      %149 = vector.shape_cast %148 : vector<1x8x256xbf16> to vector<8x256xbf16>
      %c0_58 = arith.constant 0 : index
      %150 = arith.index_cast %146 : i32 to index
      %c0_59 = arith.constant 0 : index
      %c0_60 = arith.constant 0 : index
      %151 = vector.load %arg3[%c0_58, %150, %c0_59, %c0_60] : memref<1x48x192x256xbf16, #tpu.memory_space<vmem>>, vector<1x8x192x256xbf16>
      %152 = vector.shape_cast %151 : vector<1x8x192x256xbf16> to vector<8x192x256xbf16>
      %153 = vector.shape_cast %152 : vector<8x192x256xbf16> to vector<1536x256xbf16>
      %cst_61 = arith.constant dense<0.000000e+00> : vector<1536x8xf32>
      %154 = tpu.matmul %153, %149, %cst_61 {dimension_numbers = #tpu.dot_dimension_numbers<[1], [1], [0], [0], [0, 0, 1, 0], [], []>} : vector<1536x256xbf16>, vector<8x256xbf16>, vector<1536x8xf32> -> vector<1536x8xf32>
      %155 = vector.shape_cast %154 : vector<1536x8xf32> to vector<8x192x8xf32>
      %156 = arith.mulf %155, %6 : vector<8x192x8xf32>
      %cst_62 = arith.constant dense<0.000000e+00> : vector<8x192xf32>
      %157 = vector.multi_reduction <add>, %156, %cst_62 [2] : vector<8x192x8xf32> to vector<8x192xf32>
      %158 = arith.index_cast %146 : i32 to index
      %c0_63 = arith.constant 0 : index
      %159 = vector.load %arg6[%158, %c0_63] : memref<48x192xf32, #tpu.memory_space<vmem>>, vector<8x192xf32>
      tpu.vector_store %arg6[%158, %c0_63], %157 {strides = array<i32>} : memref<48x192xf32, #tpu.memory_space<vmem>>, vector<8x192xf32>,
    }
    %c6_i32_0 = arith.constant 6 : i32
    %c0 = arith.constant 0 : index
    %c0_1 = arith.constant 0 : index
    %8 = vector.load %arg6[%c0, %c0_1] : memref<48x192xf32, #tpu.memory_space<vmem>>, vector<48x192xf32>
    %9 = tpu.iota {dimensions = array<i32: 1>} : vector<48x192xi32>
    %c192_i32 = arith.constant 192 : i32
    %10 = vector.broadcast %c192_i32 : i32 to vector<48x192xi32>
    %11 = arith.cmpi slt, %9, %10 : vector<48x192xi32>
    %12 = tpu.bitcast %8 : vector<48x192xf32> -> vector<48x192xi32>
    %c0_i32_2 = arith.constant 0 : i32
    %13 = vector.broadcast %c0_i32_2 : i32 to vector<48x192xi32>
    %14 = arith.cmpi sge, %12, %13 : vector<48x192xi32>
    %c2147483647_i32 = arith.constant 2147483647 : i32
    %15 = vector.broadcast %c2147483647_i32 : i32 to vector<48x192xi32>
    %16 = arith.xori %12, %15 : vector<48x192xi32>
    %17 = arith.select %14, %12, %16 : vector<48x192xi1>, vector<48x192xi32>
    %c-256_i32 = arith.constant -256 : i32
    %18 = vector.broadcast %c-256_i32 : i32 to vector<48x192xi32>
    %19 = arith.andi %17, %18 : vector<48x192xi32>
    %c255_i32 = arith.constant 255 : i32
    %20 = vector.broadcast %c255_i32 : i32 to vector<48x192xi32>
    %21 = arith.subi %20, %9 : vector<48x192xi32>
    %22 = arith.ori %19, %21 : vector<48x192xi32>
    %c-2147483648_i32 = arith.constant -2147483648 : i32
    %23 = vector.broadcast %c-2147483648_i32 : i32 to vector<48x192xi32>
    %24 = arith.select %11, %22, %23 : vector<48x192xi1>, vector<48x192xi32>
    %cst = arith.constant 0xFF800000 : f32
    %25 = vector.broadcast %cst : f32 to vector<48x192xf32>
    %26 = arith.select %11, %8, %25 : vector<48x192xi1>, vector<48x192xf32>
    %cst_3 = arith.constant dense<-2147483648> : vector<48xi32>
    %27 = vector.multi_reduction <maxsi>, %24, %cst_3 [1] : vector<48x192xi32> to vector<48xi32>
    %28 = vector.shape_cast %27 : vector<48xi32> to vector<48x1xi32>
    %c255_i32_4 = arith.constant 255 : i32
    %29 = vector.broadcast %c255_i32_4 : i32 to vector<48x1xi32>
    %30 = arith.andi %28, %29 : vector<48x1xi32>
    %c255_i32_5 = arith.constant 255 : i32
    %31 = vector.broadcast %c255_i32_5 : i32 to vector<48x1xi32>
    %32 = arith.subi %31, %30 : vector<48x1xi32>
    %33 = vector.broadcast %32 : vector<48x1xi32> to vector<48x192xi32>
    %34 = arith.cmpi eq, %9, %33 : vector<48x192xi32>
    %cst_6 = arith.constant 0xFF800000 : f32
    %35 = vector.broadcast %cst_6 : f32 to vector<48x192xf32>
    %36 = arith.select %34, %26, %35 : vector<48x192xi1>, vector<48x192xf32>
    %cst_7 = arith.constant dense<0xFF800000> : vector<48xf32>
    %37 = vector.multi_reduction <maximumf>, %36, %cst_7 [1] : vector<48x192xf32> to vector<48xf32>
    %38 = vector.shape_cast %37 : vector<48xf32> to vector<48x1xf32>
    %c-2147483648_i32_8 = arith.constant -2147483648 : i32
    %39 = vector.broadcast %c-2147483648_i32_8 : i32 to vector<48x192xi32>
    %40 = arith.select %34, %39, %24 : vector<48x192xi1>, vector<48x192xi32>
    %cst_9 = arith.constant dense<-2147483648> : vector<48xi32>
    %41 = vector.multi_reduction <maxsi>, %40, %cst_9 [1] : vector<48x192xi32> to vector<48xi32>
    %42 = vector.shape_cast %41 : vector<48xi32> to vector<48x1xi32>
    %c255_i32_10 = arith.constant 255 : i32
    %43 = vector.broadcast %c255_i32_10 : i32 to vector<48x1xi32>
    %44 = arith.andi %42, %43 : vector<48x1xi32>
    %c255_i32_11 = arith.constant 255 : i32
    %45 = vector.broadcast %c255_i32_11 : i32 to vector<48x1xi32>
    %46 = arith.subi %45, %44 : vector<48x1xi32>
    %47 = vector.broadcast %46 : vector<48x1xi32> to vector<48x192xi32>
    %48 = arith.cmpi eq, %9, %47 : vector<48x192xi32>
    %cst_12 = arith.constant 0xFF800000 : f32
    %49 = vector.broadcast %cst_12 : f32 to vector<48x192xf32>
    %50 = arith.select %48, %26, %49 : vector<48x192xi1>, vector<48x192xf32>
    %cst_13 = arith.constant dense<0xFF800000> : vector<48xf32>
    %51 = vector.multi_reduction <maximumf>, %50, %cst_13 [1] : vector<48x192xf32> to vector<48xf32>
    %52 = vector.shape_cast %51 : vector<48xf32> to vector<48x1xf32>
    %c-2147483648_i32_14 = arith.constant -2147483648 : i32
    %53 = vector.broadcast %c-2147483648_i32_14 : i32 to vector<48x192xi32>
    %54 = arith.select %48, %53, %40 : vector<48x192xi1>, vector<48x192xi32>
    %cst_15 = arith.constant dense<-2147483648> : vector<48xi32>
    %55 = vector.multi_reduction <maxsi>, %54, %cst_15 [1] : vector<48x192xi32> to vector<48xi32>
    %56 = vector.shape_cast %55 : vector<48xi32> to vector<48x1xi32>
    %c255_i32_16 = arith.constant 255 : i32
    %57 = vector.broadcast %c255_i32_16 : i32 to vector<48x1xi32>
    %58 = arith.andi %56, %57 : vector<48x1xi32>
    %c255_i32_17 = arith.constant 255 : i32
    %59 = vector.broadcast %c255_i32_17 : i32 to vector<48x1xi32>
    %60 = arith.subi %59, %58 : vector<48x1xi32>
    %61 = vector.broadcast %60 : vector<48x1xi32> to vector<48x192xi32>
    %62 = arith.cmpi eq, %9, %61 : vector<48x192xi32>
    %cst_18 = arith.constant 0xFF800000 : f32
    %63 = vector.broadcast %cst_18 : f32 to vector<48x192xf32>
    %64 = arith.select %62, %26, %63 : vector<48x192xi1>, vector<48x192xf32>
    %cst_19 = arith.constant dense<0xFF800000> : vector<48xf32>
    %65 = vector.multi_reduction <maximumf>, %64, %cst_19 [1] : vector<48x192xf32> to vector<48xf32>
    %66 = vector.shape_cast %65 : vector<48xf32> to vector<48x1xf32>
    %c-2147483648_i32_20 = arith.constant -2147483648 : i32
    %67 = vector.broadcast %c-2147483648_i32_20 : i32 to vector<48x192xi32>
    %68 = arith.select %62, %67, %54 : vector<48x192xi1>, vector<48x192xi32>
    %cst_21 = arith.constant dense<-2147483648> : vector<48xi32>
    %69 = vector.multi_reduction <maxsi>, %68, %cst_21 [1] : vector<48x192xi32> to vector<48xi32>
    %70 = vector.shape_cast %69 : vector<48xi32> to vector<48x1xi32>
    %c255_i32_22 = arith.constant 255 : i32
    %71 = vector.broadcast %c255_i32_22 : i32 to vector<48x1xi32>
    %72 = arith.andi %70, %71 : vector<48x1xi32>
    %c255_i32_23 = arith.constant 255 : i32
    %73 = vector.broadcast %c255_i32_23 : i32 to vector<48x1xi32>
    %74 = arith.subi %73, %72 : vector<48x1xi32>
    %75 = vector.broadcast %74 : vector<48x1xi32> to vector<48x192xi32>
    %76 = arith.cmpi eq, %9, %75 : vector<48x192xi32>
    %cst_24 = arith.constant 0xFF800000 : f32
    %77 = vector.broadcast %cst_24 : f32 to vector<48x192xf32>
    %78 = arith.select %76, %26, %77 : vector<48x192xi1>, vector<48x192xf32>
    %cst_25 = arith.constant dense<0xFF800000> : vector<48xf32>
    %79 = vector.multi_reduction <maximumf>, %78, %cst_25 [1] : vector<48x192xf32> to vector<48xf32>
    %80 = vector.shape_cast %79 : vector<48xf32> to vector<48x1xf32>
    %c-2147483648_i32_26 = arith.constant -2147483648 : i32
    %81 = vector.broadcast %c-2147483648_i32_26 : i32 to vector<48x192xi32>
    %82 = arith.select %76, %81, %68 : vector<48x192xi1>, vector<48x192xi32>
    %cst_27 = arith.constant dense<-2147483648> : vector<48xi32>
    %83 = vector.multi_reduction <maxsi>, %82, %cst_27 [1] : vector<48x192xi32> to vector<48xi32>
    %84 = vector.shape_cast %83 : vector<48xi32> to vector<48x1xi32>
    %c255_i32_28 = arith.constant 255 : i32
    %85 = vector.broadcast %c255_i32_28 : i32 to vector<48x1xi32>
    %86 = arith.andi %84, %85 : vector<48x1xi32>
    %c255_i32_29 = arith.constant 255 : i32
    %87 = vector.broadcast %c255_i32_29 : i32 to vector<48x1xi32>
    %88 = arith.subi %87, %86 : vector<48x1xi32>
    %89 = vector.broadcast %88 : vector<48x1xi32> to vector<48x192xi32>
    %90 = arith.cmpi eq, %9, %89 : vector<48x192xi32>
    %cst_30 = arith.constant 0xFF800000 : f32
    %91 = vector.broadcast %cst_30 : f32 to vector<48x192xf32>
    %92 = arith.select %90, %26, %91 : vector<48x192xi1>, vector<48x192xf32>
    %cst_31 = arith.constant dense<0xFF800000> : vector<48xf32>
    %93 = vector.multi_reduction <maximumf>, %92, %cst_31 [1] : vector<48x192xf32> to vector<48xf32>
    %94 = vector.shape_cast %93 : vector<48xf32> to vector<48x1xf32>
    %c-2147483648_i32_32 = arith.constant -2147483648 : i32
    %95 = vector.broadcast %c-2147483648_i32_32 : i32 to vector<48x192xi32>
    %96 = arith.select %90, %95, %82 : vector<48x192xi1>, vector<48x192xi32>
    %cst_33 = arith.constant dense<-2147483648> : vector<48xi32>
    %97 = vector.multi_reduction <maxsi>, %96, %cst_33 [1] : vector<48x192xi32> to vector<48xi32>
    %98 = vector.shape_cast %97 : vector<48xi32> to vector<48x1xi32>
    %c255_i32_34 = arith.constant 255 : i32
    %99 = vector.broadcast %c255_i32_34 : i32 to vector<48x1xi32>
    %100 = arith.andi %98, %99 : vector<48x1xi32>
    %c255_i32_35 = arith.constant 255 : i32
    %101 = vector.broadcast %c255_i32_35 : i32 to vector<48x1xi32>
    %102 = arith.subi %101, %100 : vector<48x1xi32>
    %103 = vector.broadcast %102 : vector<48x1xi32> to vector<48x192xi32>
    %104 = arith.cmpi eq, %9, %103 : vector<48x192xi32>
    %cst_36 = arith.constant 0xFF800000 : f32
    %105 = vector.broadcast %cst_36 : f32 to vector<48x192xf32>
    %106 = arith.select %104, %26, %105 : vector<48x192xi1>, vector<48x192xf32>
    %cst_37 = arith.constant dense<0xFF800000> : vector<48xf32>
    %107 = vector.multi_reduction <maximumf>, %106, %cst_37 [1] : vector<48x192xf32> to vector<48xf32>
    %108 = vector.shape_cast %107 : vector<48xf32> to vector<48x1xf32>
    %c-2147483648_i32_38 = arith.constant -2147483648 : i32
    %109 = vector.broadcast %c-2147483648_i32_38 : i32 to vector<48x192xi32>
    %110 = arith.select %104, %109, %96 : vector<48x192xi1>, vector<48x192xi32>
    %cst_39 = arith.constant dense<-2147483648> : vector<48xi32>
    %111 = vector.multi_reduction <maxsi>, %110, %cst_39 [1] : vector<48x192xi32> to vector<48xi32>
    %112 = vector.shape_cast %111 : vector<48xi32> to vector<48x1xi32>
    %c255_i32_40 = arith.constant 255 : i32
    %113 = vector.broadcast %c255_i32_40 : i32 to vector<48x1xi32>
    %114 = arith.andi %112, %113 : vector<48x1xi32>
    %c255_i32_41 = arith.constant 255 : i32
    %115 = vector.broadcast %c255_i32_41 : i32 to vector<48x1xi32>
    %116 = arith.subi %115, %114 : vector<48x1xi32>
    %117 = vector.broadcast %116 : vector<48x1xi32> to vector<48x192xi32>
    %118 = arith.cmpi eq, %9, %117 : vector<48x192xi32>
    %cst_42 = arith.constant 0xFF800000 : f32
    %119 = vector.broadcast %cst_42 : f32 to vector<48x192xf32>
    %120 = arith.select %118, %26, %119 : vector<48x192xi1>, vector<48x192xf32>
    %cst_43 = arith.constant dense<0xFF800000> : vector<48xf32>
    %121 = vector.multi_reduction <maximumf>, %120, %cst_43 [1] : vector<48x192xf32> to vector<48xf32>
    %122 = vector.shape_cast %121 : vector<48xf32> to vector<48x1xf32>
    %c-2147483648_i32_44 = arith.constant -2147483648 : i32
    %123 = vector.broadcast %c-2147483648_i32_44 : i32 to vector<48x192xi32>
    %124 = arith.select %118, %123, %110 : vector<48x192xi1>, vector<48x192xi32>
    %cst_45 = arith.constant dense<-2147483648> : vector<48xi32>
    %125 = vector.multi_reduction <maxsi>, %124, %cst_45 [1] : vector<48x192xi32> to vector<48xi32>
    %126 = vector.shape_cast %125 : vector<48xi32> to vector<48x1xi32>
    %c255_i32_46 = arith.constant 255 : i32
    %127 = vector.broadcast %c255_i32_46 : i32 to vector<48x1xi32>
    %128 = arith.andi %126, %127 : vector<48x1xi32>
    %c255_i32_47 = arith.constant 255 : i32
    %129 = vector.broadcast %c255_i32_47 : i32 to vector<48x1xi32>
    %130 = arith.subi %129, %128 : vector<48x1xi32>
    %131 = vector.broadcast %130 : vector<48x1xi32> to vector<48x192xi32>
    %132 = arith.cmpi eq, %9, %131 : vector<48x192xi32>
    %cst_48 = arith.constant 0xFF800000 : f32
    %133 = vector.broadcast %cst_48 : f32 to vector<48x192xf32>
    %134 = arith.select %132, %26, %133 : vector<48x192xi1>, vector<48x192xf32>
    %cst_49 = arith.constant dense<0xFF800000> : vector<48xf32>
    %135 = vector.multi_reduction <maximumf>, %134, %cst_49 [1] : vector<48x192xf32> to vector<48xf32>
    %136 = vector.shape_cast %135 : vector<48xf32> to vector<48x1xf32>
    %137 = tpu.concatenate %38, %52, %66, %80, %94, %108, %122, %136 in 1 : vector<48x1xf32>, vector<48x1xf32>, vector<48x1xf32>, vector<48x1xf32>, vector<48x1xf32>, vector<48x1xf32>, vector<48x1xf32>, vector<48x1xf32> -> vector<48x8xf32>
    %c0_50 = arith.constant 0 : index
    %c0_51 = arith.constant 0 : index
    %c0_52 = arith.constant 0 : index
    %138 = vector.load %arg4[%c0_50, %c0_51, %c0_52] : memref<1x48x8xf32, #tpu.memory_space<vmem>>, vector<1x48x8xf32>
    %139 = vector.shape_cast %138 : vector<1x48x8xf32> to vector<48x8xf32>
    %140 = vector.shape_cast %137 : vector<48x8xf32> to vector<1x48x8xf32>
    tpu.vector_store %arg4[%c0_50, %c0_51, %c0_52], %140 {strides = array<i32>} : memref<1x48x8xf32, #tpu.memory_space<vmem>>, vector<1x48x8xf32>,
    %141 = tpu.concatenate %32, %46, %60, %74, %88, %102, %116, %130 in 1 : vector<48x1xi32>, vector<48x1xi32>, vector<48x1xi32>, vector<48x1xi32>, vector<48x1xi32>, vector<48x1xi32>, vector<48x1xi32>, vector<48x1xi32> -> vector<48x8xi32>
    %c0_53 = arith.constant 0 : index
    %c0_54 = arith.constant 0 : index
    %c0_55 = arith.constant 0 : index
    %142 = vector.load %arg5[%c0_53, %c0_54, %c0_55] : memref<1x48x8xi32, #tpu.memory_space<vmem>>, vector<1x48x8xi32>
    %143 = vector.shape_cast %142 : vector<1x48x8xi32> to vector<48x8xi32>
    %144 = vector.shape_cast %141 : vector<48x8xi32> to vector<1x48x8xi32>
    tpu.vector_store %arg5[%c0_53, %c0_54, %c0_55], %144 {strides = array<i32>} : memref<1x48x8xi32, #tpu.memory_space<vmem>>, vector<1x48x8xi32>,
    return
  }
  func.func @transform_0(%arg0: i32, %arg1: i32) -> (i32, i32, i32) {
    %c0_i32 = arith.constant 0 : i32
    %c0_i32_0 = arith.constant 0 : i32
    return %arg0, %arg1, %c0_i32 : i32, i32, i32
  }
  func.func @transform_1(%arg0: i32, %arg1: i32) -> (i32, i32, i32, i32) {
    %c0_i32 = arith.constant 0 : i32
    %c0_i32_0 = arith.constant 0 : i32
    %c0_i32_1 = arith.constant 0 : i32
    return %arg0, %arg1, %c0_i32, %c0_i32_0 : i32, i32, i32, i32
  }
  func.func @transform_2(%arg0: i32, %arg1: i32) -> (i32, i32, i32) {
    %c0_i32 = arith.constant 0 : i32
    %c0_i32_0 = arith.constant 0 : i32
    return %arg0, %arg1, %c0_i32 : i32, i32, i32
  }
  func.func @transform_3(%arg0: i32, %arg1: i32) -> (i32, i32, i32) {
    %c0_i32 = arith.constant 0 : i32
    %c0_i32_0 = arith.constant 0 : i32
    return %arg0, %arg1, %c0_i32 : i32, i32, i32
  }
}

</mosaic_0001>

<llo_original>
// kernel: tpu_custom_call.1
$region0: #{tpu_custom_call.1}
  #allocation0 [shape = 'u32[]', space=smem, size = 0x4, offset = 0x4, fixed_abs, tag = 'smem constant byte address 0x4 - core index']
  #allocation1 [shape = 'u32[144,128]{1,0:T(1,128)}', space=vmem, size = 0x12000, scoped, tag = 'internal scratch']
  #allocation2 [shape = 'f32[48,192]{1,0:T(8,128)}', space=vmem, size = 0xc000, scoped, tag = 'scratch operand']
  %s0 = inlined_call_operand.hbm [shape: bf16[2,48,256], index: 0, kind: input, shape index: {}]
  %s1 = inlined_call_operand.hbm [shape: bf16[2,48,192,256], index: 1, kind: input, shape index: {}]
  %s2 = inlined_call_operand.vmem [shape: f32[2,48,8], index: 2, kind: output, shape index: {0}]
  %s3 = inlined_call_operand.vmem [shape: s32[2,48,8], index: 3, kind: output, shape index: {1}]
  %4 = xla_tuple %s2, %s3
  %s5 = sld [smem:[#allocation0]]
  $region64: #{tpu_custom_call.1} parent=0
    _
  %s7 = ssub.s32 1, %s5
  %s8 = scalar_select 0, %s7, %s5
  $region1: #{tpu_custom_call.1} parent=0
    #allocation3 [shape = 'u8[49152]{0}', space=vmem, size = 0xc000, scoped, tag = 'input window, operand 0']
    #allocation4 [shape = 's32[2]{0}', space=sflag, size = 0x8, scoped, tag = 'scoped memory for tpu_custom_call.1']
    #allocation5 [shape = 'u8[9437184]{0}', space=vmem, size = 0x900000, scoped, tag = 'input window, operand 1']
    #allocation6 [shape = 's32[2]{0}', space=sflag, size = 0x8, scoped, tag = 'scoped memory for tpu_custom_call.1']
    %9 = vsyncpa [#allocation4], 0
    %s10 = scalar_lea.sflag [#allocation4], 1
    %11 = vsyncpa %s10, 0
    %12 = vsyncpa [#allocation6], 0
    %s13 = scalar_lea.sflag [#allocation6], 1
    %14 = vsyncpa %s13, 0
    loop: start=0, step=1, limit=4
    $region2: #{tpu_custom_call.1} parent=1 // loop_pre_header
      _
    $region3: #{tpu_custom_call.1} parent=1 // loop_header
      %s16 = sphi 0, %s20
      %p17 = scmp.ge.s32.totalorder %s16, 4
      %s23 = sphi 0, %s35
      %s24 = sphi 0, %s31
      %s25 = sphi 0, %s23
      %s26 = sphi 0, %s24
      %s27 = sphi 0, %s25
      %s28 = sphi 0, %s26
      %s40 = sphi 0, %s42
      %s43 = sphi 0, %s40
      %s44 = sphi 0, %s43
      %s60 = sphi 0, %s44
      %s68 = sphi 0, %s70
      %s71 = sphi 0, %s68
      %s72 = sphi 0, %s71
      %s88 = sphi 0, %s72
      %s96 = sphi 0, %s98
      %s99 = sphi 0, %s96
      %s100 = sphi 0, %s99
      %s116 = sphi 0, %s100
      %s124 = sphi 0, %s126
      %s127 = sphi 0, %s124
      %s128 = sphi 0, %s127
      %s144 = sphi 0, %s128
    $region4: #{tpu_custom_call.1} parent=1 // loop_header_branch
      %19 = sbr.rel (%p17) target = $region8
    $region5: #{tpu_custom_call.1} parent=1 // loop_body
      %s21 = ssub.s32 %s16, 1
      %s22 = ssub.s32 %s16, 2
      %s29 = sadd.s32 1, %s24
      %p30 = scmp.ge.s32.totalorder %s29, 1
      %s31 = scalar_select %p30, 0, %s29
      %s32 = sadd.s32 1, %s23
      %s33 = scalar_select %p30, %s32, %s23
      %p34 = scmp.ge.s32.totalorder %s33, 2
      %s35 = scalar_select %p34, 0, %s33
      %s36 = ssub.s32 %s23, %s35
      %s37 = ssub.s32 %s24, %s31
      %s38 = sor.u32 %s36, %s37
      %p39 = scmp.eq.s32.totalorder %s38, 0
      %s41 = sadd.s32 %s40, 1
      %s42 = scalar_select %p39, %s40, %s41
      %p45 = pneg %p39
      %p46 = scmp.eq.s32.totalorder %s16, 1
      %p47 = por %p45, %p46
      %p48 = scmp.ne.s32.totalorder %s40, %s43
      %p49 = scmp.eq.s32.totalorder %s16, 0
      %p50 = por %p48, %p49
      %p51 = scmp.ne.s32.totalorder %s40, %s43
      %p52 = scmp.eq.s32.totalorder %s21, 1
      %p53 = por %p51, %p52
      %p54 = scmp.ne.s32.totalorder %s43, %s44
      %p55 = scmp.eq.s32.totalorder %s21, 0
      %p56 = por %p54, %p55
      %p57 = scmp.ne.s32.totalorder %s43, %s44
      %p58 = scmp.eq.s32.totalorder %s22, 1
      %p59 = por %p57, %p58
      %p61 = scmp.ne.s32.totalorder %s44, %s60
      %p62 = scmp.eq.s32.totalorder %s22, 0
      %p63 = por %p61, %p62
      %s64 = ssub.s32 %s23, %s35
      %s65 = ssub.s32 %s24, %s31
      %s66 = sor.u32 %s64, %s65
      %p67 = scmp.eq.s32.totalorder %s66, 0
      %s69 = sadd.s32 %s68, 1
      %s70 = scalar_select %p67, %s68, %s69
      %p73 = pneg %p67
      %p74 = scmp.eq.s32.totalorder %s16, 1
      %p75 = por %p73, %p74
      %p76 = scmp.ne.s32.totalorder %s68, %s71
      %p77 = scmp.eq.s32.totalorder %s16, 0
      %p78 = por %p76, %p77
      %p79 = scmp.ne.s32.totalorder %s68, %s71
      %p80 = scmp.eq.s32.totalorder %s21, 1
      %p81 = por %p79, %p80
      %p82 = scmp.ne.s32.totalorder %s71, %s72
      %p83 = scmp.eq.s32.totalorder %s21, 0
      %p84 = por %p82, %p83
      %p85 = scmp.ne.s32.totalorder %s71, %s72
      %p86 = scmp.eq.s32.totalorder %s22, 1
      %p87 = por %p85, %p86
      %p89 = scmp.ne.s32.totalorder %s72, %s88
      %p90 = scmp.eq.s32.totalorder %s22, 0
      %p91 = por %p89, %p90
      %s92 = ssub.s32 %s23, %s35
      %s93 = ssub.s32 %s24, %s31
      %s94 = sor.u32 %s92, %s93
      %p95 = scmp.eq.s32.totalorder %s94, 0
      %s97 = sadd.s32 %s96, 1
      %s98 = scalar_select %p95, %s96, %s97
      %p101 = pneg %p95
      %p102 = scmp.eq.s32.totalorder %s16, 1
      %p103 = por %p101, %p102
      %p104 = scmp.ne.s32.totalorder %s96, %s99
      %p105 = scmp.eq.s32.totalorder %s16, 0
      %p106 = por %p104, %p105
      %p107 = scmp.ne.s32.totalorder %s96, %s99
      %p108 = scmp.eq.s32.totalorder %s21, 1
      %p109 = por %p107, %p108
      %p110 = scmp.ne.s32.totalorder %s99, %s100
      %p111 = scmp.eq.s32.totalorder %s21, 0
      %p112 = por %p110, %p111
      %p113 = scmp.ne.s32.totalorder %s99, %s100
      %p114 = scmp.eq.s32.totalorder %s22, 1
      %p115 = por %p113, %p114
      %p117 = scmp.ne.s32.totalorder %s100, %s116
      %p118 = scmp.eq.s32.totalorder %s22, 0
      %p119 = por %p117, %p118
      %s120 = ssub.s32 %s23, %s35
      %s121 = ssub.s32 %s24, %s31
      %s122 = sor.u32 %s120, %s121
      %p123 = scmp.eq.s32.totalorder %s122, 0
      %s125 = sadd.s32 %s124, 1
      %s126 = scalar_select %p123, %s124, %s125
      %p129 = pneg %p123
      %p130 = scmp.eq.s32.totalorder %s16, 1
      %p131 = por %p129, %p130
      %p132 = scmp.ne.s32.totalorder %s124, %s127
      %p133 = scmp.eq.s32.totalorder %s16, 0
      %p134 = por %p132, %p133
      %p135 = scmp.ne.s32.totalorder %s124, %s127
      %p136 = scmp.eq.s32.totalorder %s21, 1
      %p137 = por %p135, %p136
      %p138 = scmp.ne.s32.totalorder %s127, %s128
      %p139 = scmp.eq.s32.totalorder %s21, 0
      %p140 = por %p138, %p139
      %p141 = scmp.ne.s32.totalorder %s127, %s128
      %p142 = scmp.eq.s32.totalorder %s22, 1
      %p143 = por %p141, %p142
      %p145 = scmp.ne.s32.totalorder %s128, %s144
      %p146 = scmp.eq.s32.totalorder %s22, 0
      %p147 = por %p145, %p146
      %p148 = scmp.le.s32.totalorder 1, %s16
      %p149 = scmp.lt.s32.totalorder %s16, 3
      %p150 = pnand %p148, %p149
      %p151 = pneg %p150
      // Predicated region
      $region9: #{tpu_custom_call.1} parent=5 // pred_check
        _
      $region10: #{tpu_custom_call.1} parent=5 // pred_check_branch
        %153 = sbr.rel (%p150) target = $region12
      $region11: #{tpu_custom_call.1} parent=5 // pred_region
        %s154 = ssub.s32 %s16, 1
      $region12: #{tpu_custom_call.1} parent=5 // pred_fallthru
        _
      %p155 = scmp.lt.s32.totalorder %s16, 2
      // Predicated region
      $region13: #{tpu_custom_call.1} parent=5 // pred_check
        %p156 = pneg %p155
      $region14: #{tpu_custom_call.1} parent=5 // pred_check_branch
        %158 = sbr.rel (%p156) target = $region16
      $region15: #{tpu_custom_call.1} parent=5 // pred_region
        // Predicated region
        $region17: #{tpu_custom_call.1} parent=15 // pred_check
          %p159 = pneg %p50
        $region18: #{tpu_custom_call.1} parent=15 // pred_check_branch
          %161 = sbr.rel (%p159) target = $region20
        $region19: #{tpu_custom_call.1} parent=15 // pred_region
          %s162 = sand.u32 %s40, 1
          %s163 = scalar_lea.sflag [#allocation4], %s162
          %s164 = sand.u32 %s40, 1
          %s165 = smul.addr %s164, 48
          %s166 = scalar_lea.vmem [#allocation3], %s165
          %s167 = smul.u32 6, %s24
          %s169 = ssub.s32 768, 768
          %170 = vsyncadd %s163, %s169
          %s171 = smul.addr %s167, 2
          %s172 = smul.addr %s23, 12
          %s173 = sadd.s32 %s171, %s172
          %s174 = smul.addr %s173, 64
          %s175 = scalar_lea.hbm %s0, %s174
          %s176 = sshll.u32 %s166, 4
          %s177 = int_to_ptr.vmem [resolvable:$true] %s176
          %182 = dma.hbm_to_vmem [thread:$0]  %s175, 768, %s177, %s163, 128, 128, 8
        $region20: #{tpu_custom_call.1} parent=15 // pred_fallthru
          _
        // Predicated region
        $region21: #{tpu_custom_call.1} parent=15 // pred_check
          %p183 = pneg %p78
        $region22: #{tpu_custom_call.1} parent=15 // pred_check_branch
          %185 = sbr.rel (%p183) target = $region24
        $region23: #{tpu_custom_call.1} parent=15 // pred_region
          %s186 = sand.u32 %s68, 1
          %s187 = scalar_lea.sflag [#allocation6], %s186
          %s188 = sand.u32 %s68, 1
          %s189 = smul.addr %s188, 9216
          %s190 = scalar_lea.vmem [#allocation5], %s189
          %s191 = smul.u32 48, %s24
          %s193 = ssub.s32 147456, 147456
          %194 = vsyncadd %s187, %s193
          %s195 = smul.addr %s191, 48
          %s196 = smul.addr %s23, 2304
          %s197 = sadd.s32 %s195, %s196
          %s198 = smul.addr %s197, 64
          %s199 = scalar_lea.hbm %s1, %s198
          %s200 = sshll.u32 %s190, 4
          %s201 = int_to_ptr.vmem [resolvable:$true] %s200
          %206 = dma.hbm_to_vmem [thread:$0]  %s199, 147456, %s201, %s187, 128, 128, 8
        $region24: #{tpu_custom_call.1} parent=15 // pred_fallthru
          _
      $region16: #{tpu_custom_call.1} parent=5 // pred_fallthru
        _
      %p207 = scmp.le.s32.totalorder 1, %s16
      %p208 = scmp.lt.s32.totalorder %s16, 3
      %p209 = pnand %p207, %p208
      %p210 = pneg %p209
      // Predicated region
      $region25: #{tpu_custom_call.1} parent=5 // pred_check
        _
      $region26: #{tpu_custom_call.1} parent=5 // pred_check_branch
        %212 = sbr.rel (%p209) target = $region28
      $region27: #{tpu_custom_call.1} parent=5 // pred_region
        %s213 = ssub.s32 %s16, 1
        %s214 = sand.u32 %s43, 1
        %s215 = scalar_lea.sflag [#allocation4], %s214
        %s216 = sand.u32 %s43, 1
        %s217 = smul.addr %s216, 48
        %s218 = scalar_lea.vmem [#allocation3], %s217
        // Predicated region
        $region29: #{tpu_custom_call.1} parent=27 // pred_check
          %p219 = pneg %p56
        $region30: #{tpu_custom_call.1} parent=27 // pred_check_branch
          %221 = sbr.rel (%p219) target = $region32
        $region31: #{tpu_custom_call.1} parent=27 // pred_region
          %222 = dma.done %s215, 768
        $region32: #{tpu_custom_call.1} parent=27 // pred_fallthru
          _
        %s223 = sand.u32 %s71, 1
        %s224 = scalar_lea.sflag [#allocation6], %s223
        %s225 = sand.u32 %s71, 1
        %s226 = smul.addr %s225, 9216
        %s227 = scalar_lea.vmem [#allocation5], %s226
        // Predicated region
        $region33: #{tpu_custom_call.1} parent=27 // pred_check
          %p228 = pneg %p84
        $region34: #{tpu_custom_call.1} parent=27 // pred_check_branch
          %230 = sbr.rel (%p228) target = $region36
        $region35: #{tpu_custom_call.1} parent=27 // pred_region
          %231 = dma.done %s224, 147456
        $region36: #{tpu_custom_call.1} parent=27 // pred_fallthru
          _
        %s232 = sand.u32 %s43, 1
        %s233 = scalar_lea.sflag [#allocation4], %s232
        %s234 = sand.u32 %s43, 1
        %s235 = smul.addr %s234, 48
        %s236 = scalar_lea.vmem [#allocation3], %s235
        %p237 = pneg %p56
        %p238 = pneg %p53
        %s239 = sand.u32 %s71, 1
        %s240 = scalar_lea.sflag [#allocation6], %s239
        %s241 = sand.u32 %s71, 1
        %s242 = smul.addr %s241, 9216
        %s243 = scalar_lea.vmem [#allocation5], %s242
        %p244 = pneg %p84
        %p245 = pneg %p81
        %p246 = pneg %p112
        %p247 = pneg %p109
        %s248 = smul.u32 6, %s26
        %p249 = scmp.lt.s32.totalorder %s25, 1
        %s250 = scalar_select %p249, %s25, 1
        %p251 = scmp.lt.s32.totalorder %s248, 5
        %s252 = scalar_select %p251, %s248, 5
        %s253 = smul.addr %s250, 6
        %s254 = sadd.s32 %s252, %s253
        %s255 = smul.addr %s254, 8
        %s256 = scalar_lea.vmem %s2, %s255
        %p257 = pneg %p140
        %p258 = pneg %p137
        %s259 = smul.u32 6, %s26
        %p260 = scmp.lt.s32.totalorder %s25, 1
        %s261 = scalar_select %p260, %s25, 1
        %p262 = scmp.lt.s32.totalorder %s259, 5
        %s263 = scalar_select %p262, %s259, 5
        %s264 = smul.addr %s261, 6
        %s265 = sadd.s32 %s263, %s264
        %s266 = smul.addr %s265, 8
        %s267 = scalar_lea.vmem %s3, %s266
        %s268 = smul.u32 6, %s26
        %s269 = smul.u32 48, %s26
        %s270 = smul.u32 6, %s26
        %p271 = scmp.lt.s32.totalorder %s25, 1
        %s272 = scalar_select %p271, %s25, 1
        %p273 = scmp.lt.s32.totalorder %s270, 5
        %s274 = scalar_select %p273, %s270, 5
        %s275 = smul.addr %s272, 6
        %s276 = sadd.s32 %s274, %s275
        %s277 = smul.addr %s276, 8
        %s278 = scalar_lea.vmem %s2, %s277
        %s279 = smul.u32 6, %s26
        %s280 = smul.u32 6, %s26
        %p281 = scmp.lt.s32.totalorder %s25, 1
        %s282 = scalar_select %p281, %s25, 1
        %p283 = scmp.lt.s32.totalorder %s280, 5
        %s284 = scalar_select %p283, %s280, 5
        %s285 = smul.addr %s282, 6
        %s286 = sadd.s32 %s284, %s285
        %s287 = smul.addr %s286, 8
        %s288 = scalar_lea.vmem %s3, %s287
        %s289 = smul.u32 6, %s26
        %v291 = vlaneseq
        %v292 = vand.u32 %v291, 127
        %vm293 = vcmp.eq.s32.totalorder %v292, 0
        %vm294 = vcmp.eq.s32.totalorder %v292, 1
        %vm295 = vcmp.eq.s32.totalorder %v292, 2
        %vm296 = vcmp.eq.s32.totalorder %v292, 3
        %vm297 = vcmp.eq.s32.totalorder %v292, 4
        %vm298 = vcmp.eq.s32.totalorder %v292, 5
        %vm299 = vcmp.eq.s32.totalorder %v292, 6
        %vm300 = vcmp.eq.s32.totalorder %v292, 7
        %v301 = vsel %vm293, 1, 0
        %v302 = vsel %vm294, 1, 0
        %v303 = vsel %vm295, 1, 0
        %v304 = vsel %vm296, 1, 0
        %v305 = vsel %vm297, 1, 0
        %v306 = vsel %vm298, 1, 0
        %v307 = vsel %vm299, 1, 0
        %v308 = vsel %vm300, 1, 0
        %vm309 = vcmp.eq.s32.totalorder %v301, 1
        %vm310 = vcmp.eq.s32.totalorder %v302, 1
        %vm311 = vcmp.eq.s32.totalorder %v303, 1
        %vm312 = vcmp.eq.s32.totalorder %v304, 1
        %vm313 = vcmp.eq.s32.totalorder %v305, 1
        %vm314 = vcmp.eq.s32.totalorder %v306, 1
        %vm315 = vcmp.eq.s32.totalorder %v307, 1
        %vm316 = vcmp.eq.s32.totalorder %v308, 1
        %v317 = vsel %vm309, 1, 0
        %v318 = vsel %vm310, 1, 0
        %v319 = vsel %vm311, 1, 0
        %v320 = vsel %vm312, 1, 0
        %v321 = vsel %vm313, 1, 0
        %v322 = vsel %vm314, 1, 0
        %v323 = vsel %vm315, 1, 0
        %v324 = vsel %vm316, 1, 0
        %v325 = vcvt.s32.f32 %v317
        %v326 = vcvt.s32.f32 %v318
        %v327 = vcvt.s32.f32 %v319
        %v328 = vcvt.s32.f32 %v320
        %v329 = vcvt.s32.f32 %v321
        %v330 = vcvt.s32.f32 %v322
        %v331 = vcvt.s32.f32 %v323
        %v332 = vcvt.s32.f32 %v324
        loop: start=0, step=1, limit=6
        $region37: #{tpu_custom_call.1} parent=27 // loop_pre_header
          _
        $region38: #{tpu_custom_call.1} parent=27 // loop_header
          %s334 = sphi 0, %s338
          %p335 = scmp.ge.s32.totalorder %s334, 6
        $region39: #{tpu_custom_call.1} parent=27 // loop_header_branch
          %337 = sbr.rel (%p335) target = $region43
        $region40: #{tpu_custom_call.1} parent=27 // loop_body
          %s339 = smul.u32 %s334, 8
          %s340 = sshra.s32 %s339, 3
          %s341 = sand.u32 %s339, 7
          %s342 = smul.u32 %s340, 2
          %s343 = smul.addr %s342, 4
          %s344 = scalar_lea.vmem %s218, %s343 [#allocation3]
          %v345 = vld [vmem:[%s344] sm:$0xff]
          %s346 = smul.u32 %s339, 48
          %s347 = smul.addr %s346, 4
          %s348 = scalar_lea.vmem %s227, %s347 [#allocation5]
          %v349 = vld [vmem:[%s348] sm:$0xff]
          %v350 = vld [vmem:[%s348 + $0x8] sm:$0xff]
          %v351 = vld [vmem:[%s348 + $0x10] sm:$0xff]
          %v352 = vld [vmem:[%s348 + $0x18] sm:$0xff]
          %v353 = vld [vmem:[%s348 + $0x20] sm:$0xff]
          %v354 = vld [vmem:[%s348 + $0x28] sm:$0xff]
          %v355 = vld [vmem:[%s348 + $0x30] sm:$0xff]
          %v356 = vld [vmem:[%s348 + $0x38] sm:$0xff]
          %v357 = vld [vmem:[%s348 + $0x40] sm:$0xff]
          %v358 = vld [vmem:[%s348 + $0x48] sm:$0xff]
          %v359 = vld [vmem:[%s348 + $0x50] sm:$0xff]
          %v360 = vld [vmem:[%s348 + $0x58] sm:$0xff]
          %v361 = vld [vmem:[%s348 + $0x60] sm:$0xff]
          %v362 = vld [vmem:[%s348 + $0x68] sm:$0xff]
          %v363 = vld [vmem:[%s348 + $0x70] sm:$0xff]
          %v364 = vld [vmem:[%s348 + $0x78] sm:$0xff]
          %v365 = vld [vmem:[%s348 + $0x80] sm:$0xff]
          %v366 = vld [vmem:[%s348 + $0x88] sm:$0xff]
          %v367 = vld [vmem:[%s348 + $0x90] sm:$0xff]
          %v368 = vld [vmem:[%s348 + $0x98] sm:$0xff]
          %v369 = vld [vmem:[%s348 + $0xa0] sm:$0xff]
          %v370 = vld [vmem:[%s348 + $0xa8] sm:$0xff]
          %v371 = vld [vmem:[%s348 + $0xb0] sm:$0xff]
          %v372 = vld [vmem:[%s348 + $0xb8] sm:$0xff]
          %v373 = vld [vmem:[%s348 + $0xc0] sm:$0xff]
          %v374 = vld [vmem:[%s348 + $0xc8] sm:$0xff]
          %v375 = vld [vmem:[%s348 + $0xd0] sm:$0xff]
          %v376 = vld [vmem:[%s348 + $0xd8] sm:$0xff]
          %v377 = vld [vmem:[%s348 + $0xe0] sm:$0xff]
          %v378 = vld [vmem:[%s348 + $0xe8] sm:$0xff]
          %v379 = vld [vmem:[%s348 + $0xf0] sm:$0xff]
          %v380 = vld [vmem:[%s348 + $0xf8] sm:$0xff]
          %v381 = vld [vmem:[%s348 + $0x100] sm:$0xff]
          %v382 = vld [vmem:[%s348 + $0x108] sm:$0xff]
          %v383 = vld [vmem:[%s348 + $0x110] sm:$0xff]
          %v384 = vld [vmem:[%s348 + $0x118] sm:$0xff]
          %v385 = vld [vmem:[%s348 + $0x120] sm:$0xff]
          %v386 = vld [vmem:[%s348 + $0x128] sm:$0xff]
          %v387 = vld [vmem:[%s348 + $0x130] sm:$0xff]
          %v388 = vld [vmem:[%s348 + $0x138] sm:$0xff]
          %v389 = vld [vmem:[%s348 + $0x140] sm:$0xff]
          %v390 = vld [vmem:[%s348 + $0x148] sm:$0xff]
          %v391 = vld [vmem:[%s348 + $0x150] sm:$0xff]
          %v392 = vld [vmem:[%s348 + $0x158] sm:$0xff]
          %v393 = vld [vmem:[%s348 + $0x160] sm:$0xff]
          %v394 = vld [vmem:[%s348 + $0x168] sm:$0xff]
          %v395 = vld [vmem:[%s348 + $0x170] sm:$0xff]
          %v396 = vld [vmem:[%s348 + $0x178] sm:$0xff]
          %v397 = vld [vmem:[%s348 + $0x180] sm:$0xff]
          %v398 = vld [vmem:[%s348 + $0x188] sm:$0xff]
          %v399 = vld [vmem:[%s348 + $0x190] sm:$0xff]
          %v400 = vld [vmem:[%s348 + $0x198] sm:$0xff]
          %v401 = vld [vmem:[%s348 + $0x1a0] sm:$0xff]
          %v402 = vld [vmem:[%s348 + $0x1a8] sm:$0xff]
          %v403 = vld [vmem:[%s348 + $0x1b0] sm:$0xff]
          %v404 = vld [vmem:[%s348 + $0x1b8] sm:$0xff]
          %v405 = vld [vmem:[%s348 + $0x1c0] sm:$0xff]
          %v406 = vld [vmem:[%s348 + $0x1c8] sm:$0xff]
          %v407 = vld [vmem:[%s348 + $0x1d0] sm:$0xff]
          %v408 = vld [vmem:[%s348 + $0x1d8] sm:$0xff]
          %v409 = vld [vmem:[%s348 + $0x1e0] sm:$0xff]
          %v410 = vld [vmem:[%s348 + $0x1e8] sm:$0xff]
          %v411 = vld [vmem:[%s348 + $0x1f0] sm:$0xff]
          %v412 = vld [vmem:[%s348 + $0x1f8] sm:$0xff]
          %v413 = vld [vmem:[%s348 + $0x200] sm:$0xff]
          %v414 = vld [vmem:[%s348 + $0x208] sm:$0xff]
          %v415 = vld [vmem:[%s348 + $0x210] sm:$0xff]
          %v416 = vld [vmem:[%s348 + $0x218] sm:$0xff]
          %v417 = vld [vmem:[%s348 + $0x220] sm:$0xff]
          %v418 = vld [vmem:[%s348 + $0x228] sm:$0xff]
          %v419 = vld [vmem:[%s348 + $0x230] sm:$0xff]
          %v420 = vld [vmem:[%s348 + $0x238] sm:$0xff]
          %v421 = vld [vmem:[%s348 + $0x240] sm:$0xff]
          %v422 = vld [vmem:[%s348 + $0x248] sm:$0xff]
          %v423 = vld [vmem:[%s348 + $0x250] sm:$0xff]
          %v424 = vld [vmem:[%s348 + $0x258] sm:$0xff]
          %v425 = vld [vmem:[%s348 + $0x260] sm:$0xff]
          %v426 = vld [vmem:[%s348 + $0x268] sm:$0xff]
          %v427 = vld [vmem:[%s348 + $0x270] sm:$0xff]
          %v428 = vld [vmem:[%s348 + $0x278] sm:$0xff]
          %v429 = vld [vmem:[%s348 + $0x280] sm:$0xff]
          %v430 = vld [vmem:[%s348 + $0x288] sm:$0xff]
          %v431 = vld [vmem:[%s348 + $0x290] sm:$0xff]
          %v432 = vld [vmem:[%s348 + $0x298] sm:$0xff]
          %v433 = vld [vmem:[%s348 + $0x2a0] sm:$0xff]
          %v434 = vld [vmem:[%s348 + $0x2a8] sm:$0xff]
          %v435 = vld [vmem:[%s348 + $0x2b0] sm:$0xff]
          %v436 = vld [vmem:[%s348 + $0x2b8] sm:$0xff]
          %v437 = vld [vmem:[%s348 + $0x2c0] sm:$0xff]
          %v438 = vld [vmem:[%s348 + $0x2c8] sm:$0xff]
          %v439 = vld [vmem:[%s348 + $0x2d0] sm:$0xff]
          %v440 = vld [vmem:[%s348 + $0x2d8] sm:$0xff]
          %v441 = vld [vmem:[%s348 + $0x2e0] sm:$0xff]
          %v442 = vld [vmem:[%s348 + $0x2e8] sm:$0xff]
          %v443 = vld [vmem:[%s348 + $0x2f0] sm:$0xff]
          %v444 = vld [vmem:[%s348 + $0x2f8] sm:$0xff]
          %v445 = vld [vmem:[%s348 + $0x300] sm:$0xff]
          %v446 = vld [vmem:[%s348 + $0x308] sm:$0xff]
          %v447 = vld [vmem:[%s348 + $0x310] sm:$0xff]
          %v448 = vld [vmem:[%s348 + $0x318] sm:$0xff]
          %v449 = vld [vmem:[%s348 + $0x320] sm:$0xff]
          %v450 = vld [vmem:[%s348 + $0x328] sm:$0xff]
          %v451 = vld [vmem:[%s348 + $0x330] sm:$0xff]
          %v452 = vld [vmem:[%s348 + $0x338] sm:$0xff]
          %v453 = vld [vmem:[%s348 + $0x340] sm:$0xff]
          %v454 = vld [vmem:[%s348 + $0x348] sm:$0xff]
          %v455 = vld [vmem:[%s348 + $0x350] sm:$0xff]
          %v456 = vld [vmem:[%s348 + $0x358] sm:$0xff]
          %v457 = vld [vmem:[%s348 + $0x360] sm:$0xff]
          %v458 = vld [vmem:[%s348 + $0x368] sm:$0xff]
          %v459 = vld [vmem:[%s348 + $0x370] sm:$0xff]
          %v460 = vld [vmem:[%s348 + $0x378] sm:$0xff]
          %v461 = vld [vmem:[%s348 + $0x380] sm:$0xff]
          %v462 = vld [vmem:[%s348 + $0x388] sm:$0xff]
          %v463 = vld [vmem:[%s348 + $0x390] sm:$0xff]
          %v464 = vld [vmem:[%s348 + $0x398] sm:$0xff]
          %v465 = vld [vmem:[%s348 + $0x3a0] sm:$0xff]
          %v466 = vld [vmem:[%s348 + $0x3a8] sm:$0xff]
          %v467 = vld [vmem:[%s348 + $0x3b0] sm:$0xff]
          %v468 = vld [vmem:[%s348 + $0x3b8] sm:$0xff]
          %v469 = vld [vmem:[%s348 + $0x3c0] sm:$0xff]
          %v470 = vld [vmem:[%s348 + $0x3c8] sm:$0xff]
          %v471 = vld [vmem:[%s348 + $0x3d0] sm:$0xff]
          %v472 = vld [vmem:[%s348 + $0x3d8] sm:$0xff]
          %v473 = vld [vmem:[%s348 + $0x3e0] sm:$0xff]
          %v474 = vld [vmem:[%s348 + $0x3e8] sm:$0xff]
          %v475 = vld [vmem:[%s348 + $0x3f0] sm:$0xff]
          %v476 = vld [vmem:[%s348 + $0x3f8] sm:$0xff]
          %v477 = vld [vmem:[%s348 + $0x400] sm:$0xff]
          %v478 = vld [vmem:[%s348 + $0x408] sm:$0xff]
          %v479 = vld [vmem:[%s348 + $0x410] sm:$0xff]
          %v480 = vld [vmem:[%s348 + $0x418] sm:$0xff]
          %v481 = vld [vmem:[%s348 + $0x420] sm:$0xff]
          %v482 = vld [vmem:[%s348 + $0x428] sm:$0xff]
          %v483 = vld [vmem:[%s348 + $0x430] sm:$0xff]
          %v484 = vld [vmem:[%s348 + $0x438] sm:$0xff]
          %v485 = vld [vmem:[%s348 + $0x440] sm:$0xff]
          %v486 = vld [vmem:[%s348 + $0x448] sm:$0xff]
          %v487 = vld [vmem:[%s348 + $0x450] sm:$0xff]
          %v488 = vld [vmem:[%s348 + $0x458] sm:$0xff]
          %v489 = vld [vmem:[%s348 + $0x460] sm:$0xff]
          %v490 = vld [vmem:[%s348 + $0x468] sm:$0xff]
          %v491 = vld [vmem:[%s348 + $0x470] sm:$0xff]
          %v492 = vld [vmem:[%s348 + $0x478] sm:$0xff]
          %v493 = vld [vmem:[%s348 + $0x480] sm:$0xff]
          %v494 = vld [vmem:[%s348 + $0x488] sm:$0xff]
          %v495 = vld [vmem:[%s348 + $0x490] sm:$0xff]
          %v496 = vld [vmem:[%s348 + $0x498] sm:$0xff]
          %v497 = vld [vmem:[%s348 + $0x4a0] sm:$0xff]
          %v498 = vld [vmem:[%s348 + $0x4a8] sm:$0xff]
          %v499 = vld [vmem:[%s348 + $0x4b0] sm:$0xff]
          %v500 = vld [vmem:[%s348 + $0x4b8] sm:$0xff]
          %v501 = vld [vmem:[%s348 + $0x4c0] sm:$0xff]
          %v502 = vld [vmem:[%s348 + $0x4c8] sm:$0xff]
          %v503 = vld [vmem:[%s348 + $0x4d0] sm:$0xff]
          %v504 = vld [vmem:[%s348 + $0x4d8] sm:$0xff]
          %v505 = vld [vmem:[%s348 + $0x4e0] sm:$0xff]
          %v506 = vld [vmem:[%s348 + $0x4e8] sm:$0xff]
          %v507 = vld [vmem:[%s348 + $0x4f0] sm:$0xff]
          %v508 = vld [vmem:[%s348 + $0x4f8] sm:$0xff]
          %v509 = vld [vmem:[%s348 + $0x500] sm:$0xff]
          %v510 = vld [vmem:[%s348 + $0x508] sm:$0xff]
          %v511 = vld [vmem:[%s348 + $0x510] sm:$0xff]
          %v512 = vld [vmem:[%s348 + $0x518] sm:$0xff]
          %v513 = vld [vmem:[%s348 + $0x520] sm:$0xff]
          %v514 = vld [vmem:[%s348 + $0x528] sm:$0xff]
          %v515 = vld [vmem:[%s348 + $0x530] sm:$0xff]
          %v516 = vld [vmem:[%s348 + $0x538] sm:$0xff]
          %v517 = vld [vmem:[%s348 + $0x540] sm:$0xff]
          %v518 = vld [vmem:[%s348 + $0x548] sm:$0xff]
          %v519 = vld [vmem:[%s348 + $0x550] sm:$0xff]
          %v520 = vld [vmem:[%s348 + $0x558] sm:$0xff]
          %v521 = vld [vmem:[%s348 + $0x560] sm:$0xff]
          %v522 = vld [vmem:[%s348 + $0x568] sm:$0xff]
          %v523 = vld [vmem:[%s348 + $0x570] sm:$0xff]
          %v524 = vld [vmem:[%s348 + $0x578] sm:$0xff]
          %v525 = vld [vmem:[%s348 + $0x580] sm:$0xff]
          %v526 = vld [vmem:[%s348 + $0x588] sm:$0xff]
          %v527 = vld [vmem:[%s348 + $0x590] sm:$0xff]
          %v528 = vld [vmem:[%s348 + $0x598] sm:$0xff]
          %v529 = vld [vmem:[%s348 + $0x5a0] sm:$0xff]
          %v530 = vld [vmem:[%s348 + $0x5a8] sm:$0xff]
          %v531 = vld [vmem:[%s348 + $0x5b0] sm:$0xff]
          %v532 = vld [vmem:[%s348 + $0x5b8] sm:$0xff]
          %v533 = vld [vmem:[%s348 + $0x5c0] sm:$0xff]
          %v534 = vld [vmem:[%s348 + $0x5c8] sm:$0xff]
          %v535 = vld [vmem:[%s348 + $0x5d0] sm:$0xff]
          %v536 = vld [vmem:[%s348 + $0x5d8] sm:$0xff]
          %v537 = vld [vmem:[%s348 + $0x5e0] sm:$0xff]
          %v538 = vld [vmem:[%s348 + $0x5e8] sm:$0xff]
          %v539 = vld [vmem:[%s348 + $0x5f0] sm:$0xff]
          %v540 = vld [vmem:[%s348 + $0x5f8] sm:$0xff]
          %v733 = vunpack.c.l.b16 %v349
          %v734 = vunpack.c.h.b16 %v349
          %v735 = vunpack.c.l.b16 %v350
          %v736 = vunpack.c.h.b16 %v350
          %v737 = vunpack.c.l.b16 %v351
          %v738 = vunpack.c.h.b16 %v351
          %v739 = vunpack.c.l.b16 %v352
          %v740 = vunpack.c.h.b16 %v352
          %v741 = vunpack.c.l.b16 %v353
          %v742 = vunpack.c.h.b16 %v353
          %v743 = vunpack.c.l.b16 %v354
          %v744 = vunpack.c.h.b16 %v354
          %v745 = vunpack.c.l.b16 %v355
          %v746 = vunpack.c.h.b16 %v355
          %v747 = vunpack.c.l.b16 %v356
          %v748 = vunpack.c.h.b16 %v356
          %v749 = vunpack.c.l.b16 %v357
          %v750 = vunpack.c.h.b16 %v357
          %v751 = vunpack.c.l.b16 %v358
          %v752 = vunpack.c.h.b16 %v358
          %v753 = vunpack.c.l.b16 %v359
          %v754 = vunpack.c.h.b16 %v359
          %v755 = vunpack.c.l.b16 %v360
          %v756 = vunpack.c.h.b16 %v360
          %v757 = vunpack.c.l.b16 %v361
          %v758 = vunpack.c.h.b16 %v361
          %v759 = vunpack.c.l.b16 %v362
          %v760 = vunpack.c.h.b16 %v362
          %v761 = vunpack.c.l.b16 %v363
          %v762 = vunpack.c.h.b16 %v363
          %v763 = vunpack.c.l.b16 %v364
          %v764 = vunpack.c.h.b16 %v364
          %v765 = vunpack.c.l.b16 %v365
          %v766 = vunpack.c.h.b16 %v365
          %v767 = vunpack.c.l.b16 %v366
          %v768 = vunpack.c.h.b16 %v366
          %v769 = vunpack.c.l.b16 %v367
          %v770 = vunpack.c.h.b16 %v367
          %v771 = vunpack.c.l.b16 %v368
          %v772 = vunpack.c.h.b16 %v368
          %v773 = vunpack.c.l.b16 %v369
          %v774 = vunpack.c.h.b16 %v369
          %v775 = vunpack.c.l.b16 %v370
          %v776 = vunpack.c.h.b16 %v370
          %v777 = vunpack.c.l.b16 %v371
          %v778 = vunpack.c.h.b16 %v371
          %v779 = vunpack.c.l.b16 %v372
          %v780 = vunpack.c.h.b16 %v372
          %v781 = vunpack.c.l.b16 %v373
          %v782 = vunpack.c.h.b16 %v373
          %v783 = vunpack.c.l.b16 %v374
          %v784 = vunpack.c.h.b16 %v374
          %v785 = vunpack.c.l.b16 %v375
          %v786 = vunpack.c.h.b16 %v375
          %v787 = vunpack.c.l.b16 %v376
          %v788 = vunpack.c.h.b16 %v376
          %v789 = vunpack.c.l.b16 %v377
          %v790 = vunpack.c.h.b16 %v377
          %v791 = vunpack.c.l.b16 %v378
          %v792 = vunpack.c.h.b16 %v378
          %v793 = vunpack.c.l.b16 %v379
          %v794 = vunpack.c.h.b16 %v379
          %v795 = vunpack.c.l.b16 %v380
          %v796 = vunpack.c.h.b16 %v380
          %v797 = vunpack.c.l.b16 %v381
          %v798 = vunpack.c.h.b16 %v381
          %v799 = vunpack.c.l.b16 %v382
          %v800 = vunpack.c.h.b16 %v382
          %v801 = vunpack.c.l.b16 %v383
          %v802 = vunpack.c.h.b16 %v383
          %v803 = vunpack.c.l.b16 %v384
          %v804 = vunpack.c.h.b16 %v384
          %v805 = vunpack.c.l.b16 %v385
          %v806 = vunpack.c.h.b16 %v385
          %v807 = vunpack.c.l.b16 %v386
          %v808 = vunpack.c.h.b16 %v386
          %v809 = vunpack.c.l.b16 %v387
          %v810 = vunpack.c.h.b16 %v387
          %v811 = vunpack.c.l.b16 %v388
          %v812 = vunpack.c.h.b16 %v388
          %v813 = vunpack.c.l.b16 %v389
          %v814 = vunpack.c.h.b16 %v389
          %v815 = vunpack.c.l.b16 %v390
          %v816 = vunpack.c.h.b16 %v390
          %v817 = vunpack.c.l.b16 %v391
          %v818 = vunpack.c.h.b16 %v391
          %v819 = vunpack.c.l.b16 %v392
          %v820 = vunpack.c.h.b16 %v392
          %v821 = vunpack.c.l.b16 %v393
          %v822 = vunpack.c.h.b16 %v393
          %v823 = vunpack.c.l.b16 %v394
          %v824 = vunpack.c.h.b16 %v394
          %v825 = vunpack.c.l.b16 %v395
          %v826 = vunpack.c.h.b16 %v395
          %v827 = vunpack.c.l.b16 %v396
          %v828 = vunpack.c.h.b16 %v396
          %v829 = vunpack.c.l.b16 %v397
          %v830 = vunpack.c.h.b16 %v397
          %v831 = vunpack.c.l.b16 %v398
          %v832 = vunpack.c.h.b16 %v398
          %v833 = vunpack.c.l.b16 %v399
          %v834 = vunpack.c.h.b16 %v399
          %v835 = vunpack.c.l.b16 %v400
          %v836 = vunpack.c.h.b16 %v400
          %v837 = vunpack.c.l.b16 %v401
          %v838 = vunpack.c.h.b16 %v401
          %v839 = vunpack.c.l.b16 %v402
          %v840 = vunpack.c.h.b16 %v402
          %v841 = vunpack.c.l.b16 %v403
          %v842 = vunpack.c.h.b16 %v403
          %v843 = vunpack.c.l.b16 %v404
          %v844 = vunpack.c.h.b16 %v404
          %v845 = vunpack.c.l.b16 %v405
          %v846 = vunpack.c.h.b16 %v405
          %v847 = vunpack.c.l.b16 %v406
          %v848 = vunpack.c.h.b16 %v406
          %v849 = vunpack.c.l.b16 %v407
          %v850 = vunpack.c.h.b16 %v407
          %v851 = vunpack.c.l.b16 %v408
          %v852 = vunpack.c.h.b16 %v408
          %v853 = vunpack.c.l.b16 %v409
          %v854 = vunpack.c.h.b16 %v409
          %v855 = vunpack.c.l.b16 %v410
          %v856 = vunpack.c.h.b16 %v410
          %v857 = vunpack.c.l.b16 %v411
          %v858 = vunpack.c.h.b16 %v411
          %v859 = vunpack.c.l.b16 %v412
          %v860 = vunpack.c.h.b16 %v412
          %v861 = vunpack.c.l.b16 %v413
          %v862 = vunpack.c.h.b16 %v413
          %v863 = vunpack.c.l.b16 %v414
          %v864 = vunpack.c.h.b16 %v414
          %v865 = vunpack.c.l.b16 %v415
          %v866 = vunpack.c.h.b16 %v415
          %v867 = vunpack.c.l.b16 %v416
          %v868 = vunpack.c.h.b16 %v416
          %v869 = vunpack.c.l.b16 %v417
          %v870 = vunpack.c.h.b16 %v417
          %v871 = vunpack.c.l.b16 %v418
          %v872 = vunpack.c.h.b16 %v418
          %v873 = vunpack.c.l.b16 %v419
          %v874 = vunpack.c.h.b16 %v419
          %v875 = vunpack.c.l.b16 %v420
          %v876 = vunpack.c.h.b16 %v420
          %v877 = vunpack.c.l.b16 %v421
          %v878 = vunpack.c.h.b16 %v421
          %v879 = vunpack.c.l.b16 %v422
          %v880 = vunpack.c.h.b16 %v422
          %v881 = vunpack.c.l.b16 %v423
          %v882 = vunpack.c.h.b16 %v423
          %v883 = vunpack.c.l.b16 %v424
          %v884 = vunpack.c.h.b16 %v424
          %v885 = vunpack.c.l.b16 %v425
          %v886 = vunpack.c.h.b16 %v425
          %v887 = vunpack.c.l.b16 %v426
          %v888 = vunpack.c.h.b16 %v426
          %v889 = vunpack.c.l.b16 %v427
          %v890 = vunpack.c.h.b16 %v427
          %v891 = vunpack.c.l.b16 %v428
          %v892 = vunpack.c.h.b16 %v428
          %v893 = vunpack.c.l.b16 %v429
          %v894 = vunpack.c.h.b16 %v429
          %v895 = vunpack.c.l.b16 %v430
          %v896 = vunpack.c.h.b16 %v430
          %v897 = vunpack.c.l.b16 %v431
          %v898 = vunpack.c.h.b16 %v431
          %v899 = vunpack.c.l.b16 %v432
          %v900 = vunpack.c.h.b16 %v432
          %v901 = vunpack.c.l.b16 %v433
          %v902 = vunpack.c.h.b16 %v433
          %v903 = vunpack.c.l.b16 %v434
          %v904 = vunpack.c.h.b16 %v434
          %v905 = vunpack.c.l.b16 %v435
          %v906 = vunpack.c.h.b16 %v435
          %v907 = vunpack.c.l.b16 %v436
          %v908 = vunpack.c.h.b16 %v436
          %v909 = vunpack.c.l.b16 %v437
          %v910 = vunpack.c.h.b16 %v437
          %v911 = vunpack.c.l.b16 %v438
          %v912 = vunpack.c.h.b16 %v438
          %v913 = vunpack.c.l.b16 %v439
          %v914 = vunpack.c.h.b16 %v439
          %v915 = vunpack.c.l.b16 %v440
          %v916 = vunpack.c.h.b16 %v440
          %v917 = vunpack.c.l.b16 %v441
          %v918 = vunpack.c.h.b16 %v441
          %v919 = vunpack.c.l.b16 %v442
          %v920 = vunpack.c.h.b16 %v442
          %v921 = vunpack.c.l.b16 %v443
          %v922 = vunpack.c.h.b16 %v443
          %v923 = vunpack.c.l.b16 %v444
          %v924 = vunpack.c.h.b16 %v444
          %v925 = vunpack.c.l.b16 %v445
          %v926 = vunpack.c.h.b16 %v445
          %v927 = vunpack.c.l.b16 %v446
          %v928 = vunpack.c.h.b16 %v446
          %v929 = vunpack.c.l.b16 %v447
          %v930 = vunpack.c.h.b16 %v447
          %v931 = vunpack.c.l.b16 %v448
          %v932 = vunpack.c.h.b16 %v448
          %v933 = vunpack.c.l.b16 %v449
          %v934 = vunpack.c.h.b16 %v449
          %v935 = vunpack.c.l.b16 %v450
          %v936 = vunpack.c.h.b16 %v450
          %v937 = vunpack.c.l.b16 %v451
          %v938 = vunpack.c.h.b16 %v451
          %v939 = vunpack.c.l.b16 %v452
          %v940 = vunpack.c.h.b16 %v452
          %v941 = vunpack.c.l.b16 %v453
          %v942 = vunpack.c.h.b16 %v453
          %v943 = vunpack.c.l.b16 %v454
          %v944 = vunpack.c.h.b16 %v454
          %v945 = vunpack.c.l.b16 %v455
          %v946 = vunpack.c.h.b16 %v455
          %v947 = vunpack.c.l.b16 %v456
          %v948 = vunpack.c.h.b16 %v456
          %v949 = vunpack.c.l.b16 %v457
          %v950 = vunpack.c.h.b16 %v457
          %v951 = vunpack.c.l.b16 %v458
          %v952 = vunpack.c.h.b16 %v458
          %v953 = vunpack.c.l.b16 %v459
          %v954 = vunpack.c.h.b16 %v459
          %v955 = vunpack.c.l.b16 %v460
          %v956 = vunpack.c.h.b16 %v460
          %v957 = vunpack.c.l.b16 %v461
          %v958 = vunpack.c.h.b16 %v461
          %v959 = vunpack.c.l.b16 %v462
          %v960 = vunpack.c.h.b16 %v462
          %v961 = vunpack.c.l.b16 %v463
          %v962 = vunpack.c.h.b16 %v463
          %v963 = vunpack.c.l.b16 %v464
          %v964 = vunpack.c.h.b16 %v464
          %v965 = vunpack.c.l.b16 %v465
          %v966 = vunpack.c.h.b16 %v465
          %v967 = vunpack.c.l.b16 %v466
          %v968 = vunpack.c.h.b16 %v466
          %v969 = vunpack.c.l.b16 %v467
          %v970 = vunpack.c.h.b16 %v467
          %v971 = vunpack.c.l.b16 %v468
          %v972 = vunpack.c.h.b16 %v468
          %v973 = vunpack.c.l.b16 %v469
          %v974 = vunpack.c.h.b16 %v469
          %v975 = vunpack.c.l.b16 %v470
          %v976 = vunpack.c.h.b16 %v470
          %v977 = vunpack.c.l.b16 %v471
          %v978 = vunpack.c.h.b16 %v471
          %v979 = vunpack.c.l.b16 %v472
          %v980 = vunpack.c.h.b16 %v472
          %v981 = vunpack.c.l.b16 %v473
          %v982 = vunpack.c.h.b16 %v473
          %v983 = vunpack.c.l.b16 %v474
          %v984 = vunpack.c.h.b16 %v474
          %v985 = vunpack.c.l.b16 %v475
          %v986 = vunpack.c.h.b16 %v475
          %v987 = vunpack.c.l.b16 %v476
          %v988 = vunpack.c.h.b16 %v476
          %v989 = vunpack.c.l.b16 %v477
          %v990 = vunpack.c.h.b16 %v477
          %v991 = vunpack.c.l.b16 %v478
          %v992 = vunpack.c.h.b16 %v478
          %v993 = vunpack.c.l.b16 %v479
          %v994 = vunpack.c.h.b16 %v479
          %v995 = vunpack.c.l.b16 %v480
          %v996 = vunpack.c.h.b16 %v480
          %v997 = vunpack.c.l.b16 %v481
          %v998 = vunpack.c.h.b16 %v481
          %v999 = vunpack.c.l.b16 %v482
          %v1000 = vunpack.c.h.b16 %v482
          %v1001 = vunpack.c.l.b16 %v483
          %v1002 = vunpack.c.h.b16 %v483
          %v1003 = vunpack.c.l.b16 %v484
          %v1004 = vunpack.c.h.b16 %v484
          %v1005 = vunpack.c.l.b16 %v485
          %v1006 = vunpack.c.h.b16 %v485
          %v1007 = vunpack.c.l.b16 %v486
          %v1008 = vunpack.c.h.b16 %v486
          %v1009 = vunpack.c.l.b16 %v487
          %v1010 = vunpack.c.h.b16 %v487
          %v1011 = vunpack.c.l.b16 %v488
          %v1012 = vunpack.c.h.b16 %v488
          %v1013 = vunpack.c.l.b16 %v489
          %v1014 = vunpack.c.h.b16 %v489
          %v1015 = vunpack.c.l.b16 %v490
          %v1016 = vunpack.c.h.b16 %v490
          %v1017 = vunpack.c.l.b16 %v491
          %v1018 = vunpack.c.h.b16 %v491
          %v1019 = vunpack.c.l.b16 %v492
          %v1020 = vunpack.c.h.b16 %v492
          %v1021 = vunpack.c.l.b16 %v493
          %v1022 = vunpack.c.h.b16 %v493
          %v1023 = vunpack.c.l.b16 %v494
          %v1024 = vunpack.c.h.b16 %v494
          %v1025 = vunpack.c.l.b16 %v495
          %v1026 = vunpack.c.h.b16 %v495
          %v1027 = vunpack.c.l.b16 %v496
          %v1028 = vunpack.c.h.b16 %v496
          %v1029 = vunpack.c.l.b16 %v497
          %v1030 = vunpack.c.h.b16 %v497
          %v1031 = vunpack.c.l.b16 %v498
          %v1032 = vunpack.c.h.b16 %v498
          %v1033 = vunpack.c.l.b16 %v499
          %v1034 = vunpack.c.h.b16 %v499
          %v1035 = vunpack.c.l.b16 %v500
          %v1036 = vunpack.c.h.b16 %v500
          %v1037 = vunpack.c.l.b16 %v501
          %v1038 = vunpack.c.h.b16 %v501
          %v1039 = vunpack.c.l.b16 %v502
          %v1040 = vunpack.c.h.b16 %v502
          %v1041 = vunpack.c.l.b16 %v503
          %v1042 = vunpack.c.h.b16 %v503
          %v1043 = vunpack.c.l.b16 %v504
          %v1044 = vunpack.c.h.b16 %v504
          %v1045 = vunpack.c.l.b16 %v505
          %v1046 = vunpack.c.h.b16 %v505
          %v1047 = vunpack.c.l.b16 %v506
          %v1048 = vunpack.c.h.b16 %v506
          %v1049 = vunpack.c.l.b16 %v507
          %v1050 = vunpack.c.h.b16 %v507
          %v1051 = vunpack.c.l.b16 %v508
          %v1052 = vunpack.c.h.b16 %v508
          %v1053 = vunpack.c.l.b16 %v509
          %v1054 = vunpack.c.h.b16 %v509
          %v1055 = vunpack.c.l.b16 %v510
          %v1056 = vunpack.c.h.b16 %v510
          %v1057 = vunpack.c.l.b16 %v511
          %v1058 = vunpack.c.h.b16 %v511
          %v1059 = vunpack.c.l.b16 %v512
          %v1060 = vunpack.c.h.b16 %v512
          %v1061 = vunpack.c.l.b16 %v513
          %v1062 = vunpack.c.h.b16 %v513
          %v1063 = vunpack.c.l.b16 %v514
          %v1064 = vunpack.c.h.b16 %v514
          %v1065 = vunpack.c.l.b16 %v515
          %v1066 = vunpack.c.h.b16 %v515
          %v1067 = vunpack.c.l.b16 %v516
          %v1068 = vunpack.c.h.b16 %v516
          %v1069 = vunpack.c.l.b16 %v517
          %v1070 = vunpack.c.h.b16 %v517
          %v1071 = vunpack.c.l.b16 %v518
          %v1072 = vunpack.c.h.b16 %v518
          %v1073 = vunpack.c.l.b16 %v519
          %v1074 = vunpack.c.h.b16 %v519
          %v1075 = vunpack.c.l.b16 %v520
          %v1076 = vunpack.c.h.b16 %v520
          %v1077 = vunpack.c.l.b16 %v521
          %v1078 = vunpack.c.h.b16 %v521
          %v1079 = vunpack.c.l.b16 %v522
          %v1080 = vunpack.c.h.b16 %v522
          %v1081 = vunpack.c.l.b16 %v523
          %v1082 = vunpack.c.h.b16 %v523
          %v1083 = vunpack.c.l.b16 %v524
          %v1084 = vunpack.c.h.b16 %v524
          %v1085 = vunpack.c.l.b16 %v525
          %v1086 = vunpack.c.h.b16 %v525
          %v1087 = vunpack.c.l.b16 %v526
          %v1088 = vunpack.c.h.b16 %v526
          %v1089 = vunpack.c.l.b16 %v527
          %v1090 = vunpack.c.h.b16 %v527
          %v1091 = vunpack.c.l.b16 %v528
          %v1092 = vunpack.c.h.b16 %v528
          %v1093 = vunpack.c.l.b16 %v529
          %v1094 = vunpack.c.h.b16 %v529
          %v1095 = vunpack.c.l.b16 %v530
          %v1096 = vunpack.c.h.b16 %v530
          %v1097 = vunpack.c.l.b16 %v531
          %v1098 = vunpack.c.h.b16 %v531
          %v1099 = vunpack.c.l.b16 %v532
          %v1100 = vunpack.c.h.b16 %v532
          %v1101 = vunpack.c.l.b16 %v533
          %v1102 = vunpack.c.h.b16 %v533
          %v1103 = vunpack.c.l.b16 %v534
          %v1104 = vunpack.c.h.b16 %v534
          %v1105 = vunpack.c.l.b16 %v535
          %v1106 = vunpack.c.h.b16 %v535
          %v1107 = vunpack.c.l.b16 %v536
          %v1108 = vunpack.c.h.b16 %v536
          %v1109 = vunpack.c.l.b16 %v537
          %v1110 = vunpack.c.h.b16 %v537
          %v1111 = vunpack.c.l.b16 %v538
          %v1112 = vunpack.c.h.b16 %v538
          %v1113 = vunpack.c.l.b16 %v539
          %v1114 = vunpack.c.h.b16 %v539
          %v1115 = vunpack.c.l.b16 %v540
          %v1116 = vunpack.c.h.b16 %v540
          %v1117 = vpack.c.b16 %v735, %v733
          %v1118 = vpack.c.b16 %v736, %v734
          %v1119 = vpack.c.b16 %v739, %v737
          %v1120 = vpack.c.b16 %v740, %v738
          %v1121 = vpack.c.b16 %v743, %v741
          %v1122 = vpack.c.b16 %v744, %v742
          %v1123 = vpack.c.b16 %v747, %v745
          %v1124 = vpack.c.b16 %v748, %v746
          %v1125 = vpack.c.b16 %v751, %v749
          %v1126 = vpack.c.b16 %v752, %v750
          %v1127 = vpack.c.b16 %v755, %v753
          %v1128 = vpack.c.b16 %v756, %v754
          %v1129 = vpack.c.b16 %v759, %v757
          %v1130 = vpack.c.b16 %v760, %v758
          %v1131 = vpack.c.b16 %v763, %v761
          %v1132 = vpack.c.b16 %v764, %v762
          %v1133 = vpack.c.b16 %v767, %v765
          %v1134 = vpack.c.b16 %v768, %v766
          %v1135 = vpack.c.b16 %v771, %v769
          %v1136 = vpack.c.b16 %v772, %v770
          %v1137 = vpack.c.b16 %v775, %v773
          %v1138 = vpack.c.b16 %v776, %v774
          %v1139 = vpack.c.b16 %v779, %v777
          %v1140 = vpack.c.b16 %v780, %v778
          %v1141 = vpack.c.b16 %v783, %v781
          %v1142 = vpack.c.b16 %v784, %v782
          %v1143 = vpack.c.b16 %v787, %v785
          %v1144 = vpack.c.b16 %v788, %v786
          %v1145 = vpack.c.b16 %v791, %v789
          %v1146 = vpack.c.b16 %v792, %v790
          %v1147 = vpack.c.b16 %v795, %v793
          %v1148 = vpack.c.b16 %v796, %v794
          %v1149 = vpack.c.b16 %v799, %v797
          %v1150 = vpack.c.b16 %v800, %v798
          %v1151 = vpack.c.b16 %v803, %v801
          %v1152 = vpack.c.b16 %v804, %v802
          %v1153 = vpack.c.b16 %v807, %v805
          %v1154 = vpack.c.b16 %v808, %v806
          %v1155 = vpack.c.b16 %v811, %v809
          %v1156 = vpack.c.b16 %v812, %v810
          %v1157 = vpack.c.b16 %v815, %v813
          %v1158 = vpack.c.b16 %v816, %v814
          %v1159 = vpack.c.b16 %v819, %v817
          %v1160 = vpack.c.b16 %v820, %v818
          %v1161 = vpack.c.b16 %v823, %v821
          %v1162 = vpack.c.b16 %v824, %v822
          %v1163 = vpack.c.b16 %v827, %v825
          %v1164 = vpack.c.b16 %v828, %v826
          %v1165 = vpack.c.b16 %v831, %v829
          %v1166 = vpack.c.b16 %v832, %v830
          %v1167 = vpack.c.b16 %v835, %v833
          %v1168 = vpack.c.b16 %v836, %v834
          %v1169 = vpack.c.b16 %v839, %v837
          %v1170 = vpack.c.b16 %v840, %v838
          %v1171 = vpack.c.b16 %v843, %v841
          %v1172 = vpack.c.b16 %v844, %v842
          %v1173 = vpack.c.b16 %v847, %v845
          %v1174 = vpack.c.b16 %v848, %v846
          %v1175 = vpack.c.b16 %v851, %v849
          %v1176 = vpack.c.b16 %v852, %v850
          %v1177 = vpack.c.b16 %v855, %v853
          %v1178 = vpack.c.b16 %v856, %v854
          %v1179 = vpack.c.b16 %v859, %v857
          %v1180 = vpack.c.b16 %v860, %v858
          %v1181 = vpack.c.b16 %v863, %v861
          %v1182 = vpack.c.b16 %v864, %v862
          %v1183 = vpack.c.b16 %v867, %v865
          %v1184 = vpack.c.b16 %v868, %v866
          %v1185 = vpack.c.b16 %v871, %v869
          %v1186 = vpack.c.b16 %v872, %v870
          %v1187 = vpack.c.b16 %v875, %v873
          %v1188 = vpack.c.b16 %v876, %v874
          %v1189 = vpack.c.b16 %v879, %v877
          %v1190 = vpack.c.b16 %v880, %v878
          %v1191 = vpack.c.b16 %v883, %v881
          %v1192 = vpack.c.b16 %v884, %v882
          %v1193 = vpack.c.b16 %v887, %v885
          %v1194 = vpack.c.b16 %v888, %v886
          %v1195 = vpack.c.b16 %v891, %v889
          %v1196 = vpack.c.b16 %v892, %v890
          %v1197 = vpack.c.b16 %v895, %v893
          %v1198 = vpack.c.b16 %v896, %v894
          %v1199 = vpack.c.b16 %v899, %v897
          %v1200 = vpack.c.b16 %v900, %v898
          %v1201 = vpack.c.b16 %v903, %v901
          %v1202 = vpack.c.b16 %v904, %v902
          %v1203 = vpack.c.b16 %v907, %v905
          %v1204 = vpack.c.b16 %v908, %v906
          %v1205 = vpack.c.b16 %v911, %v909
          %v1206 = vpack.c.b16 %v912, %v910
          %v1207 = vpack.c.b16 %v915, %v913
          %v1208 = vpack.c.b16 %v916, %v914
          %v1209 = vpack.c.b16 %v919, %v917
          %v1210 = vpack.c.b16 %v920, %v918
          %v1211 = vpack.c.b16 %v923, %v921
          %v1212 = vpack.c.b16 %v924, %v922
          %v1213 = vpack.c.b16 %v927, %v925
          %v1214 = vpack.c.b16 %v928, %v926
          %v1215 = vpack.c.b16 %v931, %v929
          %v1216 = vpack.c.b16 %v932, %v930
          %v1217 = vpack.c.b16 %v935, %v933
          %v1218 = vpack.c.b16 %v936, %v934
          %v1219 = vpack.c.b16 %v939, %v937
          %v1220 = vpack.c.b16 %v940, %v938
          %v1221 = vpack.c.b16 %v943, %v941
          %v1222 = vpack.c.b16 %v944, %v942
          %v1223 = vpack.c.b16 %v947, %v945
          %v1224 = vpack.c.b16 %v948, %v946
          %v1225 = vpack.c.b16 %v951, %v949
          %v1226 = vpack.c.b16 %v952, %v950
          %v1227 = vpack.c.b16 %v955, %v953
          %v1228 = vpack.c.b16 %v956, %v954
          %v1229 = vpack.c.b16 %v959, %v957
          %v1230 = vpack.c.b16 %v960, %v958
          %v1231 = vpack.c.b16 %v963, %v961
          %v1232 = vpack.c.b16 %v964, %v962
          %v1233 = vpack.c.b16 %v967, %v965
          %v1234 = vpack.c.b16 %v968, %v966
          %v1235 = vpack.c.b16 %v971, %v969
          %v1236 = vpack.c.b16 %v972, %v970
          %v1237 = vpack.c.b16 %v975, %v973
          %v1238 = vpack.c.b16 %v976, %v974
          %v1239 = vpack.c.b16 %v979, %v977
          %v1240 = vpack.c.b16 %v980, %v978
          %v1241 = vpack.c.b16 %v983, %v981
          %v1242 = vpack.c.b16 %v984, %v982
          %v1243 = vpack.c.b16 %v987, %v985
          %v1244 = vpack.c.b16 %v988, %v986
          %v1245 = vpack.c.b16 %v991, %v989
          %v1246 = vpack.c.b16 %v992, %v990
          %v1247 = vpack.c.b16 %v995, %v993
          %v1248 = vpack.c.b16 %v996, %v994
          %v1249 = vpack.c.b16 %v999, %v997
          %v1250 = vpack.c.b16 %v1000, %v998
          %v1251 = vpack.c.b16 %v1003, %v1001
          %v1252 = vpack.c.b16 %v1004, %v1002
          %v1253 = vpack.c.b16 %v1007, %v1005
          %v1254 = vpack.c.b16 %v1008, %v1006
          %v1255 = vpack.c.b16 %v1011, %v1009
          %v1256 = vpack.c.b16 %v1012, %v1010
          %v1257 = vpack.c.b16 %v1015, %v1013
          %v1258 = vpack.c.b16 %v1016, %v1014
          %v1259 = vpack.c.b16 %v1019, %v1017
          %v1260 = vpack.c.b16 %v1020, %v1018
          %v1261 = vpack.c.b16 %v1023, %v1021
          %v1262 = vpack.c.b16 %v1024, %v1022
          %v1263 = vpack.c.b16 %v1027, %v1025
          %v1264 = vpack.c.b16 %v1028, %v1026
          %v1265 = vpack.c.b16 %v1031, %v1029
          %v1266 = vpack.c.b16 %v1032, %v1030
          %v1267 = vpack.c.b16 %v1035, %v1033
          %v1268 = vpack.c.b16 %v1036, %v1034
          %v1269 = vpack.c.b16 %v1039, %v1037
          %v1270 = vpack.c.b16 %v1040, %v1038
          %v1271 = vpack.c.b16 %v1043, %v1041
          %v1272 = vpack.c.b16 %v1044, %v1042
          %v1273 = vpack.c.b16 %v1047, %v1045
          %v1274 = vpack.c.b16 %v1048, %v1046
          %v1275 = vpack.c.b16 %v1051, %v1049
          %v1276 = vpack.c.b16 %v1052, %v1050
          %v1277 = vpack.c.b16 %v1055, %v1053
          %v1278 = vpack.c.b16 %v1056, %v1054
          %v1279 = vpack.c.b16 %v1059, %v1057
          %v1280 = vpack.c.b16 %v1060, %v1058
          %v1281 = vpack.c.b16 %v1063, %v1061
          %v1282 = vpack.c.b16 %v1064, %v1062
          %v1283 = vpack.c.b16 %v1067, %v1065
          %v1284 = vpack.c.b16 %v1068, %v1066
          %v1285 = vpack.c.b16 %v1071, %v1069
          %v1286 = vpack.c.b16 %v1072, %v1070
          %v1287 = vpack.c.b16 %v1075, %v1073
          %v1288 = vpack.c.b16 %v1076, %v1074
          %v1289 = vpack.c.b16 %v1079, %v1077
          %v1290 = vpack.c.b16 %v1080, %v1078
          %v1291 = vpack.c.b16 %v1083, %v1081
          %v1292 = vpack.c.b16 %v1084, %v1082
          %v1293 = vpack.c.b16 %v1087, %v1085
          %v1294 = vpack.c.b16 %v1088, %v1086
          %v1295 = vpack.c.b16 %v1091, %v1089
          %v1296 = vpack.c.b16 %v1092, %v1090
          %v1297 = vpack.c.b16 %v1095, %v1093
          %v1298 = vpack.c.b16 %v1096, %v1094
          %v1299 = vpack.c.b16 %v1099, %v1097
          %v1300 = vpack.c.b16 %v1100, %v1098
          %v1301 = vpack.c.b16 %v1103, %v1101
          %v1302 = vpack.c.b16 %v1104, %v1102
          %v1303 = vpack.c.b16 %v1107, %v1105
          %v1304 = vpack.c.b16 %v1108, %v1106
          %v1305 = vpack.c.b16 %v1111, %v1109
          %v1306 = vpack.c.b16 %v1112, %v1110
          %v1307 = vpack.c.b16 %v1115, %v1113
          %v1308 = vpack.c.b16 %v1116, %v1114
          %v1502 = vunpack.c.l.b16 %v345
          %v1503 = vunpack.c.h.b16 %v345
          %v1504 = vpack.c.b16 %v1502, %v1502
          %v1505 = vpack.c.b16 %v1503, %v1503
          %1508 = vmatprep.subr.bf16.mxu0 %v1505
          %1509 = vmatpush1.bf16.xpose.msra.mxu0 %v1504
          %1510 = vmatprep.subr.bf16.mxu0 0
          %1511 = vmatpush1.bf16.xpose.msra.mxu0 0
          %1512 = vmatprep.subr.bf16.mxu0 0
          %1513 = vmatpush1.bf16.xpose.msra.mxu0 0
          %1514 = vmatprep.subr.bf16.mxu0 0
          %1515 = vmatpush1.bf16.xpose.msra.mxu0 0
          %1516 = vmatprep.subr.bf16.mxu0 0
          %1517 = vmatpush1.bf16.xpose.msra.mxu0 0
          %1518 = vmatprep.subr.bf16.mxu0 0
          %1519 = vmatpush1.bf16.xpose.msra.mxu0 0
          %1520 = vmatprep.subr.bf16.mxu0 0
          %1521 = vmatpush1.bf16.xpose.msra.mxu0 0
          %1522 = vmatprep.subr.bf16.mxu0 0
          %1523 = vmatpush1.bf16.xpose.msra.mxu0 0
          %1524 = vmatprep.subr.bf16.mxu0 0
          %1525 = vmatpush1.bf16.xpose.msra.mxu0 0
          %1526 = vmatprep.subr.bf16.mxu0 0
          %1527 = vmatpush1.bf16.xpose.msra.mxu0 0
          %1528 = vmatprep.subr.bf16.mxu0 0
          %1529 = vmatpush1.bf16.xpose.msra.mxu0 0
          %1530 = vmatprep.subr.bf16.mxu0 0
          %1531 = vmatpush1.bf16.xpose.msra.mxu0 0
          %1532 = vmatprep.subr.bf16.mxu0 0
          %1533 = vmatpush1.bf16.xpose.msra.mxu0 0
          %1534 = vmatprep.subr.bf16.mxu0 0
          %1535 = vmatpush1.bf16.xpose.msra.mxu0 0
          %1536 = vmatprep.subr.bf16.mxu0 0
          %1537 = vmatpush1.bf16.xpose.msra.mxu0 0
          %1538 = vmatprep.subr.bf16.mxu0 0
          %1539 = vmatpush1.bf16.xpose.msra.mxu0 0
          %1540 = vmatprep.mubr.bf16.mxu0 %v1118
          %1541 = vmatmul.mubr.bf16.gmra.mrb[0].mxu0 %v1117
          %v1542 = vpop.f32.mrb[0].mxu0
          %v1543 = vadd.f32 0.0, %v1542
          %v1544 = vpop.f32.mrb[0].mxu0
          %v1545 = vpop.f32.mrb[0].mxu0
          %v1546 = vadd.f32 0.0, %v1545
          %v1547 = vpop.f32.mrb[0].mxu0
          %1548 = vmatprep.mubr.bf16.mxu0 %v1120
          %1549 = vmatmul.mubr.bf16.gmra.mrb[0].mxu0 %v1119
          %v1550 = vpop.f32.mrb[0].mxu0
          %v1551 = vadd.f32 0.0, %v1550
          %v1552 = vpop.f32.mrb[0].mxu0
          %v1553 = vpop.f32.mrb[0].mxu0
          %v1554 = vadd.f32 0.0, %v1553
          %v1555 = vpop.f32.mrb[0].mxu0
          %1556 = vmatprep.mubr.bf16.mxu0 %v1122
          %1557 = vmatmul.mubr.bf16.gmra.mrb[0].mxu0 %v1121
          %v1558 = vpop.f32.mrb[0].mxu0
          %v1559 = vadd.f32 0.0, %v1558
          %v1560 = vpop.f32.mrb[0].mxu0
          %v1561 = vpop.f32.mrb[0].mxu0
          %v1562 = vadd.f32 0.0, %v1561
          %v1563 = vpop.f32.mrb[0].mxu0
          %1564 = vmatprep.mubr.bf16.mxu0 %v1124
          %1565 = vmatmul.mubr.bf16.gmra.mrb[0].mxu0 %v1123
          %v1566 = vpop.f32.mrb[0].mxu0
          %v1567 = vadd.f32 0.0, %v1566
          %v1568 = vpop.f32.mrb[0].mxu0
          %v1569 = vpop.f32.mrb[0].mxu0
          %v1570 = vadd.f32 0.0, %v1569
          %v1571 = vpop.f32.mrb[0].mxu0
          %1572 = vmatprep.mubr.bf16.mxu0 %v1126
          %1573 = vmatmul.mubr.bf16.gmra.mrb[0].mxu0 %v1125
          %v1574 = vpop.f32.mrb[0].mxu0
          %v1575 = vadd.f32 0.0, %v1574
          %v1576 = vpop.f32.mrb[0].mxu0
          %v1577 = vpop.f32.mrb[0].mxu0
          %v1578 = vadd.f32 0.0, %v1577
          %v1579 = vpop.f32.mrb[0].mxu0
          %1580 = vmatprep.mubr.bf16.mxu0 %v1128
          %1581 = vmatmul.mubr.bf16.gmra.mrb[0].mxu0 %v1127
          %v1582 = vpop.f32.mrb[0].mxu0
          %v1583 = vadd.f32 0.0, %v1582
          %v1584 = vpop.f32.mrb[0].mxu0
          %v1585 = vpop.f32.mrb[0].mxu0
          %v1586 = vadd.f32 0.0, %v1585
          %v1587 = vpop.f32.mrb[0].mxu0
          %1588 = vmatprep.mubr.bf16.mxu0 %v1130
          %1589 = vmatmul.mubr.bf16.gmra.mrb[0].mxu0 %v1129
          %v1590 = vpop.f32.mrb[0].mxu0
          %v1591 = vadd.f32 0.0, %v1590
          %v1592 = vpop.f32.mrb[0].mxu0
          %v1593 = vpop.f32.mrb[0].mxu0
          %v1594 = vadd.f32 0.0, %v1593
          %v1595 = vpop.f32.mrb[0].mxu0
          %1596 = vmatprep.mubr.bf16.mxu0 %v1132
          %1597 = vmatmul.mubr.bf16.gmra.mrb[0].mxu0 %v1131
          %v1598 = vpop.f32.mrb[0].mxu0
          %v1599 = vadd.f32 0.0, %v1598
          %v1600 = vpop.f32.mrb[0].mxu0
          %v1601 = vpop.f32.mrb[0].mxu0
          %v1602 = vadd.f32 0.0, %v1601
          %v1603 = vpop.f32.mrb[0].mxu0
          %1604 = vmatprep.mubr.bf16.mxu0 %v1134
          %1605 = vmatmul.mubr.bf16.gmra.mrb[0].mxu0 %v1133
          %v1606 = vpop.f32.mrb[0].mxu0
          %v1607 = vadd.f32 0.0, %v1606
          %v1608 = vpop.f32.mrb[0].mxu0
          %v1609 = vpop.f32.mrb[0].mxu0
          %v1610 = vadd.f32 0.0, %v1609
          %v1611 = vpop.f32.mrb[0].mxu0
          %1612 = vmatprep.mubr.bf16.mxu0 %v1136
          %1613 = vmatmul.mubr.bf16.gmra.mrb[0].mxu0 %v1135
          %v1614 = vpop.f32.mrb[0].mxu0
          %v1615 = vadd.f32 0.0, %v1614
          %v1616 = vpop.f32.mrb[0].mxu0
          %v1617 = vpop.f32.mrb[0].mxu0
          %v1618 = vadd.f32 0.0, %v1617
          %v1619 = vpop.f32.mrb[0].mxu0
          %1620 = vmatprep.mubr.bf16.mxu0 %v1138
          %1621 = vmatmul.mubr.bf16.gmra.mrb[0].mxu0 %v1137
          %v1622 = vpop.f32.mrb[0].mxu0
          %v1623 = vadd.f32 0.0, %v1622
          %v1624 = vpop.f32.mrb[0].mxu0
          %v1625 = vpop.f32.mrb[0].mxu0
          %v1626 = vadd.f32 0.0, %v1625
          %v1627 = vpop.f32.mrb[0].mxu0
          %1628 = vmatprep.mubr.bf16.mxu0 %v1140
          %1629 = vmatmul.mubr.bf16.gmra.mrb[0].mxu0 %v1139
          %v1630 = vpop.f32.mrb[0].mxu0
          %v1631 = vadd.f32 0.0, %v1630
          %v1632 = vpop.f32.mrb[0].mxu0
          %v1633 = vpop.f32.mrb[0].mxu0
          %v1634 = vadd.f32 0.0, %v1633
          %v1635 = vpop.f32.mrb[0].mxu0
          %1636 = vmatprep.mubr.bf16.mxu0 %v1142
          %1637 = vmatmul.mubr.bf16.gmra.mrb[0].mxu0 %v1141
          %v1638 = vpop.f32.mrb[0].mxu0
          %v1639 = vadd.f32 0.0, %v1638
          %v1640 = vpop.f32.mrb[0].mxu0
          %v1641 = vpop.f32.mrb[0].mxu0
          %v1642 = vadd.f32 0.0, %v1641
          %v1643 = vpop.f32.mrb[0].mxu0
          %1644 = vmatprep.mubr.bf16.mxu0 %v1144
          %1645 = vmatmul.mubr.bf16.gmra.mrb[0].mxu0 %v1143
          %v1646 = vpop.f32.mrb[0].mxu0
          %v1647 = vadd.f32 0.0, %v1646
          %v1648 = vpop.f32.mrb[0].mxu0
          %v1649 = vpop.f32.mrb[0].mxu0
          %v1650 = vadd.f32 0.0, %v1649
          %v1651 = vpop.f32.mrb[0].mxu0
          %1652 = vmatprep.mubr.bf16.mxu0 %v1146
          %1653 = vmatmul.mubr.bf16.gmra.mrb[0].mxu0 %v1145
          %v1654 = vpop.f32.mrb[0].mxu0
          %v1655 = vadd.f32 0.0, %v1654
          %v1656 = vpop.f32.mrb[0].mxu0
          %v1657 = vpop.f32.mrb[0].mxu0
          %v1658 = vadd.f32 0.0, %v1657
          %v1659 = vpop.f32.mrb[0].mxu0
          %1660 = vmatprep.mubr.bf16.mxu0 %v1148
          %1661 = vmatmul.mubr.bf16.gmra.mrb[0].mxu0 %v1147
          %v1662 = vpop.f32.mrb[0].mxu0
          %v1663 = vadd.f32 0.0, %v1662
          %v1664 = vpop.f32.mrb[0].mxu0
          %v1665 = vpop.f32.mrb[0].mxu0
          %v1666 = vadd.f32 0.0, %v1665
          %v1667 = vpop.f32.mrb[0].mxu0
          %1668 = vmatprep.mubr.bf16.mxu0 %v1150
          %1669 = vmatmul.mubr.bf16.gmra.mrb[0].mxu0 %v1149
          %v1670 = vpop.f32.mrb[0].mxu0
          %v1671 = vadd.f32 0.0, %v1670
          %v1672 = vpop.f32.mrb[0].mxu0
          %v1673 = vpop.f32.mrb[0].mxu0
          %v1674 = vadd.f32 0.0, %v1673
          %v1675 = vpop.f32.mrb[0].mxu0
          %1676 = vmatprep.mubr.bf16.mxu0 %v1152
          %1677 = vmatmul.mubr.bf16.gmra.mrb[0].mxu0 %v1151
          %v1678 = vpop.f32.mrb[0].mxu0
          %v1679 = vadd.f32 0.0, %v1678
          %v1680 = vpop.f32.mrb[0].mxu0
          %v1681 = vpop.f32.mrb[0].mxu0
          %v1682 = vadd.f32 0.0, %v1681
          %v1683 = vpop.f32.mrb[0].mxu0
          %1684 = vmatprep.mubr.bf16.mxu0 %v1154
          %1685 = vmatmul.mubr.bf16.gmra.mrb[0].mxu0 %v1153
          %v1686 = vpop.f32.mrb[0].mxu0
          %v1687 = vadd.f32 0.0, %v1686
          %v1688 = vpop.f32.mrb[0].mxu0
          %v1689 = vpop.f32.mrb[0].mxu0
          %v1690 = vadd.f32 0.0, %v1689
          %v1691 = vpop.f32.mrb[0].mxu0
          %1692 = vmatprep.mubr.bf16.mxu0 %v1156
          %1693 = vmatmul.mubr.bf16.gmra.mrb[0].mxu0 %v1155
          %v1694 = vpop.f32.mrb[0].mxu0
          %v1695 = vadd.f32 0.0, %v1694
          %v1696 = vpop.f32.mrb[0].mxu0
          %v1697 = vpop.f32.mrb[0].mxu0
          %v1698 = vadd.f32 0.0, %v1697
          %v1699 = vpop.f32.mrb[0].mxu0
          %1700 = vmatprep.mubr.bf16.mxu0 %v1158
          %1701 = vmatmul.mubr.bf16.gmra.mrb[0].mxu0 %v1157
          %v1702 = vpop.f32.mrb[0].mxu0
          %v1703 = vadd.f32 0.0, %v1702
          %v1704 = vpop.f32.mrb[0].mxu0
          %v1705 = vpop.f32.mrb[0].mxu0
          %v1706 = vadd.f32 0.0, %v1705
          %v1707 = vpop.f32.mrb[0].mxu0
          %1708 = vmatprep.mubr.bf16.mxu0 %v1160
          %1709 = vmatmul.mubr.bf16.gmra.mrb[0].mxu0 %v1159
          %v1710 = vpop.f32.mrb[0].mxu0
          %v1711 = vadd.f32 0.0, %v1710
          %v1712 = vpop.f32.mrb[0].mxu0
          %v1713 = vpop.f32.mrb[0].mxu0
          %v1714 = vadd.f32 0.0, %v1713
          %v1715 = vpop.f32.mrb[0].mxu0
          %1716 = vmatprep.mubr.bf16.mxu0 %v1162
          %1717 = vmatmul.mubr.bf16.gmra.mrb[0].mxu0 %v1161
          %v1718 = vpop.f32.mrb[0].mxu0
          %v1719 = vadd.f32 0.0, %v1718
          %v1720 = vpop.f32.mrb[0].mxu0
          %v1721 = vpop.f32.mrb[0].mxu0
          %v1722 = vadd.f32 0.0, %v1721
          %v1723 = vpop.f32.mrb[0].mxu0
          %1724 = vmatprep.mubr.bf16.mxu0 %v1164
          %1725 = vmatmul.mubr.bf16.gmra.mrb[0].mxu0 %v1163
          %v1726 = vpop.f32.mrb[0].mxu0
          %v1727 = vadd.f32 0.0, %v1726
          %v1728 = vpop.f32.mrb[0].mxu0
          %v1729 = vpop.f32.mrb[0].mxu0
          %v1730 = vadd.f32 0.0, %v1729
          %v1731 = vpop.f32.mrb[0].mxu0
          %1732 = vmatprep.mubr.bf16.mxu0 %v1166
          %1733 = vmatmul.mubr.bf16.gmra.mrb[0].mxu0 %v1165
          %v1734 = vpop.f32.mrb[0].mxu0
          %v1735 = vadd.f32 0.0, %v1734
          %v1736 = vpop.f32.mrb[0].mxu0
          %v1737 = vpop.f32.mrb[0].mxu0
          %v1738 = vadd.f32 0.0, %v1737
          %v1739 = vpop.f32.mrb[0].mxu0
          %1740 = vmatprep.mubr.bf16.mxu0 %v1168
          %1741 = vmatmul.mubr.bf16.gmra.mrb[0].mxu0 %v1167
          %v1742 = vpop.f32.mrb[0].mxu0
          %v1743 = vadd.f32 0.0, %v1742
          %v1744 = vpop.f32.mrb[0].mxu0
          %v1745 = vpop.f32.mrb[0].mxu0
          %v1746 = vadd.f32 0.0, %v1745
          %v1747 = vpop.f32.mrb[0].mxu0
          %1748 = vmatprep.mubr.bf16.mxu0 %v1170
          %1749 = vmatmul.mubr.bf16.gmra.mrb[0].mxu0 %v1169
          %v1750 = vpop.f32.mrb[0].mxu0
          %v1751 = vadd.f32 0.0, %v1750
          %v1752 = vpop.f32.mrb[0].mxu0
          %v1753 = vpop.f32.mrb[0].mxu0
          %v1754 = vadd.f32 0.0, %v1753
          %v1755 = vpop.f32.mrb[0].mxu0
          %1756 = vmatprep.mubr.bf16.mxu0 %v1172
          %1757 = vmatmul.mubr.bf16.gmra.mrb[0].mxu0 %v1171
          %v1758 = vpop.f32.mrb[0].mxu0
          %v1759 = vadd.f32 0.0, %v1758
          %v1760 = vpop.f32.mrb[0].mxu0
          %v1761 = vpop.f32.mrb[0].mxu0
          %v1762 = vadd.f32 0.0, %v1761
          %v1763 = vpop.f32.mrb[0].mxu0
          %1764 = vmatprep.mubr.bf16.mxu0 %v1174
          %1765 = vmatmul.mubr.bf16.gmra.mrb[0].mxu0 %v1173
          %v1766 = vpop.f32.mrb[0].mxu0
          %v1767 = vadd.f32 0.0, %v1766
          %v1768 = vpop.f32.mrb[0].mxu0
          %v1769 = vpop.f32.mrb[0].mxu0
          %v1770 = vadd.f32 0.0, %v1769
          %v1771 = vpop.f32.mrb[0].mxu0
          %1772 = vmatprep.mubr.bf16.mxu0 %v1176
          %1773 = vmatmul.mubr.bf16.gmra.mrb[0].mxu0 %v1175
          %v1774 = vpop.f32.mrb[0].mxu0
          %v1775 = vadd.f32 0.0, %v1774
          %v1776 = vpop.f32.mrb[0].mxu0
          %v1777 = vpop.f32.mrb[0].mxu0
          %v1778 = vadd.f32 0.0, %v1777
          %v1779 = vpop.f32.mrb[0].mxu0
          %1780 = vmatprep.mubr.bf16.mxu0 %v1178
          %1781 = vmatmul.mubr.bf16.gmra.mrb[0].mxu0 %v1177
          %v1782 = vpop.f32.mrb[0].mxu0
          %v1783 = vadd.f32 0.0, %v1782
          %v1784 = vpop.f32.mrb[0].mxu0
          %v1785 = vpop.f32.mrb[0].mxu0
          %v1786 = vadd.f32 0.0, %v1785
          %v1787 = vpop.f32.mrb[0].mxu0
          %1788 = vmatprep.mubr.bf16.mxu0 %v1180
          %1789 = vmatmul.mubr.bf16.gmra.mrb[0].mxu0 %v1179
          %v1790 = vpop.f32.mrb[0].mxu0
          %v1791 = vadd.f32 0.0, %v1790
          %v1792 = vpop.f32.mrb[0].mxu0
          %v1793 = vpop.f32.mrb[0].mxu0
          %v1794 = vadd.f32 0.0, %v1793
          %v1795 = vpop.f32.mrb[0].mxu0
          %1796 = vmatprep.mubr.bf16.mxu0 %v1182
          %1797 = vmatmul.mubr.bf16.gmra.mrb[0].mxu0 %v1181
          %v1798 = vpop.f32.mrb[0].mxu0
          %v1799 = vadd.f32 0.0, %v1798
          %v1800 = vpop.f32.mrb[0].mxu0
          %v1801 = vpop.f32.mrb[0].mxu0
          %v1802 = vadd.f32 0.0, %v1801
          %v1803 = vpop.f32.mrb[0].mxu0
          %1804 = vmatprep.mubr.bf16.mxu0 %v1184
          %1805 = vmatmul.mubr.bf16.gmra.mrb[0].mxu0 %v1183
          %v1806 = vpop.f32.mrb[0].mxu0
          %v1807 = vadd.f32 0.0, %v1806
          %v1808 = vpop.f32.mrb[0].mxu0
          %v1809 = vpop.f32.mrb[0].mxu0
          %v1810 = vadd.f32 0.0, %v1809
          %v1811 = vpop.f32.mrb[0].mxu0
          %1812 = vmatprep.mubr.bf16.mxu0 %v1186
          %1813 = vmatmul.mubr.bf16.gmra.mrb[0].mxu0 %v1185
          %v1814 = vpop.f32.mrb[0].mxu0
          %v1815 = vadd.f32 0.0, %v1814
          %v1816 = vpop.f32.mrb[0].mxu0
          %v1817 = vpop.f32.mrb[0].mxu0
          %v1818 = vadd.f32 0.0, %v1817
          %v1819 = vpop.f32.mrb[0].mxu0
          %1820 = vmatprep.mubr.bf16.mxu0 %v1188
          %1821 = vmatmul.mubr.bf16.gmra.mrb[0].mxu0 %v1187
          %v1822 = vpop.f32.mrb[0].mxu0
          %v1823 = vadd.f32 0.0, %v1822
          %v1824 = vpop.f32.mrb[0].mxu0
          %v1825 = vpop.f32.mrb[0].mxu0
          %v1826 = vadd.f32 0.0, %v1825
          %v1827 = vpop.f32.mrb[0].mxu0
          %1828 = vmatprep.mubr.bf16.mxu0 %v1190
          %1829 = vmatmul.mubr.bf16.gmra.mrb[0].mxu0 %v1189
          %v1830 = vpop.f32.mrb[0].mxu0
          %v1831 = vadd.f32 0.0, %v1830
          %v1832 = vpop.f32.mrb[0].mxu0
          %v1833 = vpop.f32.mrb[0].mxu0
          %v1834 = vadd.f32 0.0, %v1833
          %v1835 = vpop.f32.mrb[0].mxu0
          %1836 = vmatprep.mubr.bf16.mxu0 %v1192
          %1837 = vmatmul.mubr.bf16.gmra.mrb[0].mxu0 %v1191
          %v1838 = vpop.f32.mrb[0].mxu0
          %v1839 = vadd.f32 0.0, %v1838
          %v1840 = vpop.f32.mrb[0].mxu0
          %v1841 = vpop.f32.mrb[0].mxu0
          %v1842 = vadd.f32 0.0, %v1841
          %v1843 = vpop.f32.mrb[0].mxu0
          %1844 = vmatprep.mubr.bf16.mxu0 %v1194
          %1845 = vmatmul.mubr.bf16.gmra.mrb[0].mxu0 %v1193
          %v1846 = vpop.f32.mrb[0].mxu0
          %v1847 = vadd.f32 0.0, %v1846
          %v1848 = vpop.f32.mrb[0].mxu0
          %v1849 = vpop.f32.mrb[0].mxu0
          %v1850 = vadd.f32 0.0, %v1849
          %v1851 = vpop.f32.mrb[0].mxu0
          %1852 = vmatprep.mubr.bf16.mxu0 %v1196
          %1853 = vmatmul.mubr.bf16.gmra.mrb[0].mxu0 %v1195
          %v1854 = vpop.f32.mrb[0].mxu0
          %v1855 = vadd.f32 0.0, %v1854
          %v1856 = vpop.f32.mrb[0].mxu0
          %v1857 = vpop.f32.mrb[0].mxu0
          %v1858 = vadd.f32 0.0, %v1857
          %v1859 = vpop.f32.mrb[0].mxu0
          %1860 = vmatprep.mubr.bf16.mxu0 %v1198
          %1861 = vmatmul.mubr.bf16.gmra.mrb[0].mxu0 %v1197
          %v1862 = vpop.f32.mrb[0].mxu0
          %v1863 = vadd.f32 0.0, %v1862
          %v1864 = vpop.f32.mrb[0].mxu0
          %v1865 = vpop.f32.mrb[0].mxu0
          %v1866 = vadd.f32 0.0, %v1865
          %v1867 = vpop.f32.mrb[0].mxu0
          %1868 = vmatprep.mubr.bf16.mxu0 %v1200
          %1869 = vmatmul.mubr.bf16.gmra.mrb[0].mxu0 %v1199
          %v1870 = vpop.f32.mrb[0].mxu0
          %v1871 = vadd.f32 0.0, %v1870
          %v1872 = vpop.f32.mrb[0].mxu0
          %v1873 = vpop.f32.mrb[0].mxu0
          %v1874 = vadd.f32 0.0, %v1873
          %v1875 = vpop.f32.mrb[0].mxu0
          %1876 = vmatprep.mubr.bf16.mxu0 %v1202
          %1877 = vmatmul.mubr.bf16.gmra.mrb[0].mxu0 %v1201
          %v1878 = vpop.f32.mrb[0].mxu0
          %v1879 = vadd.f32 0.0, %v1878
          %v1880 = vpop.f32.mrb[0].mxu0
          %v1881 = vpop.f32.mrb[0].mxu0
          %v1882 = vadd.f32 0.0, %v1881
          %v1883 = vpop.f32.mrb[0].mxu0
          %1884 = vmatprep.mubr.bf16.mxu0 %v1204
          %1885 = vmatmul.mubr.bf16.gmra.mrb[0].mxu0 %v1203
          %v1886 = vpop.f32.mrb[0].mxu0
          %v1887 = vadd.f32 0.0, %v1886
          %v1888 = vpop.f32.mrb[0].mxu0
          %v1889 = vpop.f32.mrb[0].mxu0
          %v1890 = vadd.f32 0.0, %v1889
          %v1891 = vpop.f32.mrb[0].mxu0
          %1892 = vmatprep.mubr.bf16.mxu0 %v1206
          %1893 = vmatmul.mubr.bf16.gmra.mrb[0].mxu0 %v1205
          %v1894 = vpop.f32.mrb[0].mxu0
          %v1895 = vadd.f32 0.0, %v1894
          %v1896 = vpop.f32.mrb[0].mxu0
          %v1897 = vpop.f32.mrb[0].mxu0
          %v1898 = vadd.f32 0.0, %v1897
          %v1899 = vpop.f32.mrb[0].mxu0
          %1900 = vmatprep.mubr.bf16.mxu0 %v1208
          %1901 = vmatmul.mubr.bf16.gmra.mrb[0].mxu0 %v1207
          %v1902 = vpop.f32.mrb[0].mxu0
          %v1903 = vadd.f32 0.0, %v1902
          %v1904 = vpop.f32.mrb[0].mxu0
          %v1905 = vpop.f32.mrb[0].mxu0
          %v1906 = vadd.f32 0.0, %v1905
          %v1907 = vpop.f32.mrb[0].mxu0
          %1908 = vmatprep.mubr.bf16.mxu0 %v1210
          %1909 = vmatmul.mubr.bf16.gmra.mrb[0].mxu0 %v1209
          %v1910 = vpop.f32.mrb[0].mxu0
          %v1911 = vadd.f32 0.0, %v1910
          %v1912 = vpop.f32.mrb[0].mxu0
          %v1913 = vpop.f32.mrb[0].mxu0
          %v1914 = vadd.f32 0.0, %v1913
          %v1915 = vpop.f32.mrb[0].mxu0
          %1916 = vmatprep.mubr.bf16.mxu0 %v1212
          %1917 = vmatmul.mubr.bf16.gmra.mrb[0].mxu0 %v1211
          %v1918 = vpop.f32.mrb[0].mxu0
          %v1919 = vadd.f32 0.0, %v1918
          %v1920 = vpop.f32.mrb[0].mxu0
          %v1921 = vpop.f32.mrb[0].mxu0
          %v1922 = vadd.f32 0.0, %v1921
          %v1923 = vpop.f32.mrb[0].mxu0
          %1924 = vmatprep.mubr.bf16.mxu0 %v1214
          %1925 = vmatmul.mubr.bf16.gmra.mrb[0].mxu0 %v1213
          %v1926 = vpop.f32.mrb[0].mxu0
          %v1927 = vadd.f32 0.0, %v1926
          %v1928 = vpop.f32.mrb[0].mxu0
          %v1929 = vpop.f32.mrb[0].mxu0
          %v1930 = vadd.f32 0.0, %v1929
          %v1931 = vpop.f32.mrb[0].mxu0
          %1932 = vmatprep.mubr.bf16.mxu0 %v1216
          %1933 = vmatmul.mubr.bf16.gmra.mrb[0].mxu0 %v1215
          %v1934 = vpop.f32.mrb[0].mxu0
          %v1935 = vadd.f32 0.0, %v1934
          %v1936 = vpop.f32.mrb[0].mxu0
          %v1937 = vpop.f32.mrb[0].mxu0
          %v1938 = vadd.f32 0.0, %v1937
          %v1939 = vpop.f32.mrb[0].mxu0
          %1940 = vmatprep.mubr.bf16.mxu0 %v1218
          %1941 = vmatmul.mubr.bf16.gmra.mrb[0].mxu0 %v1217
          %v1942 = vpop.f32.mrb[0].mxu0
          %v1943 = vadd.f32 0.0, %v1942
          %v1944 = vpop.f32.mrb[0].mxu0
          %v1945 = vpop.f32.mrb[0].mxu0
          %v1946 = vadd.f32 0.0, %v1945
          %v1947 = vpop.f32.mrb[0].mxu0
          %1948 = vmatprep.mubr.bf16.mxu0 %v1220
          %1949 = vmatmul.mubr.bf16.gmra.mrb[0].mxu0 %v1219
          %v1950 = vpop.f32.mrb[0].mxu0
          %v1951 = vadd.f32 0.0, %v1950
          %v1952 = vpop.f32.mrb[0].mxu0
          %v1953 = vpop.f32.mrb[0].mxu0
          %v1954 = vadd.f32 0.0, %v1953
          %v1955 = vpop.f32.mrb[0].mxu0
          %1956 = vmatprep.mubr.bf16.mxu0 %v1222
          %1957 = vmatmul.mubr.bf16.gmra.mrb[0].mxu0 %v1221
          %v1958 = vpop.f32.mrb[0].mxu0
          %v1959 = vadd.f32 0.0, %v1958
          %v1960 = vpop.f32.mrb[0].mxu0
          %v1961 = vpop.f32.mrb[0].mxu0
          %v1962 = vadd.f32 0.0, %v1961
          %v1963 = vpop.f32.mrb[0].mxu0
          %1964 = vmatprep.mubr.bf16.mxu0 %v1224
          %1965 = vmatmul.mubr.bf16.gmra.mrb[0].mxu0 %v1223
          %v1966 = vpop.f32.mrb[0].mxu0
          %v1967 = vadd.f32 0.0, %v1966
          %v1968 = vpop.f32.mrb[0].mxu0
          %v1969 = vpop.f32.mrb[0].mxu0
          %v1970 = vadd.f32 0.0, %v1969
          %v1971 = vpop.f32.mrb[0].mxu0
          %1972 = vmatprep.mubr.bf16.mxu0 %v1226
          %1973 = vmatmul.mubr.bf16.gmra.mrb[0].mxu0 %v1225
          %v1974 = vpop.f32.mrb[0].mxu0
          %v1975 = vadd.f32 0.0, %v1974
          %v1976 = vpop.f32.mrb[0].mxu0
          %v1977 = vpop.f32.mrb[0].mxu0
          %v1978 = vadd.f32 0.0, %v1977
          %v1979 = vpop.f32.mrb[0].mxu0
          %1980 = vmatprep.mubr.bf16.mxu0 %v1228
          %1981 = vmatmul.mubr.bf16.gmra.mrb[0].mxu0 %v1227
          %v1982 = vpop.f32.mrb[0].mxu0
          %v1983 = vadd.f32 0.0, %v1982
          %v1984 = vpop.f32.mrb[0].mxu0
          %v1985 = vpop.f32.mrb[0].mxu0
          %v1986 = vadd.f32 0.0, %v1985
          %v1987 = vpop.f32.mrb[0].mxu0
          %1988 = vmatprep.mubr.bf16.mxu0 %v1230
          %1989 = vmatmul.mubr.bf16.gmra.mrb[0].mxu0 %v1229
          %v1990 = vpop.f32.mrb[0].mxu0
          %v1991 = vadd.f32 0.0, %v1990
          %v1992 = vpop.f32.mrb[0].mxu0
          %v1993 = vpop.f32.mrb[0].mxu0
          %v1994 = vadd.f32 0.0, %v1993
          %v1995 = vpop.f32.mrb[0].mxu0
          %1996 = vmatprep.mubr.bf16.mxu0 %v1232
          %1997 = vmatmul.mubr.bf16.gmra.mrb[0].mxu0 %v1231
          %v1998 = vpop.f32.mrb[0].mxu0
          %v1999 = vadd.f32 0.0, %v1998
          %v2000 = vpop.f32.mrb[0].mxu0
          %v2001 = vpop.f32.mrb[0].mxu0
          %v2002 = vadd.f32 0.0, %v2001
          %v2003 = vpop.f32.mrb[0].mxu0
          %2004 = vmatprep.mubr.bf16.mxu0 %v1234
          %2005 = vmatmul.mubr.bf16.gmra.mrb[0].mxu0 %v1233
          %v2006 = vpop.f32.mrb[0].mxu0
          %v2007 = vadd.f32 0.0, %v2006
          %v2008 = vpop.f32.mrb[0].mxu0
          %v2009 = vpop.f32.mrb[0].mxu0
          %v2010 = vadd.f32 0.0, %v2009
          %v2011 = vpop.f32.mrb[0].mxu0
          %2012 = vmatprep.mubr.bf16.mxu0 %v1236
          %2013 = vmatmul.mubr.bf16.gmra.mrb[0].mxu0 %v1235
          %v2014 = vpop.f32.mrb[0].mxu0
          %v2015 = vadd.f32 0.0, %v2014
          %v2016 = vpop.f32.mrb[0].mxu0
          %v2017 = vpop.f32.mrb[0].mxu0
          %v2018 = vadd.f32 0.0, %v2017
          %v2019 = vpop.f32.mrb[0].mxu0
          %2020 = vmatprep.mubr.bf16.mxu0 %v1238
          %2021 = vmatmul.mubr.bf16.gmra.mrb[0].mxu0 %v1237
          %v2022 = vpop.f32.mrb[0].mxu0
          %v2023 = vadd.f32 0.0, %v2022
          %v2024 = vpop.f32.mrb[0].mxu0
          %v2025 = vpop.f32.mrb[0].mxu0
          %v2026 = vadd.f32 0.0, %v2025
          %v2027 = vpop.f32.mrb[0].mxu0
          %2028 = vmatprep.mubr.bf16.mxu0 %v1240
          %2029 = vmatmul.mubr.bf16.gmra.mrb[0].mxu0 %v1239
          %v2030 = vpop.f32.mrb[0].mxu0
          %v2031 = vadd.f32 0.0, %v2030
          %v2032 = vpop.f32.mrb[0].mxu0
          %v2033 = vpop.f32.mrb[0].mxu0
          %v2034 = vadd.f32 0.0, %v2033
          %v2035 = vpop.f32.mrb[0].mxu0
          %2036 = vmatprep.mubr.bf16.mxu0 %v1242
          %2037 = vmatmul.mubr.bf16.gmra.mrb[0].mxu0 %v1241
          %v2038 = vpop.f32.mrb[0].mxu0
          %v2039 = vadd.f32 0.0, %v2038
          %v2040 = vpop.f32.mrb[0].mxu0
          %v2041 = vpop.f32.mrb[0].mxu0
          %v2042 = vadd.f32 0.0, %v2041
          %v2043 = vpop.f32.mrb[0].mxu0
          %2044 = vmatprep.mubr.bf16.mxu0 %v1244
          %2045 = vmatmul.mubr.bf16.gmra.mrb[0].mxu0 %v1243
          %v2046 = vpop.f32.mrb[0].mxu0
          %v2047 = vadd.f32 0.0, %v2046
          %v2048 = vpop.f32.mrb[0].mxu0
          %v2049 = vpop.f32.mrb[0].mxu0
          %v2050 = vadd.f32 0.0, %v2049
          %v2051 = vpop.f32.mrb[0].mxu0
          %2052 = vmatprep.mubr.bf16.mxu0 %v1246
          %2053 = vmatmul.mubr.bf16.gmra.mrb[0].mxu0 %v1245
          %v2054 = vpop.f32.mrb[0].mxu0
          %v2055 = vadd.f32 0.0, %v2054
          %v2056 = vpop.f32.mrb[0].mxu0
          %v2057 = vpop.f32.mrb[0].mxu0
          %v2058 = vadd.f32 0.0, %v2057
          %v2059 = vpop.f32.mrb[0].mxu0
          %2060 = vmatprep.mubr.bf16.mxu0 %v1248
          %2061 = vmatmul.mubr.bf16.gmra.mrb[0].mxu0 %v1247
          %v2062 = vpop.f32.mrb[0].mxu0
          %v2063 = vadd.f32 0.0, %v2062
          %v2064 = vpop.f32.mrb[0].mxu0
          %v2065 = vpop.f32.mrb[0].mxu0
          %v2066 = vadd.f32 0.0, %v2065
          %v2067 = vpop.f32.mrb[0].mxu0
          %2068 = vmatprep.mubr.bf16.mxu0 %v1250
          %2069 = vmatmul.mubr.bf16.gmra.mrb[0].mxu0 %v1249
          %v2070 = vpop.f32.mrb[0].mxu0
          %v2071 = vadd.f32 0.0, %v2070
          %v2072 = vpop.f32.mrb[0].mxu0
          %v2073 = vpop.f32.mrb[0].mxu0
          %v2074 = vadd.f32 0.0, %v2073
          %v2075 = vpop.f32.mrb[0].mxu0
          %2076 = vmatprep.mubr.bf16.mxu0 %v1252
          %2077 = vmatmul.mubr.bf16.gmra.mrb[0].mxu0 %v1251
          %v2078 = vpop.f32.mrb[0].mxu0
          %v2079 = vadd.f32 0.0, %v2078
          %v2080 = vpop.f32.mrb[0].mxu0
          %v2081 = vpop.f32.mrb[0].mxu0
          %v2082 = vadd.f32 0.0, %v2081
          %v2083 = vpop.f32.mrb[0].mxu0
          %2084 = vmatprep.mubr.bf16.mxu0 %v1254
          %2085 = vmatmul.mubr.bf16.gmra.mrb[0].mxu0 %v1253
          %v2086 = vpop.f32.mrb[0].mxu0
          %v2087 = vadd.f32 0.0, %v2086
          %v2088 = vpop.f32.mrb[0].mxu0
          %v2089 = vpop.f32.mrb[0].mxu0
          %v2090 = vadd.f32 0.0, %v2089
          %v2091 = vpop.f32.mrb[0].mxu0
          %2092 = vmatprep.mubr.bf16.mxu0 %v1256
          %2093 = vmatmul.mubr.bf16.gmra.mrb[0].mxu0 %v1255
          %v2094 = vpop.f32.mrb[0].mxu0
          %v2095 = vadd.f32 0.0, %v2094
          %v2096 = vpop.f32.mrb[0].mxu0
          %v2097 = vpop.f32.mrb[0].mxu0
          %v2098 = vadd.f32 0.0, %v2097
          %v2099 = vpop.f32.mrb[0].mxu0
          %2100 = vmatprep.mubr.bf16.mxu0 %v1258
          %2101 = vmatmul.mubr.bf16.gmra.mrb[0].mxu0 %v1257
          %v2102 = vpop.f32.mrb[0].mxu0
          %v2103 = vadd.f32 0.0, %v2102
          %v2104 = vpop.f32.mrb[0].mxu0
          %v2105 = vpop.f32.mrb[0].mxu0
          %v2106 = vadd.f32 0.0, %v2105
          %v2107 = vpop.f32.mrb[0].mxu0
          %2108 = vmatprep.mubr.bf16.mxu0 %v1260
          %2109 = vmatmul.mubr.bf16.gmra.mrb[0].mxu0 %v1259
          %v2110 = vpop.f32.mrb[0].mxu0
          %v2111 = vadd.f32 0.0, %v2110
          %v2112 = vpop.f32.mrb[0].mxu0
          %v2113 = vpop.f32.mrb[0].mxu0
          %v2114 = vadd.f32 0.0, %v2113
          %v2115 = vpop.f32.mrb[0].mxu0
          %2116 = vmatprep.mubr.bf16.mxu0 %v1262
          %2117 = vmatmul.mubr.bf16.gmra.mrb[0].mxu0 %v1261
          %v2118 = vpop.f32.mrb[0].mxu0
          %v2119 = vadd.f32 0.0, %v2118
          %v2120 = vpop.f32.mrb[0].mxu0
          %v2121 = vpop.f32.mrb[0].mxu0
          %v2122 = vadd.f32 0.0, %v2121
          %v2123 = vpop.f32.mrb[0].mxu0
          %2124 = vmatprep.mubr.bf16.mxu0 %v1264
          %2125 = vmatmul.mubr.bf16.gmra.mrb[0].mxu0 %v1263
          %v2126 = vpop.f32.mrb[0].mxu0
          %v2127 = vadd.f32 0.0, %v2126
          %v2128 = vpop.f32.mrb[0].mxu0
          %v2129 = vpop.f32.mrb[0].mxu0
          %v2130 = vadd.f32 0.0, %v2129
          %v2131 = vpop.f32.mrb[0].mxu0
          %2132 = vmatprep.mubr.bf16.mxu0 %v1266
          %2133 = vmatmul.mubr.bf16.gmra.mrb[0].mxu0 %v1265
          %v2134 = vpop.f32.mrb[0].mxu0
          %v2135 = vadd.f32 0.0, %v2134
          %v2136 = vpop.f32.mrb[0].mxu0
          %v2137 = vpop.f32.mrb[0].mxu0
          %v2138 = vadd.f32 0.0, %v2137
          %v2139 = vpop.f32.mrb[0].mxu0
          %2140 = vmatprep.mubr.bf16.mxu0 %v1268
          %2141 = vmatmul.mubr.bf16.gmra.mrb[0].mxu0 %v1267
          %v2142 = vpop.f32.mrb[0].mxu0
          %v2143 = vadd.f32 0.0, %v2142
          %v2144 = vpop.f32.mrb[0].mxu0
          %v2145 = vpop.f32.mrb[0].mxu0
          %v2146 = vadd.f32 0.0, %v2145
          %v2147 = vpop.f32.mrb[0].mxu0
          %2148 = vmatprep.mubr.bf16.mxu0 %v1270
          %2149 = vmatmul.mubr.bf16.gmra.mrb[0].mxu0 %v1269
          %v2150 = vpop.f32.mrb[0].mxu0
          %v2151 = vadd.f32 0.0, %v2150
          %v2152 = vpop.f32.mrb[0].mxu0
          %v2153 = vpop.f32.mrb[0].mxu0
          %v2154 = vadd.f32 0.0, %v2153
          %v2155 = vpop.f32.mrb[0].mxu0
          %2156 = vmatprep.mubr.bf16.mxu0 %v1272
          %2157 = vmatmul.mubr.bf16.gmra.mrb[0].mxu0 %v1271
          %v2158 = vpop.f32.mrb[0].mxu0
          %v2159 = vadd.f32 0.0, %v2158
          %v2160 = vpop.f32.mrb[0].mxu0
          %v2161 = vpop.f32.mrb[0].mxu0
          %v2162 = vadd.f32 0.0, %v2161
          %v2163 = vpop.f32.mrb[0].mxu0
          %2164 = vmatprep.mubr.bf16.mxu0 %v1274
          %2165 = vmatmul.mubr.bf16.gmra.mrb[0].mxu0 %v1273
          %v2166 = vpop.f32.mrb[0].mxu0
          %v2167 = vadd.f32 0.0, %v2166
          %v2168 = vpop.f32.mrb[0].mxu0
          %v2169 = vpop.f32.mrb[0].mxu0
          %v2170 = vadd.f32 0.0, %v2169
          %v2171 = vpop.f32.mrb[0].mxu0
          %2172 = vmatprep.mubr.bf16.mxu0 %v1276
          %2173 = vmatmul.mubr.bf16.gmra.mrb[0].mxu0 %v1275
          %v2174 = vpop.f32.mrb[0].mxu0
          %v2175 = vadd.f32 0.0, %v2174
          %v2176 = vpop.f32.mrb[0].mxu0
          %v2177 = vpop.f32.mrb[0].mxu0
          %v2178 = vadd.f32 0.0, %v2177
          %v2179 = vpop.f32.mrb[0].mxu0
          %2180 = vmatprep.mubr.bf16.mxu0 %v1278
          %2181 = vmatmul.mubr.bf16.gmra.mrb[0].mxu0 %v1277
          %v2182 = vpop.f32.mrb[0].mxu0
          %v2183 = vadd.f32 0.0, %v2182
          %v2184 = vpop.f32.mrb[0].mxu0
          %v2185 = vpop.f32.mrb[0].mxu0
          %v2186 = vadd.f32 0.0, %v2185
          %v2187 = vpop.f32.mrb[0].mxu0
          %2188 = vmatprep.mubr.bf16.mxu0 %v1280
          %2189 = vmatmul.mubr.bf16.gmra.mrb[0].mxu0 %v1279
          %v2190 = vpop.f32.mrb[0].mxu0
          %v2191 = vadd.f32 0.0, %v2190
          %v2192 = vpop.f32.mrb[0].mxu0
          %v2193 = vpop.f32.mrb[0].mxu0
          %v2194 = vadd.f32 0.0, %v2193
          %v2195 = vpop.f32.mrb[0].mxu0
          %2196 = vmatprep.mubr.bf16.mxu0 %v1282
          %2197 = vmatmul.mubr.bf16.gmra.mrb[0].mxu0 %v1281
          %v2198 = vpop.f32.mrb[0].mxu0
          %v2199 = vadd.f32 0.0, %v2198
          %v2200 = vpop.f32.mrb[0].mxu0
          %v2201 = vpop.f32.mrb[0].mxu0
          %v2202 = vadd.f32 0.0, %v2201
          %v2203 = vpop.f32.mrb[0].mxu0
          %2204 = vmatprep.mubr.bf16.mxu0 %v1284
          %2205 = vmatmul.mubr.bf16.gmra.mrb[0].mxu0 %v1283
          %v2206 = vpop.f32.mrb[0].mxu0
          %v2207 = vadd.f32 0.0, %v2206
          %v2208 = vpop.f32.mrb[0].mxu0
          %v2209 = vpop.f32.mrb[0].mxu0
          %v2210 = vadd.f32 0.0, %v2209
          %v2211 = vpop.f32.mrb[0].mxu0
          %2212 = vmatprep.mubr.bf16.mxu0 %v1286
          %2213 = vmatmul.mubr.bf16.gmra.mrb[0].mxu0 %v1285
          %v2214 = vpop.f32.mrb[0].mxu0
          %v2215 = vadd.f32 0.0, %v2214
          %v2216 = vpop.f32.mrb[0].mxu0
          %v2217 = vpop.f32.mrb[0].mxu0
          %v2218 = vadd.f32 0.0, %v2217
          %v2219 = vpop.f32.mrb[0].mxu0
          %2220 = vmatprep.mubr.bf16.mxu0 %v1288
          %2221 = vmatmul.mubr.bf16.gmra.mrb[0].mxu0 %v1287
          %v2222 = vpop.f32.mrb[0].mxu0
          %v2223 = vadd.f32 0.0, %v2222
          %v2224 = vpop.f32.mrb[0].mxu0
          %v2225 = vpop.f32.mrb[0].mxu0
          %v2226 = vadd.f32 0.0, %v2225
          %v2227 = vpop.f32.mrb[0].mxu0
          %2228 = vmatprep.mubr.bf16.mxu0 %v1290
          %2229 = vmatmul.mubr.bf16.gmra.mrb[0].mxu0 %v1289
          %v2230 = vpop.f32.mrb[0].mxu0
          %v2231 = vadd.f32 0.0, %v2230
          %v2232 = vpop.f32.mrb[0].mxu0
          %v2233 = vpop.f32.mrb[0].mxu0
          %v2234 = vadd.f32 0.0, %v2233
          %v2235 = vpop.f32.mrb[0].mxu0
          %2236 = vmatprep.mubr.bf16.mxu0 %v1292
          %2237 = vmatmul.mubr.bf16.gmra.mrb[0].mxu0 %v1291
          %v2238 = vpop.f32.mrb[0].mxu0
          %v2239 = vadd.f32 0.0, %v2238
          %v2240 = vpop.f32.mrb[0].mxu0
          %v2241 = vpop.f32.mrb[0].mxu0
          %v2242 = vadd.f32 0.0, %v2241
          %v2243 = vpop.f32.mrb[0].mxu0
          %2244 = vmatprep.mubr.bf16.mxu0 %v1294
          %2245 = vmatmul.mubr.bf16.gmra.mrb[0].mxu0 %v1293
          %v2246 = vpop.f32.mrb[0].mxu0
          %v2247 = vadd.f32 0.0, %v2246
          %v2248 = vpop.f32.mrb[0].mxu0
          %v2249 = vpop.f32.mrb[0].mxu0
          %v2250 = vadd.f32 0.0, %v2249
          %v2251 = vpop.f32.mrb[0].mxu0
          %2252 = vmatprep.mubr.bf16.mxu0 %v1296
          %2253 = vmatmul.mubr.bf16.gmra.mrb[0].mxu0 %v1295
          %v2254 = vpop.f32.mrb[0].mxu0
          %v2255 = vadd.f32 0.0, %v2254
          %v2256 = vpop.f32.mrb[0].mxu0
          %v2257 = vpop.f32.mrb[0].mxu0
          %v2258 = vadd.f32 0.0, %v2257
          %v2259 = vpop.f32.mrb[0].mxu0
          %2260 = vmatprep.mubr.bf16.mxu0 %v1298
          %2261 = vmatmul.mubr.bf16.gmra.mrb[0].mxu0 %v1297
          %v2262 = vpop.f32.mrb[0].mxu0
          %v2263 = vadd.f32 0.0, %v2262
          %v2264 = vpop.f32.mrb[0].mxu0
          %v2265 = vpop.f32.mrb[0].mxu0
          %v2266 = vadd.f32 0.0, %v2265
          %v2267 = vpop.f32.mrb[0].mxu0
          %2268 = vmatprep.mubr.bf16.mxu0 %v1300
          %2269 = vmatmul.mubr.bf16.gmra.mrb[0].mxu0 %v1299
          %v2270 = vpop.f32.mrb[0].mxu0
          %v2271 = vadd.f32 0.0, %v2270
          %v2272 = vpop.f32.mrb[0].mxu0
          %v2273 = vpop.f32.mrb[0].mxu0
          %v2274 = vadd.f32 0.0, %v2273
          %v2275 = vpop.f32.mrb[0].mxu0
          %2276 = vmatprep.mubr.bf16.mxu0 %v1302
          %2277 = vmatmul.mubr.bf16.gmra.mrb[0].mxu0 %v1301
          %v2278 = vpop.f32.mrb[0].mxu0
          %v2279 = vadd.f32 0.0, %v2278
          %v2280 = vpop.f32.mrb[0].mxu0
          %v2281 = vpop.f32.mrb[0].mxu0
          %v2282 = vadd.f32 0.0, %v2281
          %v2283 = vpop.f32.mrb[0].mxu0
          %2284 = vmatprep.mubr.bf16.mxu0 %v1304
          %2285 = vmatmul.mubr.bf16.gmra.mrb[0].mxu0 %v1303
          %v2286 = vpop.f32.mrb[0].mxu0
          %v2287 = vadd.f32 0.0, %v2286
          %v2288 = vpop.f32.mrb[0].mxu0
          %v2289 = vpop.f32.mrb[0].mxu0
          %v2290 = vadd.f32 0.0, %v2289
          %v2291 = vpop.f32.mrb[0].mxu0
          %2292 = vmatprep.mubr.bf16.mxu0 %v1306
          %2293 = vmatmul.mubr.bf16.gmra.mrb[0].mxu0 %v1305
          %v2294 = vpop.f32.mrb[0].mxu0
          %v2295 = vadd.f32 0.0, %v2294
          %v2296 = vpop.f32.mrb[0].mxu0
          %v2297 = vpop.f32.mrb[0].mxu0
          %v2298 = vadd.f32 0.0, %v2297
          %v2299 = vpop.f32.mrb[0].mxu0
          %2300 = vmatprep.mubr.bf16.mxu0 %v1308
          %2301 = vmatmul.mubr.bf16.gmra.mrb[0].mxu0 %v1307
          %v2302 = vpop.f32.mrb[0].mxu0
          %v2303 = vadd.f32 0.0, %v2302
          %v2304 = vpop.f32.mrb[0].mxu0
          %v2305 = vpop.f32.mrb[0].mxu0
          %v2306 = vadd.f32 0.0, %v2305
          %v2307 = vpop.f32.mrb[0].mxu0
          %2308 = vdwg.mxu0
          %v2309 = vmul.f32 %v1543, %v325
          %v2310 = vmul.f32 %v1546, %v325
          %v2311 = vmul.f32 %v1551, %v325
          %v2312 = vmul.f32 %v1554, %v325
          %v2313 = vmul.f32 %v1559, %v325
          %v2314 = vmul.f32 %v1562, %v325
          %v2315 = vmul.f32 %v1567, %v325
          %v2316 = vmul.f32 %v1570, %v325
          %v2317 = vmul.f32 %v1575, %v325
          %v2318 = vmul.f32 %v1578, %v325
          %v2319 = vmul.f32 %v1583, %v325
          %v2320 = vmul.f32 %v1586, %v325
          %v2321 = vmul.f32 %v1591, %v325
          %v2322 = vmul.f32 %v1594, %v325
          %v2323 = vmul.f32 %v1599, %v325
          %v2324 = vmul.f32 %v1602, %v325
          %v2325 = vmul.f32 %v1607, %v325
          %v2326 = vmul.f32 %v1610, %v325
          %v2327 = vmul.f32 %v1615, %v325
          %v2328 = vmul.f32 %v1618, %v325
          %v2329 = vmul.f32 %v1623, %v325
          %v2330 = vmul.f32 %v1626, %v325
          %v2331 = vmul.f32 %v1631, %v325
          %v2332 = vmul.f32 %v1634, %v325
          %v2333 = vmul.f32 %v1639, %v326
          %v2334 = vmul.f32 %v1642, %v326
          %v2335 = vmul.f32 %v1647, %v326
          %v2336 = vmul.f32 %v1650, %v326
          %v2337 = vmul.f32 %v1655, %v326
          %v2338 = vmul.f32 %v1658, %v326
          %v2339 = vmul.f32 %v1663, %v326
          %v2340 = vmul.f32 %v1666, %v326
          %v2341 = vmul.f32 %v1671, %v326
          %v2342 = vmul.f32 %v1674, %v326
          %v2343 = vmul.f32 %v1679, %v326
          %v2344 = vmul.f32 %v1682, %v326
          %v2345 = vmul.f32 %v1687, %v326
          %v2346 = vmul.f32 %v1690, %v326
          %v2347 = vmul.f32 %v1695, %v326
          %v2348 = vmul.f32 %v1698, %v326
          %v2349 = vmul.f32 %v1703, %v326
          %v2350 = vmul.f32 %v1706, %v326
          %v2351 = vmul.f32 %v1711, %v326
          %v2352 = vmul.f32 %v1714, %v326
          %v2353 = vmul.f32 %v1719, %v326
          %v2354 = vmul.f32 %v1722, %v326
          %v2355 = vmul.f32 %v1727, %v326
          %v2356 = vmul.f32 %v1730, %v326
          %v2357 = vmul.f32 %v1735, %v327
          %v2358 = vmul.f32 %v1738, %v327
          %v2359 = vmul.f32 %v1743, %v327
          %v2360 = vmul.f32 %v1746, %v327
          %v2361 = vmul.f32 %v1751, %v327
          %v2362 = vmul.f32 %v1754, %v327
          %v2363 = vmul.f32 %v1759, %v327
          %v2364 = vmul.f32 %v1762, %v327
          %v2365 = vmul.f32 %v1767, %v327
          %v2366 = vmul.f32 %v1770, %v327
          %v2367 = vmul.f32 %v1775, %v327
          %v2368 = vmul.f32 %v1778, %v327
          %v2369 = vmul.f32 %v1783, %v327
          %v2370 = vmul.f32 %v1786, %v327
          %v2371 = vmul.f32 %v1791, %v327
          %v2372 = vmul.f32 %v1794, %v327
          %v2373 = vmul.f32 %v1799, %v327
          %v2374 = vmul.f32 %v1802, %v327
          %v2375 = vmul.f32 %v1807, %v327
          %v2376 = vmul.f32 %v1810, %v327
          %v2377 = vmul.f32 %v1815, %v327
          %v2378 = vmul.f32 %v1818, %v327
          %v2379 = vmul.f32 %v1823, %v327
          %v2380 = vmul.f32 %v1826, %v327
          %v2381 = vmul.f32 %v1831, %v328
          %v2382 = vmul.f32 %v1834, %v328
          %v2383 = vmul.f32 %v1839, %v328
          %v2384 = vmul.f32 %v1842, %v328
          %v2385 = vmul.f32 %v1847, %v328
          %v2386 = vmul.f32 %v1850, %v328
          %v2387 = vmul.f32 %v1855, %v328
          %v2388 = vmul.f32 %v1858, %v328
          %v2389 = vmul.f32 %v1863, %v328
          %v2390 = vmul.f32 %v1866, %v328
          %v2391 = vmul.f32 %v1871, %v328
          %v2392 = vmul.f32 %v1874, %v328
          %v2393 = vmul.f32 %v1879, %v328
          %v2394 = vmul.f32 %v1882, %v328
          %v2395 = vmul.f32 %v1887, %v328
          %v2396 = vmul.f32 %v1890, %v328
          %v2397 = vmul.f32 %v1895, %v328
          %v2398 = vmul.f32 %v1898, %v328
          %v2399 = vmul.f32 %v1903, %v328
          %v2400 = vmul.f32 %v1906, %v328
          %v2401 = vmul.f32 %v1911, %v328
          %v2402 = vmul.f32 %v1914, %v328
          %v2403 = vmul.f32 %v1919, %v328
          %v2404 = vmul.f32 %v1922, %v328
          %v2405 = vmul.f32 %v1927, %v329
          %v2406 = vmul.f32 %v1930, %v329
          %v2407 = vmul.f32 %v1935, %v329
          %v2408 = vmul.f32 %v1938, %v329
          %v2409 = vmul.f32 %v1943, %v329
          %v2410 = vmul.f32 %v1946, %v329
          %v2411 = vmul.f32 %v1951, %v329
          %v2412 = vmul.f32 %v1954, %v329
          %v2413 = vmul.f32 %v1959, %v329
          %v2414 = vmul.f32 %v1962, %v329
          %v2415 = vmul.f32 %v1967, %v329
          %v2416 = vmul.f32 %v1970, %v329
          %v2417 = vmul.f32 %v1975, %v329
          %v2418 = vmul.f32 %v1978, %v329
          %v2419 = vmul.f32 %v1983, %v329
          %v2420 = vmul.f32 %v1986, %v329
          %v2421 = vmul.f32 %v1991, %v329
          %v2422 = vmul.f32 %v1994, %v329
          %v2423 = vmul.f32 %v1999, %v329
          %v2424 = vmul.f32 %v2002, %v329
          %v2425 = vmul.f32 %v2007, %v329
          %v2426 = vmul.f32 %v2010, %v329
          %v2427 = vmul.f32 %v2015, %v329
          %v2428 = vmul.f32 %v2018, %v329
          %v2429 = vmul.f32 %v2023, %v330
          %v2430 = vmul.f32 %v2026, %v330
          %v2431 = vmul.f32 %v2031, %v330
          %v2432 = vmul.f32 %v2034, %v330
          %v2433 = vmul.f32 %v2039, %v330
          %v2434 = vmul.f32 %v2042, %v330
          %v2435 = vmul.f32 %v2047, %v330
          %v2436 = vmul.f32 %v2050, %v330
          %v2437 = vmul.f32 %v2055, %v330
          %v2438 = vmul.f32 %v2058, %v330
          %v2439 = vmul.f32 %v2063, %v330
          %v2440 = vmul.f32 %v2066, %v330
          %v2441 = vmul.f32 %v2071, %v330
          %v2442 = vmul.f32 %v2074, %v330
          %v2443 = vmul.f32 %v2079, %v330
          %v2444 = vmul.f32 %v2082, %v330
          %v2445 = vmul.f32 %v2087, %v330
          %v2446 = vmul.f32 %v2090, %v330
          %v2447 = vmul.f32 %v2095, %v330
          %v2448 = vmul.f32 %v2098, %v330
          %v2449 = vmul.f32 %v2103, %v330
          %v2450 = vmul.f32 %v2106, %v330
          %v2451 = vmul.f32 %v2111, %v330
          %v2452 = vmul.f32 %v2114, %v330
          %v2453 = vmul.f32 %v2119, %v331
          %v2454 = vmul.f32 %v2122, %v331
          %v2455 = vmul.f32 %v2127, %v331
          %v2456 = vmul.f32 %v2130, %v331
          %v2457 = vmul.f32 %v2135, %v331
          %v2458 = vmul.f32 %v2138, %v331
          %v2459 = vmul.f32 %v2143, %v331
          %v2460 = vmul.f32 %v2146, %v331
          %v2461 = vmul.f32 %v2151, %v331
          %v2462 = vmul.f32 %v2154, %v331
          %v2463 = vmul.f32 %v2159, %v331
          %v2464 = vmul.f32 %v2162, %v331
          %v2465 = vmul.f32 %v2167, %v331
          %v2466 = vmul.f32 %v2170, %v331
          %v2467 = vmul.f32 %v2175, %v331
          %v2468 = vmul.f32 %v2178, %v331
          %v2469 = vmul.f32 %v2183, %v331
          %v2470 = vmul.f32 %v2186, %v331
          %v2471 = vmul.f32 %v2191, %v331
          %v2472 = vmul.f32 %v2194, %v331
          %v2473 = vmul.f32 %v2199, %v331
          %v2474 = vmul.f32 %v2202, %v331
          %v2475 = vmul.f32 %v2207, %v331
          %v2476 = vmul.f32 %v2210, %v331
          %v2477 = vmul.f32 %v2215, %v332
          %v2478 = vmul.f32 %v2218, %v332
          %v2479 = vmul.f32 %v2223, %v332
          %v2480 = vmul.f32 %v2226, %v332
          %v2481 = vmul.f32 %v2231, %v332
          %v2482 = vmul.f32 %v2234, %v332
          %v2483 = vmul.f32 %v2239, %v332
          %v2484 = vmul.f32 %v2242, %v332
          %v2485 = vmul.f32 %v2247, %v332
          %v2486 = vmul.f32 %v2250, %v332
          %v2487 = vmul.f32 %v2255, %v332
          %v2488 = vmul.f32 %v2258, %v332
          %v2489 = vmul.f32 %v2263, %v332
          %v2490 = vmul.f32 %v2266, %v332
          %v2491 = vmul.f32 %v2271, %v332
          %v2492 = vmul.f32 %v2274, %v332
          %v2493 = vmul.f32 %v2279, %v332
          %v2494 = vmul.f32 %v2282, %v332
          %v2495 = vmul.f32 %v2287, %v332
          %v2496 = vmul.f32 %v2290, %v332
          %v2497 = vmul.f32 %v2295, %v332
          %v2498 = vmul.f32 %v2298, %v332
          %v2499 = vmul.f32 %v2303, %v332
          %v2500 = vmul.f32 %v2306, %v332
          %vm2501 = vcmask 64512
          %v2502 = vsel %vm2501, %v2309, 0.0
          %2503 = vadd.xlane.f32.xlu0 %v2502
          %v2504 = vpop.xlane.xlu0 %2503
          %v2505 = vsel %vm2501, %v2310, 0.0
          %2506 = vadd.xlane.f32.xlu0 %v2505
          %v2507 = vpop.xlane.xlu0 %2506
          %v2508 = vsel %vm2501, %v2311, 0.0
          %2509 = vadd.xlane.f32.xlu0 %v2508
          %v2510 = vpop.xlane.xlu0 %2509
          %v2511 = vsel %vm2501, %v2312, 0.0
          %2512 = vadd.xlane.f32.xlu0 %v2511
          %v2513 = vpop.xlane.xlu0 %2512
          %v2514 = vsel %vm2501, %v2313, 0.0
          %2515 = vadd.xlane.f32.xlu0 %v2514
          %v2516 = vpop.xlane.xlu0 %2515
          %v2517 = vsel %vm2501, %v2314, 0.0
          %2518 = vadd.xlane.f32.xlu0 %v2517
          %v2519 = vpop.xlane.xlu0 %2518
          %v2520 = vsel %vm2501, %v2315, 0.0
          %2521 = vadd.xlane.f32.xlu0 %v2520
          %v2522 = vpop.xlane.xlu0 %2521
          %v2523 = vsel %vm2501, %v2316, 0.0
          %2524 = vadd.xlane.f32.xlu0 %v2523
          %v2525 = vpop.xlane.xlu0 %2524
          %v2526 = vsel %vm2501, %v2317, 0.0
          %2527 = vadd.xlane.f32.xlu0 %v2526
          %v2528 = vpop.xlane.xlu0 %2527
          %v2529 = vsel %vm2501, %v2318, 0.0
          %2530 = vadd.xlane.f32.xlu0 %v2529
          %v2531 = vpop.xlane.xlu0 %2530
          %v2532 = vsel %vm2501, %v2319, 0.0
          %2533 = vadd.xlane.f32.xlu0 %v2532
          %v2534 = vpop.xlane.xlu0 %2533
          %v2535 = vsel %vm2501, %v2320, 0.0
          %2536 = vadd.xlane.f32.xlu0 %v2535
          %v2537 = vpop.xlane.xlu0 %2536
          %v2538 = vsel %vm2501, %v2321, 0.0
          %2539 = vadd.xlane.f32.xlu0 %v2538
          %v2540 = vpop.xlane.xlu0 %2539
          %v2541 = vsel %vm2501, %v2322, 0.0
          %2542 = vadd.xlane.f32.xlu0 %v2541
          %v2543 = vpop.xlane.xlu0 %2542
          %v2544 = vsel %vm2501, %v2323, 0.0
          %2545 = vadd.xlane.f32.xlu0 %v2544
          %v2546 = vpop.xlane.xlu0 %2545
          %v2547 = vsel %vm2501, %v2324, 0.0
          %2548 = vadd.xlane.f32.xlu0 %v2547
          %v2549 = vpop.xlane.xlu0 %2548
          %v2550 = vsel %vm2501, %v2325, 0.0
          %2551 = vadd.xlane.f32.xlu0 %v2550
          %v2552 = vpop.xlane.xlu0 %2551
          %v2553 = vsel %vm2501, %v2326, 0.0
          %2554 = vadd.xlane.f32.xlu0 %v2553
          %v2555 = vpop.xlane.xlu0 %2554
          %v2556 = vsel %vm2501, %v2327, 0.0
          %2557 = vadd.xlane.f32.xlu0 %v2556
          %v2558 = vpop.xlane.xlu0 %2557
          %v2559 = vsel %vm2501, %v2328, 0.0
          %2560 = vadd.xlane.f32.xlu0 %v2559
          %v2561 = vpop.xlane.xlu0 %2560
          %v2562 = vsel %vm2501, %v2329, 0.0
          %2563 = vadd.xlane.f32.xlu0 %v2562
          %v2564 = vpop.xlane.xlu0 %2563
          %v2565 = vsel %vm2501, %v2330, 0.0
          %2566 = vadd.xlane.f32.xlu0 %v2565
          %v2567 = vpop.xlane.xlu0 %2566
          %v2568 = vsel %vm2501, %v2331, 0.0
          %2569 = vadd.xlane.f32.xlu0 %v2568
          %v2570 = vpop.xlane.xlu0 %2569
          %v2571 = vsel %vm2501, %v2332, 0.0
          %2572 = vadd.xlane.f32.xlu0 %v2571
          %v2573 = vpop.xlane.xlu0 %2572
          %v2574 = vsel %vm2501, %v2333, 0.0
          %2575 = vadd.xlane.f32.xlu0 %v2574
          %v2576 = vpop.xlane.xlu0 %2575
          %v2577 = vsel %vm2501, %v2334, 0.0
          %2578 = vadd.xlane.f32.xlu0 %v2577
          %v2579 = vpop.xlane.xlu0 %2578
          %v2580 = vsel %vm2501, %v2335, 0.0
          %2581 = vadd.xlane.f32.xlu0 %v2580
          %v2582 = vpop.xlane.xlu0 %2581
          %v2583 = vsel %vm2501, %v2336, 0.0
          %2584 = vadd.xlane.f32.xlu0 %v2583
          %v2585 = vpop.xlane.xlu0 %2584
          %v2586 = vsel %vm2501, %v2337, 0.0
          %2587 = vadd.xlane.f32.xlu0 %v2586
          %v2588 = vpop.xlane.xlu0 %2587
          %v2589 = vsel %vm2501, %v2338, 0.0
          %2590 = vadd.xlane.f32.xlu0 %v2589
          %v2591 = vpop.xlane.xlu0 %2590
          %v2592 = vsel %vm2501, %v2339, 0.0
          %2593 = vadd.xlane.f32.xlu0 %v2592
          %v2594 = vpop.xlane.xlu0 %2593
          %v2595 = vsel %vm2501, %v2340, 0.0
          %2596 = vadd.xlane.f32.xlu0 %v2595
          %v2597 = vpop.xlane.xlu0 %2596
          %v2598 = vsel %vm2501, %v2341, 0.0
          %2599 = vadd.xlane.f32.xlu0 %v2598
          %v2600 = vpop.xlane.xlu0 %2599
          %v2601 = vsel %vm2501, %v2342, 0.0
          %2602 = vadd.xlane.f32.xlu0 %v2601
          %v2603 = vpop.xlane.xlu0 %2602
          %v2604 = vsel %vm2501, %v2343, 0.0
          %2605 = vadd.xlane.f32.xlu0 %v2604
          %v2606 = vpop.xlane.xlu0 %2605
          %v2607 = vsel %vm2501, %v2344, 0.0
          %2608 = vadd.xlane.f32.xlu0 %v2607
          %v2609 = vpop.xlane.xlu0 %2608
          %v2610 = vsel %vm2501, %v2345, 0.0
          %2611 = vadd.xlane.f32.xlu0 %v2610
          %v2612 = vpop.xlane.xlu0 %2611
          %v2613 = vsel %vm2501, %v2346, 0.0
          %2614 = vadd.xlane.f32.xlu0 %v2613
          %v2615 = vpop.xlane.xlu0 %2614
          %v2616 = vsel %vm2501, %v2347, 0.0
          %2617 = vadd.xlane.f32.xlu0 %v2616
          %v2618 = vpop.xlane.xlu0 %2617
          %v2619 = vsel %vm2501, %v2348, 0.0
          %2620 = vadd.xlane.f32.xlu0 %v2619
          %v2621 = vpop.xlane.xlu0 %2620
          %v2622 = vsel %vm2501, %v2349, 0.0
          %2623 = vadd.xlane.f32.xlu0 %v2622
          %v2624 = vpop.xlane.xlu0 %2623
          %v2625 = vsel %vm2501, %v2350, 0.0
          %2626 = vadd.xlane.f32.xlu0 %v2625
          %v2627 = vpop.xlane.xlu0 %2626
          %v2628 = vsel %vm2501, %v2351, 0.0
          %2629 = vadd.xlane.f32.xlu0 %v2628
          %v2630 = vpop.xlane.xlu0 %2629
          %v2631 = vsel %vm2501, %v2352, 0.0
          %2632 = vadd.xlane.f32.xlu0 %v2631
          %v2633 = vpop.xlane.xlu0 %2632
          %v2634 = vsel %vm2501, %v2353, 0.0
          %2635 = vadd.xlane.f32.xlu0 %v2634
          %v2636 = vpop.xlane.xlu0 %2635
          %v2637 = vsel %vm2501, %v2354, 0.0
          %2638 = vadd.xlane.f32.xlu0 %v2637
          %v2639 = vpop.xlane.xlu0 %2638
          %v2640 = vsel %vm2501, %v2355, 0.0
          %2641 = vadd.xlane.f32.xlu0 %v2640
          %v2642 = vpop.xlane.xlu0 %2641
          %v2643 = vsel %vm2501, %v2356, 0.0
          %2644 = vadd.xlane.f32.xlu0 %v2643
          %v2645 = vpop.xlane.xlu0 %2644
          %v2646 = vsel %vm2501, %v2357, 0.0
          %2647 = vadd.xlane.f32.xlu0 %v2646
          %v2648 = vpop.xlane.xlu0 %2647
          %v2649 = vsel %vm2501, %v2358, 0.0
          %2650 = vadd.xlane.f32.xlu0 %v2649
          %v2651 = vpop.xlane.xlu0 %2650
          %v2652 = vsel %vm2501, %v2359, 0.0
          %2653 = vadd.xlane.f32.xlu0 %v2652
          %v2654 = vpop.xlane.xlu0 %2653
          %v2655 = vsel %vm2501, %v2360, 0.0
          %2656 = vadd.xlane.f32.xlu0 %v2655
          %v2657 = vpop.xlane.xlu0 %2656
          %v2658 = vsel %vm2501, %v2361, 0.0
          %2659 = vadd.xlane.f32.xlu0 %v2658
          %v2660 = vpop.xlane.xlu0 %2659
          %v2661 = vsel %vm2501, %v2362, 0.0
          %2662 = vadd.xlane.f32.xlu0 %v2661
          %v2663 = vpop.xlane.xlu0 %2662
          %v2664 = vsel %vm2501, %v2363, 0.0
          %2665 = vadd.xlane.f32.xlu0 %v2664
          %v2666 = vpop.xlane.xlu0 %2665
          %v2667 = vsel %vm2501, %v2364, 0.0
          %2668 = vadd.xlane.f32.xlu0 %v2667
          %v2669 = vpop.xlane.xlu0 %2668
          %v2670 = vsel %vm2501, %v2365, 0.0
          %2671 = vadd.xlane.f32.xlu0 %v2670
          %v2672 = vpop.xlane.xlu0 %2671
          %v2673 = vsel %vm2501, %v2366, 0.0
          %2674 = vadd.xlane.f32.xlu0 %v2673
          %v2675 = vpop.xlane.xlu0 %2674
          %v2676 = vsel %vm2501, %v2367, 0.0
          %2677 = vadd.xlane.f32.xlu0 %v2676
          %v2678 = vpop.xlane.xlu0 %2677
          %v2679 = vsel %vm2501, %v2368, 0.0
          %2680 = vadd.xlane.f32.xlu0 %v2679
          %v2681 = vpop.xlane.xlu0 %2680
          %v2682 = vsel %vm2501, %v2369, 0.0
          %2683 = vadd.xlane.f32.xlu0 %v2682
          %v2684 = vpop.xlane.xlu0 %2683
          %v2685 = vsel %vm2501, %v2370, 0.0
          %2686 = vadd.xlane.f32.xlu0 %v2685
          %v2687 = vpop.xlane.xlu0 %2686
          %v2688 = vsel %vm2501, %v2371, 0.0
          %2689 = vadd.xlane.f32.xlu0 %v2688
          %v2690 = vpop.xlane.xlu0 %2689
          %v2691 = vsel %vm2501, %v2372, 0.0
          %2692 = vadd.xlane.f32.xlu0 %v2691
          %v2693 = vpop.xlane.xlu0 %2692
          %v2694 = vsel %vm2501, %v2373, 0.0
          %2695 = vadd.xlane.f32.xlu0 %v2694
          %v2696 = vpop.xlane.xlu0 %2695
          %v2697 = vsel %vm2501, %v2374, 0.0
          %2698 = vadd.xlane.f32.xlu0 %v2697
          %v2699 = vpop.xlane.xlu0 %2698
          %v2700 = vsel %vm2501, %v2375, 0.0
          %2701 = vadd.xlane.f32.xlu0 %v2700
          %v2702 = vpop.xlane.xlu0 %2701
          %v2703 = vsel %vm2501, %v2376, 0.0
          %2704 = vadd.xlane.f32.xlu0 %v2703
          %v2705 = vpop.xlane.xlu0 %2704
          %v2706 = vsel %vm2501, %v2377, 0.0
          %2707 = vadd.xlane.f32.xlu0 %v2706
          %v2708 = vpop.xlane.xlu0 %2707
          %v2709 = vsel %vm2501, %v2378, 0.0
          %2710 = vadd.xlane.f32.xlu0 %v2709
          %v2711 = vpop.xlane.xlu0 %2710
          %v2712 = vsel %vm2501, %v2379, 0.0
          %2713 = vadd.xlane.f32.xlu0 %v2712
          %v2714 = vpop.xlane.xlu0 %2713
          %v2715 = vsel %vm2501, %v2380, 0.0
          %2716 = vadd.xlane.f32.xlu0 %v2715
          %v2717 = vpop.xlane.xlu0 %2716
          %v2718 = vsel %vm2501, %v2381, 0.0
          %2719 = vadd.xlane.f32.xlu0 %v2718
          %v2720 = vpop.xlane.xlu0 %2719
          %v2721 = vsel %vm2501, %v2382, 0.0
          %2722 = vadd.xlane.f32.xlu0 %v2721
          %v2723 = vpop.xlane.xlu0 %2722
          %v2724 = vsel %vm2501, %v2383, 0.0
          %2725 = vadd.xlane.f32.xlu0 %v2724
          %v2726 = vpop.xlane.xlu0 %2725
          %v2727 = vsel %vm2501, %v2384, 0.0
          %2728 = vadd.xlane.f32.xlu0 %v2727
          %v2729 = vpop.xlane.xlu0 %2728
          %v2730 = vsel %vm2501, %v2385, 0.0
          %2731 = vadd.xlane.f32.xlu0 %v2730
          %v2732 = vpop.xlane.xlu0 %2731
          %v2733 = vsel %vm2501, %v2386, 0.0
          %2734 = vadd.xlane.f32.xlu0 %v2733
          %v2735 = vpop.xlane.xlu0 %2734
          %v2736 = vsel %vm2501, %v2387, 0.0
          %2737 = vadd.xlane.f32.xlu0 %v2736
          %v2738 = vpop.xlane.xlu0 %2737
          %v2739 = vsel %vm2501, %v2388, 0.0
          %2740 = vadd.xlane.f32.xlu0 %v2739
          %v2741 = vpop.xlane.xlu0 %2740
          %v2742 = vsel %vm2501, %v2389, 0.0
          %2743 = vadd.xlane.f32.xlu0 %v2742
          %v2744 = vpop.xlane.xlu0 %2743
          %v2745 = vsel %vm2501, %v2390, 0.0
          %2746 = vadd.xlane.f32.xlu0 %v2745
          %v2747 = vpop.xlane.xlu0 %2746
          %v2748 = vsel %vm2501, %v2391, 0.0
          %2749 = vadd.xlane.f32.xlu0 %v2748
          %v2750 = vpop.xlane.xlu0 %2749
          %v2751 = vsel %vm2501, %v2392, 0.0
          %2752 = vadd.xlane.f32.xlu0 %v2751
          %v2753 = vpop.xlane.xlu0 %2752
          %v2754 = vsel %vm2501, %v2393, 0.0
          %2755 = vadd.xlane.f32.xlu0 %v2754
          %v2756 = vpop.xlane.xlu0 %2755
          %v2757 = vsel %vm2501, %v2394, 0.0
          %2758 = vadd.xlane.f32.xlu0 %v2757
          %v2759 = vpop.xlane.xlu0 %2758
          %v2760 = vsel %vm2501, %v2395, 0.0
          %2761 = vadd.xlane.f32.xlu0 %v2760
          %v2762 = vpop.xlane.xlu0 %2761
          %v2763 = vsel %vm2501, %v2396, 0.0
          %2764 = vadd.xlane.f32.xlu0 %v2763
          %v2765 = vpop.xlane.xlu0 %2764
          %v2766 = vsel %vm2501, %v2397, 0.0
          %2767 = vadd.xlane.f32.xlu0 %v2766
          %v2768 = vpop.xlane.xlu0 %2767
          %v2769 = vsel %vm2501, %v2398, 0.0
          %2770 = vadd.xlane.f32.xlu0 %v2769
          %v2771 = vpop.xlane.xlu0 %2770
          %v2772 = vsel %vm2501, %v2399, 0.0
          %2773 = vadd.xlane.f32.xlu0 %v2772
          %v2774 = vpop.xlane.xlu0 %2773
          %v2775 = vsel %vm2501, %v2400, 0.0
          %2776 = vadd.xlane.f32.xlu0 %v2775
          %v2777 = vpop.xlane.xlu0 %2776
          %v2778 = vsel %vm2501, %v2401, 0.0
          %2779 = vadd.xlane.f32.xlu0 %v2778
          %v2780 = vpop.xlane.xlu0 %2779
          %v2781 = vsel %vm2501, %v2402, 0.0
          %2782 = vadd.xlane.f32.xlu0 %v2781
          %v2783 = vpop.xlane.xlu0 %2782
          %v2784 = vsel %vm2501, %v2403, 0.0
          %2785 = vadd.xlane.f32.xlu0 %v2784
          %v2786 = vpop.xlane.xlu0 %2785
          %v2787 = vsel %vm2501, %v2404, 0.0
          %2788 = vadd.xlane.f32.xlu0 %v2787
          %v2789 = vpop.xlane.xlu0 %2788
          %v2790 = vsel %vm2501, %v2405, 0.0
          %2791 = vadd.xlane.f32.xlu0 %v2790
          %v2792 = vpop.xlane.xlu0 %2791
          %v2793 = vsel %vm2501, %v2406, 0.0
          %2794 = vadd.xlane.f32.xlu0 %v2793
          %v2795 = vpop.xlane.xlu0 %2794
          %v2796 = vsel %vm2501, %v2407, 0.0
          %2797 = vadd.xlane.f32.xlu0 %v2796
          %v2798 = vpop.xlane.xlu0 %2797
          %v2799 = vsel %vm2501, %v2408, 0.0
          %2800 = vadd.xlane.f32.xlu0 %v2799
          %v2801 = vpop.xlane.xlu0 %2800
          %v2802 = vsel %vm2501, %v2409, 0.0
          %2803 = vadd.xlane.f32.xlu0 %v2802
          %v2804 = vpop.xlane.xlu0 %2803
          %v2805 = vsel %vm2501, %v2410, 0.0
          %2806 = vadd.xlane.f32.xlu0 %v2805
          %v2807 = vpop.xlane.xlu0 %2806
          %v2808 = vsel %vm2501, %v2411, 0.0
          %2809 = vadd.xlane.f32.xlu0 %v2808
          %v2810 = vpop.xlane.xlu0 %2809
          %v2811 = vsel %vm2501, %v2412, 0.0
          %2812 = vadd.xlane.f32.xlu0 %v2811
          %v2813 = vpop.xlane.xlu0 %2812
          %v2814 = vsel %vm2501, %v2413, 0.0
          %2815 = vadd.xlane.f32.xlu0 %v2814
          %v2816 = vpop.xlane.xlu0 %2815
          %v2817 = vsel %vm2501, %v2414, 0.0
          %2818 = vadd.xlane.f32.xlu0 %v2817
          %v2819 = vpop.xlane.xlu0 %2818
          %v2820 = vsel %vm2501, %v2415, 0.0
          %2821 = vadd.xlane.f32.xlu0 %v2820
          %v2822 = vpop.xlane.xlu0 %2821
          %v2823 = vsel %vm2501, %v2416, 0.0
          %2824 = vadd.xlane.f32.xlu0 %v2823
          %v2825 = vpop.xlane.xlu0 %2824
          %v2826 = vsel %vm2501, %v2417, 0.0
          %2827 = vadd.xlane.f32.xlu0 %v2826
          %v2828 = vpop.xlane.xlu0 %2827
          %v2829 = vsel %vm2501, %v2418, 0.0
          %2830 = vadd.xlane.f32.xlu0 %v2829
          %v2831 = vpop.xlane.xlu0 %2830
          %v2832 = vsel %vm2501, %v2419, 0.0
          %2833 = vadd.xlane.f32.xlu0 %v2832
          %v2834 = vpop.xlane.xlu0 %2833
          %v2835 = vsel %vm2501, %v2420, 0.0
          %2836 = vadd.xlane.f32.xlu0 %v2835
          %v2837 = vpop.xlane.xlu0 %2836
          %v2838 = vsel %vm2501, %v2421, 0.0
          %2839 = vadd.xlane.f32.xlu0 %v2838
          %v2840 = vpop.xlane.xlu0 %2839
          %v2841 = vsel %vm2501, %v2422, 0.0
          %2842 = vadd.xlane.f32.xlu0 %v2841
          %v2843 = vpop.xlane.xlu0 %2842
          %v2844 = vsel %vm2501, %v2423, 0.0
          %2845 = vadd.xlane.f32.xlu0 %v2844
          %v2846 = vpop.xlane.xlu0 %2845
          %v2847 = vsel %vm2501, %v2424, 0.0
          %2848 = vadd.xlane.f32.xlu0 %v2847
          %v2849 = vpop.xlane.xlu0 %2848
          %v2850 = vsel %vm2501, %v2425, 0.0
          %2851 = vadd.xlane.f32.xlu0 %v2850
          %v2852 = vpop.xlane.xlu0 %2851
          %v2853 = vsel %vm2501, %v2426, 0.0
          %2854 = vadd.xlane.f32.xlu0 %v2853
          %v2855 = vpop.xlane.xlu0 %2854
          %v2856 = vsel %vm2501, %v2427, 0.0
          %2857 = vadd.xlane.f32.xlu0 %v2856
          %v2858 = vpop.xlane.xlu0 %2857
          %v2859 = vsel %vm2501, %v2428, 0.0
          %2860 = vadd.xlane.f32.xlu0 %v2859
          %v2861 = vpop.xlane.xlu0 %2860
          %v2862 = vsel %vm2501, %v2429, 0.0
          %2863 = vadd.xlane.f32.xlu0 %v2862
          %v2864 = vpop.xlane.xlu0 %2863
          %v2865 = vsel %vm2501, %v2430, 0.0
          %2866 = vadd.xlane.f32.xlu0 %v2865
          %v2867 = vpop.xlane.xlu0 %2866
          %v2868 = vsel %vm2501, %v2431, 0.0
          %2869 = vadd.xlane.f32.xlu0 %v2868
          %v2870 = vpop.xlane.xlu0 %2869
          %v2871 = vsel %vm2501, %v2432, 0.0
          %2872 = vadd.xlane.f32.xlu0 %v2871
          %v2873 = vpop.xlane.xlu0 %2872
          %v2874 = vsel %vm2501, %v2433, 0.0
          %2875 = vadd.xlane.f32.xlu0 %v2874
          %v2876 = vpop.xlane.xlu0 %2875
          %v2877 = vsel %vm2501, %v2434, 0.0
          %2878 = vadd.xlane.f32.xlu0 %v2877
          %v2879 = vpop.xlane.xlu0 %2878
          %v2880 = vsel %vm2501, %v2435, 0.0
          %2881 = vadd.xlane.f32.xlu0 %v2880
          %v2882 = vpop.xlane.xlu0 %2881
          %v2883 = vsel %vm2501, %v2436, 0.0
          %2884 = vadd.xlane.f32.xlu0 %v2883
          %v2885 = vpop.xlane.xlu0 %2884
          %v2886 = vsel %vm2501, %v2437, 0.0
          %2887 = vadd.xlane.f32.xlu0 %v2886
          %v2888 = vpop.xlane.xlu0 %2887
          %v2889 = vsel %vm2501, %v2438, 0.0
          %2890 = vadd.xlane.f32.xlu0 %v2889
          %v2891 = vpop.xlane.xlu0 %2890
          %v2892 = vsel %vm2501, %v2439, 0.0
          %2893 = vadd.xlane.f32.xlu0 %v2892
          %v2894 = vpop.xlane.xlu0 %2893
          %v2895 = vsel %vm2501, %v2440, 0.0
          %2896 = vadd.xlane.f32.xlu0 %v2895
          %v2897 = vpop.xlane.xlu0 %2896
          %v2898 = vsel %vm2501, %v2441, 0.0
          %2899 = vadd.xlane.f32.xlu0 %v2898
          %v2900 = vpop.xlane.xlu0 %2899
          %v2901 = vsel %vm2501, %v2442, 0.0
          %2902 = vadd.xlane.f32.xlu0 %v2901
          %v2903 = vpop.xlane.xlu0 %2902
          %v2904 = vsel %vm2501, %v2443, 0.0
          %2905 = vadd.xlane.f32.xlu0 %v2904
          %v2906 = vpop.xlane.xlu0 %2905
          %v2907 = vsel %vm2501, %v2444, 0.0
          %2908 = vadd.xlane.f32.xlu0 %v2907
          %v2909 = vpop.xlane.xlu0 %2908
          %v2910 = vsel %vm2501, %v2445, 0.0
          %2911 = vadd.xlane.f32.xlu0 %v2910
          %v2912 = vpop.xlane.xlu0 %2911
          %v2913 = vsel %vm2501, %v2446, 0.0
          %2914 = vadd.xlane.f32.xlu0 %v2913
          %v2915 = vpop.xlane.xlu0 %2914
          %v2916 = vsel %vm2501, %v2447, 0.0
          %2917 = vadd.xlane.f32.xlu0 %v2916
          %v2918 = vpop.xlane.xlu0 %2917
          %v2919 = vsel %vm2501, %v2448, 0.0
          %2920 = vadd.xlane.f32.xlu0 %v2919
          %v2921 = vpop.xlane.xlu0 %2920
          %v2922 = vsel %vm2501, %v2449, 0.0
          %2923 = vadd.xlane.f32.xlu0 %v2922
          %v2924 = vpop.xlane.xlu0 %2923
          %v2925 = vsel %vm2501, %v2450, 0.0
          %2926 = vadd.xlane.f32.xlu0 %v2925
          %v2927 = vpop.xlane.xlu0 %2926
          %v2928 = vsel %vm2501, %v2451, 0.0
          %2929 = vadd.xlane.f32.xlu0 %v2928
          %v2930 = vpop.xlane.xlu0 %2929
          %v2931 = vsel %vm2501, %v2452, 0.0
          %2932 = vadd.xlane.f32.xlu0 %v2931
          %v2933 = vpop.xlane.xlu0 %2932
          %v2934 = vsel %vm2501, %v2453, 0.0
          %2935 = vadd.xlane.f32.xlu0 %v2934
          %v2936 = vpop.xlane.xlu0 %2935
          %v2937 = vsel %vm2501, %v2454, 0.0
          %2938 = vadd.xlane.f32.xlu0 %v2937
          %v2939 = vpop.xlane.xlu0 %2938
          %v2940 = vsel %vm2501, %v2455, 0.0
          %2941 = vadd.xlane.f32.xlu0 %v2940
          %v2942 = vpop.xlane.xlu0 %2941
          %v2943 = vsel %vm2501, %v2456, 0.0
          %2944 = vadd.xlane.f32.xlu0 %v2943
          %v2945 = vpop.xlane.xlu0 %2944
          %v2946 = vsel %vm2501, %v2457, 0.0
          %2947 = vadd.xlane.f32.xlu0 %v2946
          %v2948 = vpop.xlane.xlu0 %2947
          %v2949 = vsel %vm2501, %v2458, 0.0
          %2950 = vadd.xlane.f32.xlu0 %v2949
          %v2951 = vpop.xlane.xlu0 %2950
          %v2952 = vsel %vm2501, %v2459, 0.0
          %2953 = vadd.xlane.f32.xlu0 %v2952
          %v2954 = vpop.xlane.xlu0 %2953
          %v2955 = vsel %vm2501, %v2460, 0.0
          %2956 = vadd.xlane.f32.xlu0 %v2955
          %v2957 = vpop.xlane.xlu0 %2956
          %v2958 = vsel %vm2501, %v2461, 0.0
          %2959 = vadd.xlane.f32.xlu0 %v2958
          %v2960 = vpop.xlane.xlu0 %2959
          %v2961 = vsel %vm2501, %v2462, 0.0
          %2962 = vadd.xlane.f32.xlu0 %v2961
          %v2963 = vpop.xlane.xlu0 %2962
          %v2964 = vsel %vm2501, %v2463, 0.0
          %2965 = vadd.xlane.f32.xlu0 %v2964
          %v2966 = vpop.xlane.xlu0 %2965
          %v2967 = vsel %vm2501, %v2464, 0.0
          %2968 = vadd.xlane.f32.xlu0 %v2967
          %v2969 = vpop.xlane.xlu0 %2968
          %v2970 = vsel %vm2501, %v2465, 0.0
          %2971 = vadd.xlane.f32.xlu0 %v2970
          %v2972 = vpop.xlane.xlu0 %2971
          %v2973 = vsel %vm2501, %v2466, 0.0
          %2974 = vadd.xlane.f32.xlu0 %v2973
          %v2975 = vpop.xlane.xlu0 %2974
          %v2976 = vsel %vm2501, %v2467, 0.0
          %2977 = vadd.xlane.f32.xlu0 %v2976
          %v2978 = vpop.xlane.xlu0 %2977
          %v2979 = vsel %vm2501, %v2468, 0.0
          %2980 = vadd.xlane.f32.xlu0 %v2979
          %v2981 = vpop.xlane.xlu0 %2980
          %v2982 = vsel %vm2501, %v2469, 0.0
          %2983 = vadd.xlane.f32.xlu0 %v2982
          %v2984 = vpop.xlane.xlu0 %2983
          %v2985 = vsel %vm2501, %v2470, 0.0
          %2986 = vadd.xlane.f32.xlu0 %v2985
          %v2987 = vpop.xlane.xlu0 %2986
          %v2988 = vsel %vm2501, %v2471, 0.0
          %2989 = vadd.xlane.f32.xlu0 %v2988
          %v2990 = vpop.xlane.xlu0 %2989
          %v2991 = vsel %vm2501, %v2472, 0.0
          %2992 = vadd.xlane.f32.xlu0 %v2991
          %v2993 = vpop.xlane.xlu0 %2992
          %v2994 = vsel %vm2501, %v2473, 0.0
          %2995 = vadd.xlane.f32.xlu0 %v2994
          %v2996 = vpop.xlane.xlu0 %2995
          %v2997 = vsel %vm2501, %v2474, 0.0
          %2998 = vadd.xlane.f32.xlu0 %v2997
          %v2999 = vpop.xlane.xlu0 %2998
          %v3000 = vsel %vm2501, %v2475, 0.0
          %3001 = vadd.xlane.f32.xlu0 %v3000
          %v3002 = vpop.xlane.xlu0 %3001
          %v3003 = vsel %vm2501, %v2476, 0.0
          %3004 = vadd.xlane.f32.xlu0 %v3003
          %v3005 = vpop.xlane.xlu0 %3004
          %v3006 = vsel %vm2501, %v2477, 0.0
          %3007 = vadd.xlane.f32.xlu0 %v3006
          %v3008 = vpop.xlane.xlu0 %3007
          %v3009 = vsel %vm2501, %v2478, 0.0
          %3010 = vadd.xlane.f32.xlu0 %v3009
          %v3011 = vpop.xlane.xlu0 %3010
          %v3012 = vsel %vm2501, %v2479, 0.0
          %3013 = vadd.xlane.f32.xlu0 %v3012
          %v3014 = vpop.xlane.xlu0 %3013
          %v3015 = vsel %vm2501, %v2480, 0.0
          %3016 = vadd.xlane.f32.xlu0 %v3015
          %v3017 = vpop.xlane.xlu0 %3016
          %v3018 = vsel %vm2501, %v2481, 0.0
          %3019 = vadd.xlane.f32.xlu0 %v3018
          %v3020 = vpop.xlane.xlu0 %3019
          %v3021 = vsel %vm2501, %v2482, 0.0
          %3022 = vadd.xlane.f32.xlu0 %v3021
          %v3023 = vpop.xlane.xlu0 %3022
          %v3024 = vsel %vm2501, %v2483, 0.0
          %3025 = vadd.xlane.f32.xlu0 %v3024
          %v3026 = vpop.xlane.xlu0 %3025
          %v3027 = vsel %vm2501, %v2484, 0.0
          %3028 = vadd.xlane.f32.xlu0 %v3027
          %v3029 = vpop.xlane.xlu0 %3028
          %v3030 = vsel %vm2501, %v2485, 0.0
          %3031 = vadd.xlane.f32.xlu0 %v3030
          %v3032 = vpop.xlane.xlu0 %3031
          %v3033 = vsel %vm2501, %v2486, 0.0
          %3034 = vadd.xlane.f32.xlu0 %v3033
          %v3035 = vpop.xlane.xlu0 %3034
          %v3036 = vsel %vm2501, %v2487, 0.0
          %3037 = vadd.xlane.f32.xlu0 %v3036
          %v3038 = vpop.xlane.xlu0 %3037
          %v3039 = vsel %vm2501, %v2488, 0.0
          %3040 = vadd.xlane.f32.xlu0 %v3039
          %v3041 = vpop.xlane.xlu0 %3040
          %v3042 = vsel %vm2501, %v2489, 0.0
          %3043 = vadd.xlane.f32.xlu0 %v3042
          %v3044 = vpop.xlane.xlu0 %3043
          %v3045 = vsel %vm2501, %v2490, 0.0
          %3046 = vadd.xlane.f32.xlu0 %v3045
          %v3047 = vpop.xlane.xlu0 %3046
          %v3048 = vsel %vm2501, %v2491, 0.0
          %3049 = vadd.xlane.f32.xlu0 %v3048
          %v3050 = vpop.xlane.xlu0 %3049
          %v3051 = vsel %vm2501, %v2492, 0.0
          %3052 = vadd.xlane.f32.xlu0 %v3051
          %v3053 = vpop.xlane.xlu0 %3052
          %v3054 = vsel %vm2501, %v2493, 0.0
          %3055 = vadd.xlane.f32.xlu0 %v3054
          %v3056 = vpop.xlane.xlu0 %3055
          %v3057 = vsel %vm2501, %v2494, 0.0
          %3058 = vadd.xlane.f32.xlu0 %v3057
          %v3059 = vpop.xlane.xlu0 %3058
          %v3060 = vsel %vm2501, %v2495, 0.0
          %3061 = vadd.xlane.f32.xlu0 %v3060
          %v3062 = vpop.xlane.xlu0 %3061
          %v3063 = vsel %vm2501, %v2496, 0.0
          %3064 = vadd.xlane.f32.xlu0 %v3063
          %v3065 = vpop.xlane.xlu0 %3064
          %v3066 = vsel %vm2501, %v2497, 0.0
          %3067 = vadd.xlane.f32.xlu0 %v3066
          %v3068 = vpop.xlane.xlu0 %3067
          %v3069 = vsel %vm2501, %v2498, 0.0
          %3070 = vadd.xlane.f32.xlu0 %v3069
          %v3071 = vpop.xlane.xlu0 %3070
          %v3072 = vsel %vm2501, %v2499, 0.0
          %3073 = vadd.xlane.f32.xlu0 %v3072
          %v3074 = vpop.xlane.xlu0 %3073
          %v3075 = vsel %vm2501, %v2500, 0.0
          %3076 = vadd.xlane.f32.xlu0 %v3075
          %v3077 = vpop.xlane.xlu0 %3076
          %v3270 = vlaneseq
          %v3271 = vshrl.u32 %v3270, 7
          %v3272 = vsub.s32 %v292, %v3271
          %v3273 = vrot.slane %v2504, %v3272
          %v3274 = vadd.s32 %v292, 4294967288
          %v3275 = vlaneseq
          %v3276 = vshrl.u32 %v3275, 7
          %v3277 = vsub.s32 %v3274, %v3276
          %v3278 = vrot.slane %v2507, %v3277
          %vm3279 = vcmask 130112
          %v3280 = vsel %vm3279, %v3278, %v3273
          %v3281 = vadd.s32 %v292, 4294967280
          %v3282 = vlaneseq
          %v3283 = vshrl.u32 %v3282, 7
          %v3284 = vsub.s32 %v3281, %v3283
          %v3285 = vrot.slane %v2510, %v3284
          %vm3286 = vcmask 195712
          %v3287 = vsel %vm3286, %v3285, %v3280
          %v3288 = vadd.s32 %v292, 4294967272
          %v3289 = vlaneseq
          %v3290 = vshrl.u32 %v3289, 7
          %v3291 = vsub.s32 %v3288, %v3290
          %v3292 = vrot.slane %v2513, %v3291
          %vm3293 = vcmask 261312
          %v3294 = vsel %vm3293, %v3292, %v3287
          %v3295 = vadd.s32 %v292, 4294967264
          %v3296 = vlaneseq
          %v3297 = vshrl.u32 %v3296, 7
          %v3298 = vsub.s32 %v3295, %v3297
          %v3299 = vrot.slane %v2516, %v3298
          %vm3300 = vcmask 326912
          %v3301 = vsel %vm3300, %v3299, %v3294
          %v3302 = vadd.s32 %v292, 4294967256
          %v3303 = vlaneseq
          %v3304 = vshrl.u32 %v3303, 7
          %v3305 = vsub.s32 %v3302, %v3304
          %v3306 = vrot.slane %v2519, %v3305
          %vm3307 = vcmask 392512
          %v3308 = vsel %vm3307, %v3306, %v3301
          %v3309 = vadd.s32 %v292, 4294967248
          %v3310 = vlaneseq
          %v3311 = vshrl.u32 %v3310, 7
          %v3312 = vsub.s32 %v3309, %v3311
          %v3313 = vrot.slane %v2522, %v3312
          %vm3314 = vcmask 458112
          %v3315 = vsel %vm3314, %v3313, %v3308
          %v3316 = vadd.s32 %v292, 4294967240
          %v3317 = vlaneseq
          %v3318 = vshrl.u32 %v3317, 7
          %v3319 = vsub.s32 %v3316, %v3318
          %v3320 = vrot.slane %v2525, %v3319
          %vm3321 = vcmask 523712
          %v3322 = vsel %vm3321, %v3320, %v3315
          %v3323 = vadd.s32 %v292, 4294967232
          %v3324 = vlaneseq
          %v3325 = vshrl.u32 %v3324, 7
          %v3326 = vsub.s32 %v3323, %v3325
          %v3327 = vrot.slane %v2528, %v3326
          %vm3328 = vcmask 589312
          %v3329 = vsel %vm3328, %v3327, %v3322
          %v3330 = vadd.s32 %v292, 4294967224
          %v3331 = vlaneseq
          %v3332 = vshrl.u32 %v3331, 7
          %v3333 = vsub.s32 %v3330, %v3332
          %v3334 = vrot.slane %v2531, %v3333
          %vm3335 = vcmask 654912
          %v3336 = vsel %vm3335, %v3334, %v3329
          %v3337 = vadd.s32 %v292, 4294967216
          %v3338 = vlaneseq
          %v3339 = vshrl.u32 %v3338, 7
          %v3340 = vsub.s32 %v3337, %v3339
          %v3341 = vrot.slane %v2534, %v3340
          %vm3342 = vcmask 720512
          %v3343 = vsel %vm3342, %v3341, %v3336
          %v3344 = vadd.s32 %v292, 4294967208
          %v3345 = vlaneseq
          %v3346 = vshrl.u32 %v3345, 7
          %v3347 = vsub.s32 %v3344, %v3346
          %v3348 = vrot.slane %v2537, %v3347
          %vm3349 = vcmask 786112
          %v3350 = vsel %vm3349, %v3348, %v3343
          %v3351 = vadd.s32 %v292, 4294967200
          %v3352 = vlaneseq
          %v3353 = vshrl.u32 %v3352, 7
          %v3354 = vsub.s32 %v3351, %v3353
          %v3355 = vrot.slane %v2540, %v3354
          %vm3356 = vcmask 851712
          %v3357 = vsel %vm3356, %v3355, %v3350
          %v3358 = vadd.s32 %v292, 4294967192
          %v3359 = vlaneseq
          %v3360 = vshrl.u32 %v3359, 7
          %v3361 = vsub.s32 %v3358, %v3360
          %v3362 = vrot.slane %v2543, %v3361
          %vm3363 = vcmask 917312
          %v3364 = vsel %vm3363, %v3362, %v3357
          %v3365 = vadd.s32 %v292, 4294967184
          %v3366 = vlaneseq
          %v3367 = vshrl.u32 %v3366, 7
          %v3368 = vsub.s32 %v3365, %v3367
          %v3369 = vrot.slane %v2546, %v3368
          %vm3370 = vcmask 982912
          %v3371 = vsel %vm3370, %v3369, %v3364
          %v3372 = vadd.s32 %v292, 4294967176
          %v3373 = vlaneseq
          %v3374 = vshrl.u32 %v3373, 7
          %v3375 = vsub.s32 %v3372, %v3374
          %v3376 = vrot.slane %v2549, %v3375
          %vm3377 = vcmask 1048512
          %v3378 = vsel %vm3377, %v3376, %v3371
          %v3379 = vlaneseq
          %v3380 = vshrl.u32 %v3379, 7
          %v3381 = vsub.s32 %v292, %v3380
          %v3382 = vrot.slane %v2552, %v3381
          %v3383 = vlaneseq
          %v3384 = vshrl.u32 %v3383, 7
          %v3385 = vsub.s32 %v3274, %v3384
          %v3386 = vrot.slane %v2555, %v3385
          %v3387 = vsel %vm3279, %v3386, %v3382
          %v3388 = vlaneseq
          %v3389 = vshrl.u32 %v3388, 7
          %v3390 = vsub.s32 %v3281, %v3389
          %v3391 = vrot.slane %v2558, %v3390
          %v3392 = vsel %vm3286, %v3391, %v3387
          %v3393 = vlaneseq
          %v3394 = vshrl.u32 %v3393, 7
          %v3395 = vsub.s32 %v3288, %v3394
          %v3396 = vrot.slane %v2561, %v3395
          %v3397 = vsel %vm3293, %v3396, %v3392
          %v3398 = vlaneseq
          %v3399 = vshrl.u32 %v3398, 7
          %v3400 = vsub.s32 %v3295, %v3399
          %v3401 = vrot.slane %v2564, %v3400
          %v3402 = vsel %vm3300, %v3401, %v3397
          %v3403 = vlaneseq
          %v3404 = vshrl.u32 %v3403, 7
          %v3405 = vsub.s32 %v3302, %v3404
          %v3406 = vrot.slane %v2567, %v3405
          %v3407 = vsel %vm3307, %v3406, %v3402
          %v3408 = vlaneseq
          %v3409 = vshrl.u32 %v3408, 7
          %v3410 = vsub.s32 %v3309, %v3409
          %v3411 = vrot.slane %v2570, %v3410
          %v3412 = vsel %vm3314, %v3411, %v3407
          %v3413 = vlaneseq
          %v3414 = vshrl.u32 %v3413, 7
          %v3415 = vsub.s32 %v3316, %v3414
          %v3416 = vrot.slane %v2573, %v3415
          %v3417 = vsel %vm3321, %v3416, %v3412
          %v3418 = vlaneseq
          %v3419 = vshrl.u32 %v3418, 7
          %v3420 = vsub.s32 %v292, %v3419
          %v3421 = vrot.slane %v2576, %v3420
          %v3422 = vlaneseq
          %v3423 = vshrl.u32 %v3422, 7
          %v3424 = vsub.s32 %v3274, %v3423
          %v3425 = vrot.slane %v2579, %v3424
          %v3426 = vsel %vm3279, %v3425, %v3421
          %v3427 = vlaneseq
          %v3428 = vshrl.u32 %v3427, 7
          %v3429 = vsub.s32 %v3281, %v3428
          %v3430 = vrot.slane %v2582, %v3429
          %v3431 = vsel %vm3286, %v3430, %v3426
          %v3432 = vlaneseq
          %v3433 = vshrl.u32 %v3432, 7
          %v3434 = vsub.s32 %v3288, %v3433
          %v3435 = vrot.slane %v2585, %v3434
          %v3436 = vsel %vm3293, %v3435, %v3431
          %v3437 = vlaneseq
          %v3438 = vshrl.u32 %v3437, 7
          %v3439 = vsub.s32 %v3295, %v3438
          %v3440 = vrot.slane %v2588, %v3439
          %v3441 = vsel %vm3300, %v3440, %v3436
          %v3442 = vlaneseq
          %v3443 = vshrl.u32 %v3442, 7
          %v3444 = vsub.s32 %v3302, %v3443
          %v3445 = vrot.slane %v2591, %v3444
          %v3446 = vsel %vm3307, %v3445, %v3441
          %v3447 = vlaneseq
          %v3448 = vshrl.u32 %v3447, 7
          %v3449 = vsub.s32 %v3309, %v3448
          %v3450 = vrot.slane %v2594, %v3449
          %v3451 = vsel %vm3314, %v3450, %v3446
          %v3452 = vlaneseq
          %v3453 = vshrl.u32 %v3452, 7
          %v3454 = vsub.s32 %v3316, %v3453
          %v3455 = vrot.slane %v2597, %v3454
          %v3456 = vsel %vm3321, %v3455, %v3451
          %v3457 = vlaneseq
          %v3458 = vshrl.u32 %v3457, 7
          %v3459 = vsub.s32 %v3323, %v3458
          %v3460 = vrot.slane %v2600, %v3459
          %v3461 = vsel %vm3328, %v3460, %v3456
          %v3462 = vlaneseq
          %v3463 = vshrl.u32 %v3462, 7
          %v3464 = vsub.s32 %v3330, %v3463
          %v3465 = vrot.slane %v2603, %v3464
          %v3466 = vsel %vm3335, %v3465, %v3461
          %v3467 = vlaneseq
          %v3468 = vshrl.u32 %v3467, 7
          %v3469 = vsub.s32 %v3337, %v3468
          %v3470 = vrot.slane %v2606, %v3469
          %v3471 = vsel %vm3342, %v3470, %v3466
          %v3472 = vlaneseq
          %v3473 = vshrl.u32 %v3472, 7
          %v3474 = vsub.s32 %v3344, %v3473
          %v3475 = vrot.slane %v2609, %v3474
          %v3476 = vsel %vm3349, %v3475, %v3471
          %v3477 = vlaneseq
          %v3478 = vshrl.u32 %v3477, 7
          %v3479 = vsub.s32 %v3351, %v3478
          %v3480 = vrot.slane %v2612, %v3479
          %v3481 = vsel %vm3356, %v3480, %v3476
          %v3482 = vlaneseq
          %v3483 = vshrl.u32 %v3482, 7
          %v3484 = vsub.s32 %v3358, %v3483
          %v3485 = vrot.slane %v2615, %v3484
          %v3486 = vsel %vm3363, %v3485, %v3481
          %v3487 = vlaneseq
          %v3488 = vshrl.u32 %v3487, 7
          %v3489 = vsub.s32 %v3365, %v3488
          %v3490 = vrot.slane %v2618, %v3489
          %v3491 = vsel %vm3370, %v3490, %v3486
          %v3492 = vlaneseq
          %v3493 = vshrl.u32 %v3492, 7
          %v3494 = vsub.s32 %v3372, %v3493
          %v3495 = vrot.slane %v2621, %v3494
          %v3496 = vsel %vm3377, %v3495, %v3491
          %v3497 = vlaneseq
          %v3498 = vshrl.u32 %v3497, 7
          %v3499 = vsub.s32 %v292, %v3498
          %v3500 = vrot.slane %v2624, %v3499
          %v3501 = vlaneseq
          %v3502 = vshrl.u32 %v3501, 7
          %v3503 = vsub.s32 %v3274, %v3502
          %v3504 = vrot.slane %v2627, %v3503
          %v3505 = vsel %vm3279, %v3504, %v3500
          %v3506 = vlaneseq
          %v3507 = vshrl.u32 %v3506, 7
          %v3508 = vsub.s32 %v3281, %v3507
          %v3509 = vrot.slane %v2630, %v3508
          %v3510 = vsel %vm3286, %v3509, %v3505
          %v3511 = vlaneseq
          %v3512 = vshrl.u32 %v3511, 7
          %v3513 = vsub.s32 %v3288, %v3512
          %v3514 = vrot.slane %v2633, %v3513
          %v3515 = vsel %vm3293, %v3514, %v3510
          %v3516 = vlaneseq
          %v3517 = vshrl.u32 %v3516, 7
          %v3518 = vsub.s32 %v3295, %v3517
          %v3519 = vrot.slane %v2636, %v3518
          %v3520 = vsel %vm3300, %v3519, %v3515
          %v3521 = vlaneseq
          %v3522 = vshrl.u32 %v3521, 7
          %v3523 = vsub.s32 %v3302, %v3522
          %v3524 = vrot.slane %v2639, %v3523
          %v3525 = vsel %vm3307, %v3524, %v3520
          %v3526 = vlaneseq
          %v3527 = vshrl.u32 %v3526, 7
          %v3528 = vsub.s32 %v3309, %v3527
          %v3529 = vrot.slane %v2642, %v3528
          %v3530 = vsel %vm3314, %v3529, %v3525
          %v3531 = vlaneseq
          %v3532 = vshrl.u32 %v3531, 7
          %v3533 = vsub.s32 %v3316, %v3532
          %v3534 = vrot.slane %v2645, %v3533
          %v3535 = vsel %vm3321, %v3534, %v3530
          %v3536 = vlaneseq
          %v3537 = vshrl.u32 %v3536, 7
          %v3538 = vsub.s32 %v292, %v3537
          %v3539 = vrot.slane %v2648, %v3538
          %v3540 = vlaneseq
          %v3541 = vshrl.u32 %v3540, 7
          %v3542 = vsub.s32 %v3274, %v3541
          %v3543 = vrot.slane %v2651, %v3542
          %v3544 = vsel %vm3279, %v3543, %v3539
          %v3545 = vlaneseq
          %v3546 = vshrl.u32 %v3545, 7
          %v3547 = vsub.s32 %v3281, %v3546
          %v3548 = vrot.slane %v2654, %v3547
          %v3549 = vsel %vm3286, %v3548, %v3544
          %v3550 = vlaneseq
          %v3551 = vshrl.u32 %v3550, 7
          %v3552 = vsub.s32 %v3288, %v3551
          %v3553 = vrot.slane %v2657, %v3552
          %v3554 = vsel %vm3293, %v3553, %v3549
          %v3555 = vlaneseq
          %v3556 = vshrl.u32 %v3555, 7
          %v3557 = vsub.s32 %v3295, %v3556
          %v3558 = vrot.slane %v2660, %v3557
          %v3559 = vsel %vm3300, %v3558, %v3554
          %v3560 = vlaneseq
          %v3561 = vshrl.u32 %v3560, 7
          %v3562 = vsub.s32 %v3302, %v3561
          %v3563 = vrot.slane %v2663, %v3562
          %v3564 = vsel %vm3307, %v3563, %v3559
          %v3565 = vlaneseq
          %v3566 = vshrl.u32 %v3565, 7
          %v3567 = vsub.s32 %v3309, %v3566
          %v3568 = vrot.slane %v2666, %v3567
          %v3569 = vsel %vm3314, %v3568, %v3564
          %v3570 = vlaneseq
          %v3571 = vshrl.u32 %v3570, 7
          %v3572 = vsub.s32 %v3316, %v3571
          %v3573 = vrot.slane %v2669, %v3572
          %v3574 = vsel %vm3321, %v3573, %v3569
          %v3575 = vlaneseq
          %v3576 = vshrl.u32 %v3575, 7
          %v3577 = vsub.s32 %v3323, %v3576
          %v3578 = vrot.slane %v2672, %v3577
          %v3579 = vsel %vm3328, %v3578, %v3574
          %v3580 = vlaneseq
          %v3581 = vshrl.u32 %v3580, 7
          %v3582 = vsub.s32 %v3330, %v3581
          %v3583 = vrot.slane %v2675, %v3582
          %v3584 = vsel %vm3335, %v3583, %v3579
          %v3585 = vlaneseq
          %v3586 = vshrl.u32 %v3585, 7
          %v3587 = vsub.s32 %v3337, %v3586
          %v3588 = vrot.slane %v2678, %v3587
          %v3589 = vsel %vm3342, %v3588, %v3584
          %v3590 = vlaneseq
          %v3591 = vshrl.u32 %v3590, 7
          %v3592 = vsub.s32 %v3344, %v3591
          %v3593 = vrot.slane %v2681, %v3592
          %v3594 = vsel %vm3349, %v3593, %v3589
          %v3595 = vlaneseq
          %v3596 = vshrl.u32 %v3595, 7
          %v3597 = vsub.s32 %v3351, %v3596
          %v3598 = vrot.slane %v2684, %v3597
          %v3599 = vsel %vm3356, %v3598, %v3594
          %v3600 = vlaneseq
          %v3601 = vshrl.u32 %v3600, 7
          %v3602 = vsub.s32 %v3358, %v3601
          %v3603 = vrot.slane %v2687, %v3602
          %v3604 = vsel %vm3363, %v3603, %v3599
          %v3605 = vlaneseq
          %v3606 = vshrl.u32 %v3605, 7
          %v3607 = vsub.s32 %v3365, %v3606
          %v3608 = vrot.slane %v2690, %v3607
          %v3609 = vsel %vm3370, %v3608, %v3604
          %v3610 = vlaneseq
          %v3611 = vshrl.u32 %v3610, 7
          %v3612 = vsub.s32 %v3372, %v3611
          %v3613 = vrot.slane %v2693, %v3612
          %v3614 = vsel %vm3377, %v3613, %v3609
          %v3615 = vlaneseq
          %v3616 = vshrl.u32 %v3615, 7
          %v3617 = vsub.s32 %v292, %v3616
          %v3618 = vrot.slane %v2696, %v3617
          %v3619 = vlaneseq
          %v3620 = vshrl.u32 %v3619, 7
          %v3621 = vsub.s32 %v3274, %v3620
          %v3622 = vrot.slane %v2699, %v3621
          %v3623 = vsel %vm3279, %v3622, %v3618
          %v3624 = vlaneseq
          %v3625 = vshrl.u32 %v3624, 7
          %v3626 = vsub.s32 %v3281, %v3625
          %v3627 = vrot.slane %v2702, %v3626
          %v3628 = vsel %vm3286, %v3627, %v3623
          %v3629 = vlaneseq
          %v3630 = vshrl.u32 %v3629, 7
          %v3631 = vsub.s32 %v3288, %v3630
          %v3632 = vrot.slane %v2705, %v3631
          %v3633 = vsel %vm3293, %v3632, %v3628
          %v3634 = vlaneseq
          %v3635 = vshrl.u32 %v3634, 7
          %v3636 = vsub.s32 %v3295, %v3635
          %v3637 = vrot.slane %v2708, %v3636
          %v3638 = vsel %vm3300, %v3637, %v3633
          %v3639 = vlaneseq
          %v3640 = vshrl.u32 %v3639, 7
          %v3641 = vsub.s32 %v3302, %v3640
          %v3642 = vrot.slane %v2711, %v3641
          %v3643 = vsel %vm3307, %v3642, %v3638
          %v3644 = vlaneseq
          %v3645 = vshrl.u32 %v3644, 7
          %v3646 = vsub.s32 %v3309, %v3645
          %v3647 = vrot.slane %v2714, %v3646
          %v3648 = vsel %vm3314, %v3647, %v3643
          %v3649 = vlaneseq
          %v3650 = vshrl.u32 %v3649, 7
          %v3651 = vsub.s32 %v3316, %v3650
          %v3652 = vrot.slane %v2717, %v3651
          %v3653 = vsel %vm3321, %v3652, %v3648
          %v3654 = vlaneseq
          %v3655 = vshrl.u32 %v3654, 7
          %v3656 = vsub.s32 %v292, %v3655
          %v3657 = vrot.slane %v2720, %v3656
          %v3658 = vlaneseq
          %v3659 = vshrl.u32 %v3658, 7
          %v3660 = vsub.s32 %v3274, %v3659
          %v3661 = vrot.slane %v2723, %v3660
          %v3662 = vsel %vm3279, %v3661, %v3657
          %v3663 = vlaneseq
          %v3664 = vshrl.u32 %v3663, 7
          %v3665 = vsub.s32 %v3281, %v3664
          %v3666 = vrot.slane %v2726, %v3665
          %v3667 = vsel %vm3286, %v3666, %v3662
          %v3668 = vlaneseq
          %v3669 = vshrl.u32 %v3668, 7
          %v3670 = vsub.s32 %v3288, %v3669
          %v3671 = vrot.slane %v2729, %v3670
          %v3672 = vsel %vm3293, %v3671, %v3667
          %v3673 = vlaneseq
          %v3674 = vshrl.u32 %v3673, 7
          %v3675 = vsub.s32 %v3295, %v3674
          %v3676 = vrot.slane %v2732, %v3675
          %v3677 = vsel %vm3300, %v3676, %v3672
          %v3678 = vlaneseq
          %v3679 = vshrl.u32 %v3678, 7
          %v3680 = vsub.s32 %v3302, %v3679
          %v3681 = vrot.slane %v2735, %v3680
          %v3682 = vsel %vm3307, %v3681, %v3677
          %v3683 = vlaneseq
          %v3684 = vshrl.u32 %v3683, 7
          %v3685 = vsub.s32 %v3309, %v3684
          %v3686 = vrot.slane %v2738, %v3685
          %v3687 = vsel %vm3314, %v3686, %v3682
          %v3688 = vlaneseq
          %v3689 = vshrl.u32 %v3688, 7
          %v3690 = vsub.s32 %v3316, %v3689
          %v3691 = vrot.slane %v2741, %v3690
          %v3692 = vsel %vm3321, %v3691, %v3687
          %v3693 = vlaneseq
          %v3694 = vshrl.u32 %v3693, 7
          %v3695 = vsub.s32 %v3323, %v3694
          %v3696 = vrot.slane %v2744, %v3695
          %v3697 = vsel %vm3328, %v3696, %v3692
          %v3698 = vlaneseq
          %v3699 = vshrl.u32 %v3698, 7
          %v3700 = vsub.s32 %v3330, %v3699
          %v3701 = vrot.slane %v2747, %v3700
          %v3702 = vsel %vm3335, %v3701, %v3697
          %v3703 = vlaneseq
          %v3704 = vshrl.u32 %v3703, 7
          %v3705 = vsub.s32 %v3337, %v3704
          %v3706 = vrot.slane %v2750, %v3705
          %v3707 = vsel %vm3342, %v3706, %v3702
          %v3708 = vlaneseq
          %v3709 = vshrl.u32 %v3708, 7
          %v3710 = vsub.s32 %v3344, %v3709
          %v3711 = vrot.slane %v2753, %v3710
          %v3712 = vsel %vm3349, %v3711, %v3707
          %v3713 = vlaneseq
          %v3714 = vshrl.u32 %v3713, 7
          %v3715 = vsub.s32 %v3351, %v3714
          %v3716 = vrot.slane %v2756, %v3715
          %v3717 = vsel %vm3356, %v3716, %v3712
          %v3718 = vlaneseq
          %v3719 = vshrl.u32 %v3718, 7
          %v3720 = vsub.s32 %v3358, %v3719
          %v3721 = vrot.slane %v2759, %v3720
          %v3722 = vsel %vm3363, %v3721, %v3717
          %v3723 = vlaneseq
          %v3724 = vshrl.u32 %v3723, 7
          %v3725 = vsub.s32 %v3365, %v3724
          %v3726 = vrot.slane %v2762, %v3725
          %v3727 = vsel %vm3370, %v3726, %v3722
          %v3728 = vlaneseq
          %v3729 = vshrl.u32 %v3728, 7
          %v3730 = vsub.s32 %v3372, %v3729
          %v3731 = vrot.slane %v2765, %v3730
          %v3732 = vsel %vm3377, %v3731, %v3727
          %v3733 = vlaneseq
          %v3734 = vshrl.u32 %v3733, 7
          %v3735 = vsub.s32 %v292, %v3734
          %v3736 = vrot.slane %v2768, %v3735
          %v3737 = vlaneseq
          %v3738 = vshrl.u32 %v3737, 7
          %v3739 = vsub.s32 %v3274, %v3738
          %v3740 = vrot.slane %v2771, %v3739
          %v3741 = vsel %vm3279, %v3740, %v3736
          %v3742 = vlaneseq
          %v3743 = vshrl.u32 %v3742, 7
          %v3744 = vsub.s32 %v3281, %v3743
          %v3745 = vrot.slane %v2774, %v3744
          %v3746 = vsel %vm3286, %v3745, %v3741
          %v3747 = vlaneseq
          %v3748 = vshrl.u32 %v3747, 7
          %v3749 = vsub.s32 %v3288, %v3748
          %v3750 = vrot.slane %v2777, %v3749
          %v3751 = vsel %vm3293, %v3750, %v3746
          %v3752 = vlaneseq
          %v3753 = vshrl.u32 %v3752, 7
          %v3754 = vsub.s32 %v3295, %v3753
          %v3755 = vrot.slane %v2780, %v3754
          %v3756 = vsel %vm3300, %v3755, %v3751
          %v3757 = vlaneseq
          %v3758 = vshrl.u32 %v3757, 7
          %v3759 = vsub.s32 %v3302, %v3758
          %v3760 = vrot.slane %v2783, %v3759
          %v3761 = vsel %vm3307, %v3760, %v3756
          %v3762 = vlaneseq
          %v3763 = vshrl.u32 %v3762, 7
          %v3764 = vsub.s32 %v3309, %v3763
          %v3765 = vrot.slane %v2786, %v3764
          %v3766 = vsel %vm3314, %v3765, %v3761
          %v3767 = vlaneseq
          %v3768 = vshrl.u32 %v3767, 7
          %v3769 = vsub.s32 %v3316, %v3768
          %v3770 = vrot.slane %v2789, %v3769
          %v3771 = vsel %vm3321, %v3770, %v3766
          %v3772 = vlaneseq
          %v3773 = vshrl.u32 %v3772, 7
          %v3774 = vsub.s32 %v292, %v3773
          %v3775 = vrot.slane %v2792, %v3774
          %v3776 = vlaneseq
          %v3777 = vshrl.u32 %v3776, 7
          %v3778 = vsub.s32 %v3274, %v3777
          %v3779 = vrot.slane %v2795, %v3778
          %v3780 = vsel %vm3279, %v3779, %v3775
          %v3781 = vlaneseq
          %v3782 = vshrl.u32 %v3781, 7
          %v3783 = vsub.s32 %v3281, %v3782
          %v3784 = vrot.slane %v2798, %v3783
          %v3785 = vsel %vm3286, %v3784, %v3780
          %v3786 = vlaneseq
          %v3787 = vshrl.u32 %v3786, 7
          %v3788 = vsub.s32 %v3288, %v3787
          %v3789 = vrot.slane %v2801, %v3788
          %v3790 = vsel %vm3293, %v3789, %v3785
          %v3791 = vlaneseq
          %v3792 = vshrl.u32 %v3791, 7
          %v3793 = vsub.s32 %v3295, %v3792
          %v3794 = vrot.slane %v2804, %v3793
          %v3795 = vsel %vm3300, %v3794, %v3790
          %v3796 = vlaneseq
          %v3797 = vshrl.u32 %v3796, 7
          %v3798 = vsub.s32 %v3302, %v3797
          %v3799 = vrot.slane %v2807, %v3798
          %v3800 = vsel %vm3307, %v3799, %v3795
          %v3801 = vlaneseq
          %v3802 = vshrl.u32 %v3801, 7
          %v3803 = vsub.s32 %v3309, %v3802
          %v3804 = vrot.slane %v2810, %v3803
          %v3805 = vsel %vm3314, %v3804, %v3800
          %v3806 = vlaneseq
          %v3807 = vshrl.u32 %v3806, 7
          %v3808 = vsub.s32 %v3316, %v3807
          %v3809 = vrot.slane %v2813, %v3808
          %v3810 = vsel %vm3321, %v3809, %v3805
          %v3811 = vlaneseq
          %v3812 = vshrl.u32 %v3811, 7
          %v3813 = vsub.s32 %v3323, %v3812
          %v3814 = vrot.slane %v2816, %v3813
          %v3815 = vsel %vm3328, %v3814, %v3810
          %v3816 = vlaneseq
          %v3817 = vshrl.u32 %v3816, 7
          %v3818 = vsub.s32 %v3330, %v3817
          %v3819 = vrot.slane %v2819, %v3818
          %v3820 = vsel %vm3335, %v3819, %v3815
          %v3821 = vlaneseq
          %v3822 = vshrl.u32 %v3821, 7
          %v3823 = vsub.s32 %v3337, %v3822
          %v3824 = vrot.slane %v2822, %v3823
          %v3825 = vsel %vm3342, %v3824, %v3820
          %v3826 = vlaneseq
          %v3827 = vshrl.u32 %v3826, 7
          %v3828 = vsub.s32 %v3344, %v3827
          %v3829 = vrot.slane %v2825, %v3828
          %v3830 = vsel %vm3349, %v3829, %v3825
          %v3831 = vlaneseq
          %v3832 = vshrl.u32 %v3831, 7
          %v3833 = vsub.s32 %v3351, %v3832
          %v3834 = vrot.slane %v2828, %v3833
          %v3835 = vsel %vm3356, %v3834, %v3830
          %v3836 = vlaneseq
          %v3837 = vshrl.u32 %v3836, 7
          %v3838 = vsub.s32 %v3358, %v3837
          %v3839 = vrot.slane %v2831, %v3838
          %v3840 = vsel %vm3363, %v3839, %v3835
          %v3841 = vlaneseq
          %v3842 = vshrl.u32 %v3841, 7
          %v3843 = vsub.s32 %v3365, %v3842
          %v3844 = vrot.slane %v2834, %v3843
          %v3845 = vsel %vm3370, %v3844, %v3840
          %v3846 = vlaneseq
          %v3847 = vshrl.u32 %v3846, 7
          %v3848 = vsub.s32 %v3372, %v3847
          %v3849 = vrot.slane %v2837, %v3848
          %v3850 = vsel %vm3377, %v3849, %v3845
          %v3851 = vlaneseq
          %v3852 = vshrl.u32 %v3851, 7
          %v3853 = vsub.s32 %v292, %v3852
          %v3854 = vrot.slane %v2840, %v3853
          %v3855 = vlaneseq
          %v3856 = vshrl.u32 %v3855, 7
          %v3857 = vsub.s32 %v3274, %v3856
          %v3858 = vrot.slane %v2843, %v3857
          %v3859 = vsel %vm3279, %v3858, %v3854
          %v3860 = vlaneseq
          %v3861 = vshrl.u32 %v3860, 7
          %v3862 = vsub.s32 %v3281, %v3861
          %v3863 = vrot.slane %v2846, %v3862
          %v3864 = vsel %vm3286, %v3863, %v3859
          %v3865 = vlaneseq
          %v3866 = vshrl.u32 %v3865, 7
          %v3867 = vsub.s32 %v3288, %v3866
          %v3868 = vrot.slane %v2849, %v3867
          %v3869 = vsel %vm3293, %v3868, %v3864
          %v3870 = vlaneseq
          %v3871 = vshrl.u32 %v3870, 7
          %v3872 = vsub.s32 %v3295, %v3871
          %v3873 = vrot.slane %v2852, %v3872
          %v3874 = vsel %vm3300, %v3873, %v3869
          %v3875 = vlaneseq
          %v3876 = vshrl.u32 %v3875, 7
          %v3877 = vsub.s32 %v3302, %v3876
          %v3878 = vrot.slane %v2855, %v3877
          %v3879 = vsel %vm3307, %v3878, %v3874
          %v3880 = vlaneseq
          %v3881 = vshrl.u32 %v3880, 7
          %v3882 = vsub.s32 %v3309, %v3881
          %v3883 = vrot.slane %v2858, %v3882
          %v3884 = vsel %vm3314, %v3883, %v3879
          %v3885 = vlaneseq
          %v3886 = vshrl.u32 %v3885, 7
          %v3887 = vsub.s32 %v3316, %v3886
          %v3888 = vrot.slane %v2861, %v3887
          %v3889 = vsel %vm3321, %v3888, %v3884
          %v3890 = vlaneseq
          %v3891 = vshrl.u32 %v3890, 7
          %v3892 = vsub.s32 %v292, %v3891
          %v3893 = vrot.slane %v2864, %v3892
          %v3894 = vlaneseq
          %v3895 = vshrl.u32 %v3894, 7
          %v3896 = vsub.s32 %v3274, %v3895
          %v3897 = vrot.slane %v2867, %v3896
          %v3898 = vsel %vm3279, %v3897, %v3893
          %v3899 = vlaneseq
          %v3900 = vshrl.u32 %v3899, 7
          %v3901 = vsub.s32 %v3281, %v3900
          %v3902 = vrot.slane %v2870, %v3901
          %v3903 = vsel %vm3286, %v3902, %v3898
          %v3904 = vlaneseq
          %v3905 = vshrl.u32 %v3904, 7
          %v3906 = vsub.s32 %v3288, %v3905
          %v3907 = vrot.slane %v2873, %v3906
          %v3908 = vsel %vm3293, %v3907, %v3903
          %v3909 = vlaneseq
          %v3910 = vshrl.u32 %v3909, 7
          %v3911 = vsub.s32 %v3295, %v3910
          %v3912 = vrot.slane %v2876, %v3911
          %v3913 = vsel %vm3300, %v3912, %v3908
          %v3914 = vlaneseq
          %v3915 = vshrl.u32 %v3914, 7
          %v3916 = vsub.s32 %v3302, %v3915
          %v3917 = vrot.slane %v2879, %v3916
          %v3918 = vsel %vm3307, %v3917, %v3913
          %v3919 = vlaneseq
          %v3920 = vshrl.u32 %v3919, 7
          %v3921 = vsub.s32 %v3309, %v3920
          %v3922 = vrot.slane %v2882, %v3921
          %v3923 = vsel %vm3314, %v3922, %v3918
          %v3924 = vlaneseq
          %v3925 = vshrl.u32 %v3924, 7
          %v3926 = vsub.s32 %v3316, %v3925
          %v3927 = vrot.slane %v2885, %v3926
          %v3928 = vsel %vm3321, %v3927, %v3923
          %v3929 = vlaneseq
          %v3930 = vshrl.u32 %v3929, 7
          %v3931 = vsub.s32 %v3323, %v3930
          %v3932 = vrot.slane %v2888, %v3931
          %v3933 = vsel %vm3328, %v3932, %v3928
          %v3934 = vlaneseq
          %v3935 = vshrl.u32 %v3934, 7
          %v3936 = vsub.s32 %v3330, %v3935
          %v3937 = vrot.slane %v2891, %v3936
          %v3938 = vsel %vm3335, %v3937, %v3933
          %v3939 = vlaneseq
          %v3940 = vshrl.u32 %v3939, 7
          %v3941 = vsub.s32 %v3337, %v3940
          %v3942 = vrot.slane %v2894, %v3941
          %v3943 = vsel %vm3342, %v3942, %v3938
          %v3944 = vlaneseq
          %v3945 = vshrl.u32 %v3944, 7
          %v3946 = vsub.s32 %v3344, %v3945
          %v3947 = vrot.slane %v2897, %v3946
          %v3948 = vsel %vm3349, %v3947, %v3943
          %v3949 = vlaneseq
          %v3950 = vshrl.u32 %v3949, 7
          %v3951 = vsub.s32 %v3351, %v3950
          %v3952 = vrot.slane %v2900, %v3951
          %v3953 = vsel %vm3356, %v3952, %v3948
          %v3954 = vlaneseq
          %v3955 = vshrl.u32 %v3954, 7
          %v3956 = vsub.s32 %v3358, %v3955
          %v3957 = vrot.slane %v2903, %v3956
          %v3958 = vsel %vm3363, %v3957, %v3953
          %v3959 = vlaneseq
          %v3960 = vshrl.u32 %v3959, 7
          %v3961 = vsub.s32 %v3365, %v3960
          %v3962 = vrot.slane %v2906, %v3961
          %v3963 = vsel %vm3370, %v3962, %v3958
          %v3964 = vlaneseq
          %v3965 = vshrl.u32 %v3964, 7
          %v3966 = vsub.s32 %v3372, %v3965
          %v3967 = vrot.slane %v2909, %v3966
          %v3968 = vsel %vm3377, %v3967, %v3963
          %v3969 = vlaneseq
          %v3970 = vshrl.u32 %v3969, 7
          %v3971 = vsub.s32 %v292, %v3970
          %v3972 = vrot.slane %v2912, %v3971
          %v3973 = vlaneseq
          %v3974 = vshrl.u32 %v3973, 7
          %v3975 = vsub.s32 %v3274, %v3974
          %v3976 = vrot.slane %v2915, %v3975
          %v3977 = vsel %vm3279, %v3976, %v3972
          %v3978 = vlaneseq
          %v3979 = vshrl.u32 %v3978, 7
          %v3980 = vsub.s32 %v3281, %v3979
          %v3981 = vrot.slane %v2918, %v3980
          %v3982 = vsel %vm3286, %v3981, %v3977
          %v3983 = vlaneseq
          %v3984 = vshrl.u32 %v3983, 7
          %v3985 = vsub.s32 %v3288, %v3984
          %v3986 = vrot.slane %v2921, %v3985
          %v3987 = vsel %vm3293, %v3986, %v3982
          %v3988 = vlaneseq
          %v3989 = vshrl.u32 %v3988, 7
          %v3990 = vsub.s32 %v3295, %v3989
          %v3991 = vrot.slane %v2924, %v3990
          %v3992 = vsel %vm3300, %v3991, %v3987
          %v3993 = vlaneseq
          %v3994 = vshrl.u32 %v3993, 7
          %v3995 = vsub.s32 %v3302, %v3994
          %v3996 = vrot.slane %v2927, %v3995
          %v3997 = vsel %vm3307, %v3996, %v3992
          %v3998 = vlaneseq
          %v3999 = vshrl.u32 %v3998, 7
          %v4000 = vsub.s32 %v3309, %v3999
          %v4001 = vrot.slane %v2930, %v4000
          %v4002 = vsel %vm3314, %v4001, %v3997
          %v4003 = vlaneseq
          %v4004 = vshrl.u32 %v4003, 7
          %v4005 = vsub.s32 %v3316, %v4004
          %v4006 = vrot.slane %v2933, %v4005
          %v4007 = vsel %vm3321, %v4006, %v4002
          %v4008 = vlaneseq
          %v4009 = vshrl.u32 %v4008, 7
          %v4010 = vsub.s32 %v292, %v4009
          %v4011 = vrot.slane %v2936, %v4010
          %v4012 = vlaneseq
          %v4013 = vshrl.u32 %v4012, 7
          %v4014 = vsub.s32 %v3274, %v4013
          %v4015 = vrot.slane %v2939, %v4014
          %v4016 = vsel %vm3279, %v4015, %v4011
          %v4017 = vlaneseq
          %v4018 = vshrl.u32 %v4017, 7
          %v4019 = vsub.s32 %v3281, %v4018
          %v4020 = vrot.slane %v2942, %v4019
          %v4021 = vsel %vm3286, %v4020, %v4016
          %v4022 = vlaneseq
          %v4023 = vshrl.u32 %v4022, 7
          %v4024 = vsub.s32 %v3288, %v4023
          %v4025 = vrot.slane %v2945, %v4024
          %v4026 = vsel %vm3293, %v4025, %v4021
          %v4027 = vlaneseq
          %v4028 = vshrl.u32 %v4027, 7
          %v4029 = vsub.s32 %v3295, %v4028
          %v4030 = vrot.slane %v2948, %v4029
          %v4031 = vsel %vm3300, %v4030, %v4026
          %v4032 = vlaneseq
          %v4033 = vshrl.u32 %v4032, 7
          %v4034 = vsub.s32 %v3302, %v4033
          %v4035 = vrot.slane %v2951, %v4034
          %v4036 = vsel %vm3307, %v4035, %v4031
          %v4037 = vlaneseq
          %v4038 = vshrl.u32 %v4037, 7
          %v4039 = vsub.s32 %v3309, %v4038
          %v4040 = vrot.slane %v2954, %v4039
          %v4041 = vsel %vm3314, %v4040, %v4036
          %v4042 = vlaneseq
          %v4043 = vshrl.u32 %v4042, 7
          %v4044 = vsub.s32 %v3316, %v4043
          %v4045 = vrot.slane %v2957, %v4044
          %v4046 = vsel %vm3321, %v4045, %v4041
          %v4047 = vlaneseq
          %v4048 = vshrl.u32 %v4047, 7
          %v4049 = vsub.s32 %v3323, %v4048
          %v4050 = vrot.slane %v2960, %v4049
          %v4051 = vsel %vm3328, %v4050, %v4046
          %v4052 = vlaneseq
          %v4053 = vshrl.u32 %v4052, 7
          %v4054 = vsub.s32 %v3330, %v4053
          %v4055 = vrot.slane %v2963, %v4054
          %v4056 = vsel %vm3335, %v4055, %v4051
          %v4057 = vlaneseq
          %v4058 = vshrl.u32 %v4057, 7
          %v4059 = vsub.s32 %v3337, %v4058
          %v4060 = vrot.slane %v2966, %v4059
          %v4061 = vsel %vm3342, %v4060, %v4056
          %v4062 = vlaneseq
          %v4063 = vshrl.u32 %v4062, 7
          %v4064 = vsub.s32 %v3344, %v4063
          %v4065 = vrot.slane %v2969, %v4064
          %v4066 = vsel %vm3349, %v4065, %v4061
          %v4067 = vlaneseq
          %v4068 = vshrl.u32 %v4067, 7
          %v4069 = vsub.s32 %v3351, %v4068
          %v4070 = vrot.slane %v2972, %v4069
          %v4071 = vsel %vm3356, %v4070, %v4066
          %v4072 = vlaneseq
          %v4073 = vshrl.u32 %v4072, 7
          %v4074 = vsub.s32 %v3358, %v4073
          %v4075 = vrot.slane %v2975, %v4074
          %v4076 = vsel %vm3363, %v4075, %v4071
          %v4077 = vlaneseq
          %v4078 = vshrl.u32 %v4077, 7
          %v4079 = vsub.s32 %v3365, %v4078
          %v4080 = vrot.slane %v2978, %v4079
          %v4081 = vsel %vm3370, %v4080, %v4076
          %v4082 = vlaneseq
          %v4083 = vshrl.u32 %v4082, 7
          %v4084 = vsub.s32 %v3372, %v4083
          %v4085 = vrot.slane %v2981, %v4084
          %v4086 = vsel %vm3377, %v4085, %v4081
          %v4087 = vlaneseq
          %v4088 = vshrl.u32 %v4087, 7
          %v4089 = vsub.s32 %v292, %v4088
          %v4090 = vrot.slane %v2984, %v4089
          %v4091 = vlaneseq
          %v4092 = vshrl.u32 %v4091, 7
          %v4093 = vsub.s32 %v3274, %v4092
          %v4094 = vrot.slane %v2987, %v4093
          %v4095 = vsel %vm3279, %v4094, %v4090
          %v4096 = vlaneseq
          %v4097 = vshrl.u32 %v4096, 7
          %v4098 = vsub.s32 %v3281, %v4097
          %v4099 = vrot.slane %v2990, %v4098
          %v4100 = vsel %vm3286, %v4099, %v4095
          %v4101 = vlaneseq
          %v4102 = vshrl.u32 %v4101, 7
          %v4103 = vsub.s32 %v3288, %v4102
          %v4104 = vrot.slane %v2993, %v4103
          %v4105 = vsel %vm3293, %v4104, %v4100
          %v4106 = vlaneseq
          %v4107 = vshrl.u32 %v4106, 7
          %v4108 = vsub.s32 %v3295, %v4107
          %v4109 = vrot.slane %v2996, %v4108
          %v4110 = vsel %vm3300, %v4109, %v4105
          %v4111 = vlaneseq
          %v4112 = vshrl.u32 %v4111, 7
          %v4113 = vsub.s32 %v3302, %v4112
          %v4114 = vrot.slane %v2999, %v4113
          %v4115 = vsel %vm3307, %v4114, %v4110
          %v4116 = vlaneseq
          %v4117 = vshrl.u32 %v4116, 7
          %v4118 = vsub.s32 %v3309, %v4117
          %v4119 = vrot.slane %v3002, %v4118
          %v4120 = vsel %vm3314, %v4119, %v4115
          %v4121 = vlaneseq
          %v4122 = vshrl.u32 %v4121, 7
          %v4123 = vsub.s32 %v3316, %v4122
          %v4124 = vrot.slane %v3005, %v4123
          %v4125 = vsel %vm3321, %v4124, %v4120
          %v4126 = vlaneseq
          %v4127 = vshrl.u32 %v4126, 7
          %v4128 = vsub.s32 %v292, %v4127
          %v4129 = vrot.slane %v3008, %v4128
          %v4130 = vlaneseq
          %v4131 = vshrl.u32 %v4130, 7
          %v4132 = vsub.s32 %v3274, %v4131
          %v4133 = vrot.slane %v3011, %v4132
          %v4134 = vsel %vm3279, %v4133, %v4129
          %v4135 = vlaneseq
          %v4136 = vshrl.u32 %v4135, 7
          %v4137 = vsub.s32 %v3281, %v4136
          %v4138 = vrot.slane %v3014, %v4137
          %v4139 = vsel %vm3286, %v4138, %v4134
          %v4140 = vlaneseq
          %v4141 = vshrl.u32 %v4140, 7
          %v4142 = vsub.s32 %v3288, %v4141
          %v4143 = vrot.slane %v3017, %v4142
          %v4144 = vsel %vm3293, %v4143, %v4139
          %v4145 = vlaneseq
          %v4146 = vshrl.u32 %v4145, 7
          %v4147 = vsub.s32 %v3295, %v4146
          %v4148 = vrot.slane %v3020, %v4147
          %v4149 = vsel %vm3300, %v4148, %v4144
          %v4150 = vlaneseq
          %v4151 = vshrl.u32 %v4150, 7
          %v4152 = vsub.s32 %v3302, %v4151
          %v4153 = vrot.slane %v3023, %v4152
          %v4154 = vsel %vm3307, %v4153, %v4149
          %v4155 = vlaneseq
          %v4156 = vshrl.u32 %v4155, 7
          %v4157 = vsub.s32 %v3309, %v4156
          %v4158 = vrot.slane %v3026, %v4157
          %v4159 = vsel %vm3314, %v4158, %v4154
          %v4160 = vlaneseq
          %v4161 = vshrl.u32 %v4160, 7
          %v4162 = vsub.s32 %v3316, %v4161
          %v4163 = vrot.slane %v3029, %v4162
          %v4164 = vsel %vm3321, %v4163, %v4159
          %v4165 = vlaneseq
          %v4166 = vshrl.u32 %v4165, 7
          %v4167 = vsub.s32 %v3323, %v4166
          %v4168 = vrot.slane %v3032, %v4167
          %v4169 = vsel %vm3328, %v4168, %v4164
          %v4170 = vlaneseq
          %v4171 = vshrl.u32 %v4170, 7
          %v4172 = vsub.s32 %v3330, %v4171
          %v4173 = vrot.slane %v3035, %v4172
          %v4174 = vsel %vm3335, %v4173, %v4169
          %v4175 = vlaneseq
          %v4176 = vshrl.u32 %v4175, 7
          %v4177 = vsub.s32 %v3337, %v4176
          %v4178 = vrot.slane %v3038, %v4177
          %v4179 = vsel %vm3342, %v4178, %v4174
          %v4180 = vlaneseq
          %v4181 = vshrl.u32 %v4180, 7
          %v4182 = vsub.s32 %v3344, %v4181
          %v4183 = vrot.slane %v3041, %v4182
          %v4184 = vsel %vm3349, %v4183, %v4179
          %v4185 = vlaneseq
          %v4186 = vshrl.u32 %v4185, 7
          %v4187 = vsub.s32 %v3351, %v4186
          %v4188 = vrot.slane %v3044, %v4187
          %v4189 = vsel %vm3356, %v4188, %v4184
          %v4190 = vlaneseq
          %v4191 = vshrl.u32 %v4190, 7
          %v4192 = vsub.s32 %v3358, %v4191
          %v4193 = vrot.slane %v3047, %v4192
          %v4194 = vsel %vm3363, %v4193, %v4189
          %v4195 = vlaneseq
          %v4196 = vshrl.u32 %v4195, 7
          %v4197 = vsub.s32 %v3365, %v4196
          %v4198 = vrot.slane %v3050, %v4197
          %v4199 = vsel %vm3370, %v4198, %v4194
          %v4200 = vlaneseq
          %v4201 = vshrl.u32 %v4200, 7
          %v4202 = vsub.s32 %v3372, %v4201
          %v4203 = vrot.slane %v3053, %v4202
          %v4204 = vsel %vm3377, %v4203, %v4199
          %v4205 = vlaneseq
          %v4206 = vshrl.u32 %v4205, 7
          %v4207 = vsub.s32 %v292, %v4206
          %v4208 = vrot.slane %v3056, %v4207
          %v4209 = vlaneseq
          %v4210 = vshrl.u32 %v4209, 7
          %v4211 = vsub.s32 %v3274, %v4210
          %v4212 = vrot.slane %v3059, %v4211
          %v4213 = vsel %vm3279, %v4212, %v4208
          %v4214 = vlaneseq
          %v4215 = vshrl.u32 %v4214, 7
          %v4216 = vsub.s32 %v3281, %v4215
          %v4217 = vrot.slane %v3062, %v4216
          %v4218 = vsel %vm3286, %v4217, %v4213
          %v4219 = vlaneseq
          %v4220 = vshrl.u32 %v4219, 7
          %v4221 = vsub.s32 %v3288, %v4220
          %v4222 = vrot.slane %v3065, %v4221
          %v4223 = vsel %vm3293, %v4222, %v4218
          %v4224 = vlaneseq
          %v4225 = vshrl.u32 %v4224, 7
          %v4226 = vsub.s32 %v3295, %v4225
          %v4227 = vrot.slane %v3068, %v4226
          %v4228 = vsel %vm3300, %v4227, %v4223
          %v4229 = vlaneseq
          %v4230 = vshrl.u32 %v4229, 7
          %v4231 = vsub.s32 %v3302, %v4230
          %v4232 = vrot.slane %v3071, %v4231
          %v4233 = vsel %vm3307, %v4232, %v4228
          %v4234 = vlaneseq
          %v4235 = vshrl.u32 %v4234, 7
          %v4236 = vsub.s32 %v3309, %v4235
          %v4237 = vrot.slane %v3074, %v4236
          %v4238 = vsel %vm3314, %v4237, %v4233
          %v4239 = vlaneseq
          %v4240 = vshrl.u32 %v4239, 7
          %v4241 = vsub.s32 %v3316, %v4240
          %v4242 = vrot.slane %v3077, %v4241
          %v4243 = vsel %vm3321, %v4242, %v4238
          %vm4244 = vcmask 1041409
          %v4245 = vsel %vm4244, %v3496, %v3378
          %vm4246 = vcmask 1042434
          %v4247 = vsel %vm4246, %v3614, %v4245
          %vm4248 = vcmask 1043459
          %v4249 = vsel %vm4248, %v3732, %v4247
          %vm4250 = vcmask 1044484
          %v4251 = vsel %vm4250, %v3850, %v4249
          %vm4252 = vcmask 1045509
          %v4253 = vsel %vm4252, %v3968, %v4251
          %vm4254 = vcmask 1046534
          %v4255 = vsel %vm4254, %v4086, %v4253
          %vm4256 = vcmask 1047559
          %v4257 = vsel %vm4256, %v4204, %v4255
          %v4258 = vsel %vm4244, %v3535, %v3417
          %v4259 = vsel %vm4246, %v3653, %v4258
          %v4260 = vsel %vm4248, %v3771, %v4259
          %v4261 = vsel %vm4250, %v3889, %v4260
          %v4262 = vsel %vm4252, %v4007, %v4261
          %v4263 = vsel %vm4254, %v4125, %v4262
          %v4264 = vsel %vm4256, %v4243, %v4263
          %s4267 = smul.addr %s342, 8
          %s4268 = scalar_lea.vmem [#allocation2], %s4267
          %4269 = vst [vmem:[%s4268] sm:$0xff] %v4257
          %vm4270 = vcmask 523264
          %4271 = vst.msk [vmem:[%s4268 + $0x8] sm:$0xff] %vm4270, %v4264
        $region41: #{tpu_custom_call.1} parent=27 // loop_footer
          %s338 = sadd.s32 1, %s334
        $region42: #{tpu_custom_call.1} parent=27 // loop_footer_branch
          %333 = sbr.rel target = $region38
        $region43: #{tpu_custom_call.1} parent=27 // loop_exit
          _
        %v4272 = vld [vmem:[#allocation2] sm:$0xff]
        %v4273 = vld [vmem:[#allocation2 + $0x8] sm:$0xff]
        %v4274 = vld [vmem:[#allocation2 + $0x10] sm:$0xff]
        %v4275 = vld [vmem:[#allocation2 + $0x18] sm:$0xff]
        %v4276 = vld [vmem:[#allocation2 + $0x20] sm:$0xff]
        %v4277 = vld [vmem:[#allocation2 + $0x28] sm:$0xff]
        %v4278 = vld [vmem:[#allocation2 + $0x30] sm:$0xff]
        %v4279 = vld [vmem:[#allocation2 + $0x38] sm:$0xff]
        %v4280 = vld [vmem:[#allocation2 + $0x40] sm:$0xff]
        %v4281 = vld [vmem:[#allocation2 + $0x48] sm:$0xff]
        %v4282 = vld [vmem:[#allocation2 + $0x50] sm:$0xff]
        %v4283 = vld [vmem:[#allocation2 + $0x58] sm:$0xff]
        %v4284 = vadd.s32 %v292, 128
        %vm4285 = vcmp.lt.s32.totalorder %v292, 192
        %vm4286 = vcmp.lt.s32.totalorder %v4284, 192
        %vm4299 = vcmp.ge.s32.totalorder %v4272, 0
        %vm4300 = vcmp.ge.s32.totalorder %v4273, 0
        %vm4301 = vcmp.ge.s32.totalorder %v4274, 0
        %vm4302 = vcmp.ge.s32.totalorder %v4275, 0
        %vm4303 = vcmp.ge.s32.totalorder %v4276, 0
        %vm4304 = vcmp.ge.s32.totalorder %v4277, 0
        %vm4305 = vcmp.ge.s32.totalorder %v4278, 0
        %vm4306 = vcmp.ge.s32.totalorder %v4279, 0
        %vm4307 = vcmp.ge.s32.totalorder %v4280, 0
        %vm4308 = vcmp.ge.s32.totalorder %v4281, 0
        %vm4309 = vcmp.ge.s32.totalorder %v4282, 0
        %vm4310 = vcmp.ge.s32.totalorder %v4283, 0
        %v4311 = vxor.u32 %v4272, 2147483647
        %v4312 = vxor.u32 %v4273, 2147483647
        %v4313 = vxor.u32 %v4274, 2147483647
        %v4314 = vxor.u32 %v4275, 2147483647
        %v4315 = vxor.u32 %v4276, 2147483647
        %v4316 = vxor.u32 %v4277, 2147483647
        %v4317 = vxor.u32 %v4278, 2147483647
        %v4318 = vxor.u32 %v4279, 2147483647
        %v4319 = vxor.u32 %v4280, 2147483647
        %v4320 = vxor.u32 %v4281, 2147483647
        %v4321 = vxor.u32 %v4282, 2147483647
        %v4322 = vxor.u32 %v4283, 2147483647
        %v4323 = vsel %vm4299, %v4272, %v4311
        %v4324 = vsel %vm4300, %v4273, %v4312
        %v4325 = vsel %vm4301, %v4274, %v4313
        %v4326 = vsel %vm4302, %v4275, %v4314
        %v4327 = vsel %vm4303, %v4276, %v4315
        %v4328 = vsel %vm4304, %v4277, %v4316
        %v4329 = vsel %vm4305, %v4278, %v4317
        %v4330 = vsel %vm4306, %v4279, %v4318
        %v4331 = vsel %vm4307, %v4280, %v4319
        %v4332 = vsel %vm4308, %v4281, %v4320
        %v4333 = vsel %vm4309, %v4282, %v4321
        %v4334 = vsel %vm4310, %v4283, %v4322
        %v4335 = vand.u32 %v4323, 4294967040
        %v4336 = vand.u32 %v4324, 4294967040
        %v4337 = vand.u32 %v4325, 4294967040
        %v4338 = vand.u32 %v4326, 4294967040
        %v4339 = vand.u32 %v4327, 4294967040
        %v4340 = vand.u32 %v4328, 4294967040
        %v4341 = vand.u32 %v4329, 4294967040
        %v4342 = vand.u32 %v4330, 4294967040
        %v4343 = vand.u32 %v4331, 4294967040
        %v4344 = vand.u32 %v4332, 4294967040
        %v4345 = vand.u32 %v4333, 4294967040
        %v4346 = vand.u32 %v4334, 4294967040
        %v4347 = vsub.s32 255, %v292
        %v4348 = vsub.s32 255, %v4284
        %v4349 = vor.u32 %v4335, %v4347
        %v4350 = vor.u32 %v4336, %v4348
        %v4351 = vor.u32 %v4337, %v4347
        %v4352 = vor.u32 %v4338, %v4348
        %v4353 = vor.u32 %v4339, %v4347
        %v4354 = vor.u32 %v4340, %v4348
        %v4355 = vor.u32 %v4341, %v4347
        %v4356 = vor.u32 %v4342, %v4348
        %v4357 = vor.u32 %v4343, %v4347
        %v4358 = vor.u32 %v4344, %v4348
        %v4359 = vor.u32 %v4345, %v4347
        %v4360 = vor.u32 %v4346, %v4348
        %v4361 = vsel %vm4285, %v4349, 2147483648
        %v4362 = vsel %vm4286, %v4350, 2147483648
        %v4363 = vsel %vm4285, %v4351, 2147483648
        %v4364 = vsel %vm4286, %v4352, 2147483648
        %v4365 = vsel %vm4285, %v4353, 2147483648
        %v4366 = vsel %vm4286, %v4354, 2147483648
        %v4367 = vsel %vm4285, %v4355, 2147483648
        %v4368 = vsel %vm4286, %v4356, 2147483648
        %v4369 = vsel %vm4285, %v4357, 2147483648
        %v4370 = vsel %vm4286, %v4358, 2147483648
        %v4371 = vsel %vm4285, %v4359, 2147483648
        %v4372 = vsel %vm4286, %v4360, 2147483648
        %v4373 = vsel %vm4285, %v4272, -inf
        %v4374 = vsel %vm4286, %v4273, -inf
        %v4375 = vsel %vm4285, %v4274, -inf
        %v4376 = vsel %vm4286, %v4275, -inf
        %v4377 = vsel %vm4285, %v4276, -inf
        %v4378 = vsel %vm4286, %v4277, -inf
        %v4379 = vsel %vm4285, %v4278, -inf
        %v4380 = vsel %vm4286, %v4279, -inf
        %v4381 = vsel %vm4285, %v4280, -inf
        %v4382 = vsel %vm4286, %v4281, -inf
        %v4383 = vsel %vm4285, %v4282, -inf
        %v4384 = vsel %vm4286, %v4283, -inf
        %vm4385 = vcmask 523264
        %v4386 = vsel %vm4385, %v4362, 2147483648
        %vm4387 = vcmp.gt.s32.totalorder %v4361, %v4386
        %v4388 = vsel %vm4387, %v4361, %v4386
        %v4389 = vand.u32 %v4388, 65535
        %v4390 = vshra.s32 %v4388, 16
        %v4391 = vcvt.s32.f32 %v4389
        %v4392 = vcvt.s32.f32 %v4390
        %4393 = vmax.xlane.f32.xlu0 %v4392
        %v4394 = vpop.xlane.xlu0 %4393
        %vm4395 = vcmp.eq.f32.partialorder %v4392, %v4394
        %v4396 = vsel %vm4395, %v4391, -inf
        %4397 = vmax.xlane.f32.xlu0 %v4396
        %v4398 = vpop.xlane.xlu0 %4397
        %v4399 = vcvt.f32.s32 %v4398
        %v4400 = vcvt.f32.s32 %v4394
        %v4401 = vshll.u32 %v4400, 16
        %v4402 = vadd.s32 %v4401, %v4399
        %v4403 = vsel %vm4385, %v4364, 2147483648
        %vm4404 = vcmp.gt.s32.totalorder %v4363, %v4403
        %v4405 = vsel %vm4404, %v4363, %v4403
        %v4406 = vand.u32 %v4405, 65535
        %v4407 = vshra.s32 %v4405, 16
        %v4408 = vcvt.s32.f32 %v4406
        %v4409 = vcvt.s32.f32 %v4407
        %4410 = vmax.xlane.f32.xlu0 %v4409
        %v4411 = vpop.xlane.xlu0 %4410
        %vm4412 = vcmp.eq.f32.partialorder %v4409, %v4411
        %v4413 = vsel %vm4412, %v4408, -inf
        %4414 = vmax.xlane.f32.xlu0 %v4413
        %v4415 = vpop.xlane.xlu0 %4414
        %v4416 = vcvt.f32.s32 %v4415
        %v4417 = vcvt.f32.s32 %v4411
        %v4418 = vshll.u32 %v4417, 16
        %v4419 = vadd.s32 %v4418, %v4416
        %v4420 = vsel %vm4385, %v4366, 2147483648
        %vm4421 = vcmp.gt.s32.totalorder %v4365, %v4420
        %v4422 = vsel %vm4421, %v4365, %v4420
        %v4423 = vand.u32 %v4422, 65535
        %v4424 = vshra.s32 %v4422, 16
        %v4425 = vcvt.s32.f32 %v4423
        %v4426 = vcvt.s32.f32 %v4424
        %4427 = vmax.xlane.f32.xlu0 %v4426
        %v4428 = vpop.xlane.xlu0 %4427
        %vm4429 = vcmp.eq.f32.partialorder %v4426, %v4428
        %v4430 = vsel %vm4429, %v4425, -inf
        %4431 = vmax.xlane.f32.xlu0 %v4430
        %v4432 = vpop.xlane.xlu0 %4431
        %v4433 = vcvt.f32.s32 %v4432
        %v4434 = vcvt.f32.s32 %v4428
        %v4435 = vshll.u32 %v4434, 16
        %v4436 = vadd.s32 %v4435, %v4433
        %v4437 = vsel %vm4385, %v4368, 2147483648
        %vm4438 = vcmp.gt.s32.totalorder %v4367, %v4437
        %v4439 = vsel %vm4438, %v4367, %v4437
        %v4440 = vand.u32 %v4439, 65535
        %v4441 = vshra.s32 %v4439, 16
        %v4442 = vcvt.s32.f32 %v4440
        %v4443 = vcvt.s32.f32 %v4441
        %4444 = vmax.xlane.f32.xlu0 %v4443
        %v4445 = vpop.xlane.xlu0 %4444
        %vm4446 = vcmp.eq.f32.partialorder %v4443, %v4445
        %v4447 = vsel %vm4446, %v4442, -inf
        %4448 = vmax.xlane.f32.xlu0 %v4447
        %v4449 = vpop.xlane.xlu0 %4448
        %v4450 = vcvt.f32.s32 %v4449
        %v4451 = vcvt.f32.s32 %v4445
        %v4452 = vshll.u32 %v4451, 16
        %v4453 = vadd.s32 %v4452, %v4450
        %v4454 = vsel %vm4385, %v4370, 2147483648
        %vm4455 = vcmp.gt.s32.totalorder %v4369, %v4454
        %v4456 = vsel %vm4455, %v4369, %v4454
        %v4457 = vand.u32 %v4456, 65535
        %v4458 = vshra.s32 %v4456, 16
        %v4459 = vcvt.s32.f32 %v4457
        %v4460 = vcvt.s32.f32 %v4458
        %4461 = vmax.xlane.f32.xlu0 %v4460
        %v4462 = vpop.xlane.xlu0 %4461
        %vm4463 = vcmp.eq.f32.partialorder %v4460, %v4462
        %v4464 = vsel %vm4463, %v4459, -inf
        %4465 = vmax.xlane.f32.xlu0 %v4464
        %v4466 = vpop.xlane.xlu0 %4465
        %v4467 = vcvt.f32.s32 %v4466
        %v4468 = vcvt.f32.s32 %v4462
        %v4469 = vshll.u32 %v4468, 16
        %v4470 = vadd.s32 %v4469, %v4467
        %v4471 = vsel %vm4385, %v4372, 2147483648
        %vm4472 = vcmp.gt.s32.totalorder %v4371, %v4471
        %v4473 = vsel %vm4472, %v4371, %v4471
        %v4474 = vand.u32 %v4473, 65535
        %v4475 = vshra.s32 %v4473, 16
        %v4476 = vcvt.s32.f32 %v4474
        %v4477 = vcvt.s32.f32 %v4475
        %4478 = vmax.xlane.f32.xlu0 %v4477
        %v4479 = vpop.xlane.xlu0 %4478
        %vm4480 = vcmp.eq.f32.partialorder %v4477, %v4479
        %v4481 = vsel %vm4480, %v4476, -inf
        %4482 = vmax.xlane.f32.xlu0 %v4481
        %v4483 = vpop.xlane.xlu0 %4482
        %v4484 = vcvt.f32.s32 %v4483
        %v4485 = vcvt.f32.s32 %v4479
        %v4486 = vshll.u32 %v4485, 16
        %v4487 = vadd.s32 %v4486, %v4484
        %v4488 = vand.u32 %v4402, 255
        %v4489 = vand.u32 %v4419, 255
        %v4490 = vand.u32 %v4436, 255
        %v4491 = vand.u32 %v4453, 255
        %v4492 = vand.u32 %v4470, 255
        %v4493 = vand.u32 %v4487, 255
        %v4494 = vsub.s32 255, %v4488
        %v4495 = vsub.s32 255, %v4489
        %v4496 = vsub.s32 255, %v4490
        %v4497 = vsub.s32 255, %v4491
        %v4498 = vsub.s32 255, %v4492
        %v4499 = vsub.s32 255, %v4493
        %vm4500 = vcmp.eq.s32.totalorder %v292, %v4494
        %vm4501 = vcmp.eq.s32.totalorder %v4284, %v4494
        %vm4502 = vcmp.eq.s32.totalorder %v292, %v4495
        %vm4503 = vcmp.eq.s32.totalorder %v4284, %v4495
        %vm4504 = vcmp.eq.s32.totalorder %v292, %v4496
        %vm4505 = vcmp.eq.s32.totalorder %v4284, %v4496
        %vm4506 = vcmp.eq.s32.totalorder %v292, %v4497
        %vm4507 = vcmp.eq.s32.totalorder %v4284, %v4497
        %vm4508 = vcmp.eq.s32.totalorder %v292, %v4498
        %vm4509 = vcmp.eq.s32.totalorder %v4284, %v4498
        %vm4510 = vcmp.eq.s32.totalorder %v292, %v4499
        %vm4511 = vcmp.eq.s32.totalorder %v4284, %v4499
        %v4512 = vsel %vm4500, %v4373, -inf
        %v4513 = vsel %vm4501, %v4374, -inf
        %v4514 = vsel %vm4502, %v4375, -inf
        %v4515 = vsel %vm4503, %v4376, -inf
        %v4516 = vsel %vm4504, %v4377, -inf
        %v4517 = vsel %vm4505, %v4378, -inf
        %v4518 = vsel %vm4506, %v4379, -inf
        %v4519 = vsel %vm4507, %v4380, -inf
        %v4520 = vsel %vm4508, %v4381, -inf
        %v4521 = vsel %vm4509, %v4382, -inf
        %v4522 = vsel %vm4510, %v4383, -inf
        %v4523 = vsel %vm4511, %v4384, -inf
        %v4524 = vsel %vm4385, %v4513, -inf
        %v4525 = vmax.f32 %v4512, %v4524
        %4526 = vmax.xlane.f32.xlu0 %v4525
        %v4527 = vpop.xlane.xlu0 %4526
        %v4528 = vsel %vm4385, %v4515, -inf
        %v4529 = vmax.f32 %v4514, %v4528
        %4530 = vmax.xlane.f32.xlu0 %v4529
        %v4531 = vpop.xlane.xlu0 %4530
        %v4532 = vsel %vm4385, %v4517, -inf
        %v4533 = vmax.f32 %v4516, %v4532
        %4534 = vmax.xlane.f32.xlu0 %v4533
        %v4535 = vpop.xlane.xlu0 %4534
        %v4536 = vsel %vm4385, %v4519, -inf
        %v4537 = vmax.f32 %v4518, %v4536
        %4538 = vmax.xlane.f32.xlu0 %v4537
        %v4539 = vpop.xlane.xlu0 %4538
        %v4540 = vsel %vm4385, %v4521, -inf
        %v4541 = vmax.f32 %v4520, %v4540
        %4542 = vmax.xlane.f32.xlu0 %v4541
        %v4543 = vpop.xlane.xlu0 %4542
        %v4544 = vsel %vm4385, %v4523, -inf
        %v4545 = vmax.f32 %v4522, %v4544
        %4546 = vmax.xlane.f32.xlu0 %v4545
        %v4547 = vpop.xlane.xlu0 %4546
        %v4548 = vsel %vm4500, 2147483648, %v4361
        %v4549 = vsel %vm4501, 2147483648, %v4362
        %v4550 = vsel %vm4502, 2147483648, %v4363
        %v4551 = vsel %vm4503, 2147483648, %v4364
        %v4552 = vsel %vm4504, 2147483648, %v4365
        %v4553 = vsel %vm4505, 2147483648, %v4366
        %v4554 = vsel %vm4506, 2147483648, %v4367
        %v4555 = vsel %vm4507, 2147483648, %v4368
        %v4556 = vsel %vm4508, 2147483648, %v4369
        %v4557 = vsel %vm4509, 2147483648, %v4370
        %v4558 = vsel %vm4510, 2147483648, %v4371
        %v4559 = vsel %vm4511, 2147483648, %v4372
        %v4560 = vsel %vm4385, %v4549, 2147483648
        %vm4561 = vcmp.gt.s32.totalorder %v4548, %v4560
        %v4562 = vsel %vm4561, %v4548, %v4560
        %v4563 = vand.u32 %v4562, 65535
        %v4564 = vshra.s32 %v4562, 16
        %v4565 = vcvt.s32.f32 %v4563
        %v4566 = vcvt.s32.f32 %v4564
        %4567 = vmax.xlane.f32.xlu0 %v4566
        %v4568 = vpop.xlane.xlu0 %4567
        %vm4569 = vcmp.eq.f32.partialorder %v4566, %v4568
        %v4570 = vsel %vm4569, %v4565, -inf
        %4571 = vmax.xlane.f32.xlu0 %v4570
        %v4572 = vpop.xlane.xlu0 %4571
        %v4573 = vcvt.f32.s32 %v4572
        %v4574 = vcvt.f32.s32 %v4568
        %v4575 = vshll.u32 %v4574, 16
        %v4576 = vadd.s32 %v4575, %v4573
        %v4577 = vsel %vm4385, %v4551, 2147483648
        %vm4578 = vcmp.gt.s32.totalorder %v4550, %v4577
        %v4579 = vsel %vm4578, %v4550, %v4577
        %v4580 = vand.u32 %v4579, 65535
        %v4581 = vshra.s32 %v4579, 16
        %v4582 = vcvt.s32.f32 %v4580
        %v4583 = vcvt.s32.f32 %v4581
        %4584 = vmax.xlane.f32.xlu0 %v4583
        %v4585 = vpop.xlane.xlu0 %4584
        %vm4586 = vcmp.eq.f32.partialorder %v4583, %v4585
        %v4587 = vsel %vm4586, %v4582, -inf
        %4588 = vmax.xlane.f32.xlu0 %v4587
        %v4589 = vpop.xlane.xlu0 %4588
        %v4590 = vcvt.f32.s32 %v4589
        %v4591 = vcvt.f32.s32 %v4585
        %v4592 = vshll.u32 %v4591, 16
        %v4593 = vadd.s32 %v4592, %v4590
        %v4594 = vsel %vm4385, %v4553, 2147483648
        %vm4595 = vcmp.gt.s32.totalorder %v4552, %v4594
        %v4596 = vsel %vm4595, %v4552, %v4594
        %v4597 = vand.u32 %v4596, 65535
        %v4598 = vshra.s32 %v4596, 16
        %v4599 = vcvt.s32.f32 %v4597
        %v4600 = vcvt.s32.f32 %v4598
        %4601 = vmax.xlane.f32.xlu0 %v4600
        %v4602 = vpop.xlane.xlu0 %4601
        %vm4603 = vcmp.eq.f32.partialorder %v4600, %v4602
        %v4604 = vsel %vm4603, %v4599, -inf
        %4605 = vmax.xlane.f32.xlu0 %v4604
        %v4606 = vpop.xlane.xlu0 %4605
        %v4607 = vcvt.f32.s32 %v4606
        %v4608 = vcvt.f32.s32 %v4602
        %v4609 = vshll.u32 %v4608, 16
        %v4610 = vadd.s32 %v4609, %v4607
        %v4611 = vsel %vm4385, %v4555, 2147483648
        %vm4612 = vcmp.gt.s32.totalorder %v4554, %v4611
        %v4613 = vsel %vm4612, %v4554, %v4611
        %v4614 = vand.u32 %v4613, 65535
        %v4615 = vshra.s32 %v4613, 16
        %v4616 = vcvt.s32.f32 %v4614
        %v4617 = vcvt.s32.f32 %v4615
        %4618 = vmax.xlane.f32.xlu0 %v4617
        %v4619 = vpop.xlane.xlu0 %4618
        %vm4620 = vcmp.eq.f32.partialorder %v4617, %v4619
        %v4621 = vsel %vm4620, %v4616, -inf
        %4622 = vmax.xlane.f32.xlu0 %v4621
        %v4623 = vpop.xlane.xlu0 %4622
        %v4624 = vcvt.f32.s32 %v4623
        %v4625 = vcvt.f32.s32 %v4619
        %v4626 = vshll.u32 %v4625, 16
        %v4627 = vadd.s32 %v4626, %v4624
        %v4628 = vsel %vm4385, %v4557, 2147483648
        %vm4629 = vcmp.gt.s32.totalorder %v4556, %v4628
        %v4630 = vsel %vm4629, %v4556, %v4628
        %v4631 = vand.u32 %v4630, 65535
        %v4632 = vshra.s32 %v4630, 16
        %v4633 = vcvt.s32.f32 %v4631
        %v4634 = vcvt.s32.f32 %v4632
        %4635 = vmax.xlane.f32.xlu0 %v4634
        %v4636 = vpop.xlane.xlu0 %4635
        %vm4637 = vcmp.eq.f32.partialorder %v4634, %v4636
        %v4638 = vsel %vm4637, %v4633, -inf
        %4639 = vmax.xlane.f32.xlu0 %v4638
        %v4640 = vpop.xlane.xlu0 %4639
        %v4641 = vcvt.f32.s32 %v4640
        %v4642 = vcvt.f32.s32 %v4636
        %v4643 = vshll.u32 %v4642, 16
        %v4644 = vadd.s32 %v4643, %v4641
        %v4645 = vsel %vm4385, %v4559, 2147483648
        %vm4646 = vcmp.gt.s32.totalorder %v4558, %v4645
        %v4647 = vsel %vm4646, %v4558, %v4645
        %v4648 = vand.u32 %v4647, 65535
        %v4649 = vshra.s32 %v4647, 16
        %v4650 = vcvt.s32.f32 %v4648
        %v4651 = vcvt.s32.f32 %v4649
        %4652 = vmax.xlane.f32.xlu0 %v4651
        %v4653 = vpop.xlane.xlu0 %4652
        %vm4654 = vcmp.eq.f32.partialorder %v4651, %v4653
        %v4655 = vsel %vm4654, %v4650, -inf
        %4656 = vmax.xlane.f32.xlu0 %v4655
        %v4657 = vpop.xlane.xlu0 %4656
        %v4658 = vcvt.f32.s32 %v4657
        %v4659 = vcvt.f32.s32 %v4653
        %v4660 = vshll.u32 %v4659, 16
        %v4661 = vadd.s32 %v4660, %v4658
        %v4662 = vand.u32 %v4576, 255
        %v4663 = vand.u32 %v4593, 255
        %v4664 = vand.u32 %v4610, 255
        %v4665 = vand.u32 %v4627, 255
        %v4666 = vand.u32 %v4644, 255
        %v4667 = vand.u32 %v4661, 255
        %v4668 = vsub.s32 255, %v4662
        %v4669 = vsub.s32 255, %v4663
        %v4670 = vsub.s32 255, %v4664
        %v4671 = vsub.s32 255, %v4665
        %v4672 = vsub.s32 255, %v4666
        %v4673 = vsub.s32 255, %v4667
        %vm4674 = vcmp.eq.s32.totalorder %v292, %v4668
        %vm4675 = vcmp.eq.s32.totalorder %v4284, %v4668
        %vm4676 = vcmp.eq.s32.totalorder %v292, %v4669
        %vm4677 = vcmp.eq.s32.totalorder %v4284, %v4669
        %vm4678 = vcmp.eq.s32.totalorder %v292, %v4670
        %vm4679 = vcmp.eq.s32.totalorder %v4284, %v4670
        %vm4680 = vcmp.eq.s32.totalorder %v292, %v4671
        %vm4681 = vcmp.eq.s32.totalorder %v4284, %v4671
        %vm4682 = vcmp.eq.s32.totalorder %v292, %v4672
        %vm4683 = vcmp.eq.s32.totalorder %v4284, %v4672
        %vm4684 = vcmp.eq.s32.totalorder %v292, %v4673
        %vm4685 = vcmp.eq.s32.totalorder %v4284, %v4673
        %v4686 = vsel %vm4674, %v4373, -inf
        %v4687 = vsel %vm4675, %v4374, -inf
        %v4688 = vsel %vm4676, %v4375, -inf
        %v4689 = vsel %vm4677, %v4376, -inf
        %v4690 = vsel %vm4678, %v4377, -inf
        %v4691 = vsel %vm4679, %v4378, -inf
        %v4692 = vsel %vm4680, %v4379, -inf
        %v4693 = vsel %vm4681, %v4380, -inf
        %v4694 = vsel %vm4682, %v4381, -inf
        %v4695 = vsel %vm4683, %v4382, -inf
        %v4696 = vsel %vm4684, %v4383, -inf
        %v4697 = vsel %vm4685, %v4384, -inf
        %v4698 = vsel %vm4385, %v4687, -inf
        %v4699 = vmax.f32 %v4686, %v4698
        %4700 = vmax.xlane.f32.xlu0 %v4699
        %v4701 = vpop.xlane.xlu0 %4700
        %v4702 = vsel %vm4385, %v4689, -inf
        %v4703 = vmax.f32 %v4688, %v4702
        %4704 = vmax.xlane.f32.xlu0 %v4703
        %v4705 = vpop.xlane.xlu0 %4704
        %v4706 = vsel %vm4385, %v4691, -inf
        %v4707 = vmax.f32 %v4690, %v4706
        %4708 = vmax.xlane.f32.xlu0 %v4707
        %v4709 = vpop.xlane.xlu0 %4708
        %v4710 = vsel %vm4385, %v4693, -inf
        %v4711 = vmax.f32 %v4692, %v4710
        %4712 = vmax.xlane.f32.xlu0 %v4711
        %v4713 = vpop.xlane.xlu0 %4712
        %v4714 = vsel %vm4385, %v4695, -inf
        %v4715 = vmax.f32 %v4694, %v4714
        %4716 = vmax.xlane.f32.xlu0 %v4715
        %v4717 = vpop.xlane.xlu0 %4716
        %v4718 = vsel %vm4385, %v4697, -inf
        %v4719 = vmax.f32 %v4696, %v4718
        %4720 = vmax.xlane.f32.xlu0 %v4719
        %v4721 = vpop.xlane.xlu0 %4720
        %v4722 = vsel %vm4674, 2147483648, %v4548
        %v4723 = vsel %vm4675, 2147483648, %v4549
        %v4724 = vsel %vm4676, 2147483648, %v4550
        %v4725 = vsel %vm4677, 2147483648, %v4551
        %v4726 = vsel %vm4678, 2147483648, %v4552
        %v4727 = vsel %vm4679, 2147483648, %v4553
        %v4728 = vsel %vm4680, 2147483648, %v4554
        %v4729 = vsel %vm4681, 2147483648, %v4555
        %v4730 = vsel %vm4682, 2147483648, %v4556
        %v4731 = vsel %vm4683, 2147483648, %v4557
        %v4732 = vsel %vm4684, 2147483648, %v4558
        %v4733 = vsel %vm4685, 2147483648, %v4559
        %v4734 = vsel %vm4385, %v4723, 2147483648
        %vm4735 = vcmp.gt.s32.totalorder %v4722, %v4734
        %v4736 = vsel %vm4735, %v4722, %v4734
        %v4737 = vand.u32 %v4736, 65535
        %v4738 = vshra.s32 %v4736, 16
        %v4739 = vcvt.s32.f32 %v4737
        %v4740 = vcvt.s32.f32 %v4738
        %4741 = vmax.xlane.f32.xlu0 %v4740
        %v4742 = vpop.xlane.xlu0 %4741
        %vm4743 = vcmp.eq.f32.partialorder %v4740, %v4742
        %v4744 = vsel %vm4743, %v4739, -inf
        %4745 = vmax.xlane.f32.xlu0 %v4744
        %v4746 = vpop.xlane.xlu0 %4745
        %v4747 = vcvt.f32.s32 %v4746
        %v4748 = vcvt.f32.s32 %v4742
        %v4749 = vshll.u32 %v4748, 16
        %v4750 = vadd.s32 %v4749, %v4747
        %v4751 = vsel %vm4385, %v4725, 2147483648
        %vm4752 = vcmp.gt.s32.totalorder %v4724, %v4751
        %v4753 = vsel %vm4752, %v4724, %v4751
        %v4754 = vand.u32 %v4753, 65535
        %v4755 = vshra.s32 %v4753, 16
        %v4756 = vcvt.s32.f32 %v4754
        %v4757 = vcvt.s32.f32 %v4755
        %4758 = vmax.xlane.f32.xlu0 %v4757
        %v4759 = vpop.xlane.xlu0 %4758
        %vm4760 = vcmp.eq.f32.partialorder %v4757, %v4759
        %v4761 = vsel %vm4760, %v4756, -inf
        %4762 = vmax.xlane.f32.xlu0 %v4761
        %v4763 = vpop.xlane.xlu0 %4762
        %v4764 = vcvt.f32.s32 %v4763
        %v4765 = vcvt.f32.s32 %v4759
        %v4766 = vshll.u32 %v4765, 16
        %v4767 = vadd.s32 %v4766, %v4764
        %v4768 = vsel %vm4385, %v4727, 2147483648
        %vm4769 = vcmp.gt.s32.totalorder %v4726, %v4768
        %v4770 = vsel %vm4769, %v4726, %v4768
        %v4771 = vand.u32 %v4770, 65535
        %v4772 = vshra.s32 %v4770, 16
        %v4773 = vcvt.s32.f32 %v4771
        %v4774 = vcvt.s32.f32 %v4772
        %4775 = vmax.xlane.f32.xlu0 %v4774
        %v4776 = vpop.xlane.xlu0 %4775
        %vm4777 = vcmp.eq.f32.partialorder %v4774, %v4776
        %v4778 = vsel %vm4777, %v4773, -inf
        %4779 = vmax.xlane.f32.xlu0 %v4778
        %v4780 = vpop.xlane.xlu0 %4779
        %v4781 = vcvt.f32.s32 %v4780
        %v4782 = vcvt.f32.s32 %v4776
        %v4783 = vshll.u32 %v4782, 16
        %v4784 = vadd.s32 %v4783, %v4781
        %v4785 = vsel %vm4385, %v4729, 2147483648
        %vm4786 = vcmp.gt.s32.totalorder %v4728, %v4785
        %v4787 = vsel %vm4786, %v4728, %v4785
        %v4788 = vand.u32 %v4787, 65535
        %v4789 = vshra.s32 %v4787, 16
        %v4790 = vcvt.s32.f32 %v4788
        %v4791 = vcvt.s32.f32 %v4789
        %4792 = vmax.xlane.f32.xlu0 %v4791
        %v4793 = vpop.xlane.xlu0 %4792
        %vm4794 = vcmp.eq.f32.partialorder %v4791, %v4793
        %v4795 = vsel %vm4794, %v4790, -inf
        %4796 = vmax.xlane.f32.xlu0 %v4795
        %v4797 = vpop.xlane.xlu0 %4796
        %v4798 = vcvt.f32.s32 %v4797
        %v4799 = vcvt.f32.s32 %v4793
        %v4800 = vshll.u32 %v4799, 16
        %v4801 = vadd.s32 %v4800, %v4798
        %v4802 = vsel %vm4385, %v4731, 2147483648
        %vm4803 = vcmp.gt.s32.totalorder %v4730, %v4802
        %v4804 = vsel %vm4803, %v4730, %v4802
        %v4805 = vand.u32 %v4804, 65535
        %v4806 = vshra.s32 %v4804, 16
        %v4807 = vcvt.s32.f32 %v4805
        %v4808 = vcvt.s32.f32 %v4806
        %4809 = vmax.xlane.f32.xlu0 %v4808
        %v4810 = vpop.xlane.xlu0 %4809
        %vm4811 = vcmp.eq.f32.partialorder %v4808, %v4810
        %v4812 = vsel %vm4811, %v4807, -inf
        %4813 = vmax.xlane.f32.xlu0 %v4812
        %v4814 = vpop.xlane.xlu0 %4813
        %v4815 = vcvt.f32.s32 %v4814
        %v4816 = vcvt.f32.s32 %v4810
        %v4817 = vshll.u32 %v4816, 16
        %v4818 = vadd.s32 %v4817, %v4815
        %v4819 = vsel %vm4385, %v4733, 2147483648
        %vm4820 = vcmp.gt.s32.totalorder %v4732, %v4819
        %v4821 = vsel %vm4820, %v4732, %v4819
        %v4822 = vand.u32 %v4821, 65535
        %v4823 = vshra.s32 %v4821, 16
        %v4824 = vcvt.s32.f32 %v4822
        %v4825 = vcvt.s32.f32 %v4823
        %4826 = vmax.xlane.f32.xlu0 %v4825
        %v4827 = vpop.xlane.xlu0 %4826
        %vm4828 = vcmp.eq.f32.partialorder %v4825, %v4827
        %v4829 = vsel %vm4828, %v4824, -inf
        %4830 = vmax.xlane.f32.xlu0 %v4829
        %v4831 = vpop.xlane.xlu0 %4830
        %v4832 = vcvt.f32.s32 %v4831
        %v4833 = vcvt.f32.s32 %v4827
        %v4834 = vshll.u32 %v4833, 16
        %v4835 = vadd.s32 %v4834, %v4832
        %v4836 = vand.u32 %v4750, 255
        %v4837 = vand.u32 %v4767, 255
        %v4838 = vand.u32 %v4784, 255
        %v4839 = vand.u32 %v4801, 255
        %v4840 = vand.u32 %v4818, 255
        %v4841 = vand.u32 %v4835, 255
        %v4842 = vsub.s32 255, %v4836
        %v4843 = vsub.s32 255, %v4837
        %v4844 = vsub.s32 255, %v4838
        %v4845 = vsub.s32 255, %v4839
        %v4846 = vsub.s32 255, %v4840
        %v4847 = vsub.s32 255, %v4841
        %vm4848 = vcmp.eq.s32.totalorder %v292, %v4842
        %vm4849 = vcmp.eq.s32.totalorder %v4284, %v4842
        %vm4850 = vcmp.eq.s32.totalorder %v292, %v4843
        %vm4851 = vcmp.eq.s32.totalorder %v4284, %v4843
        %vm4852 = vcmp.eq.s32.totalorder %v292, %v4844
        %vm4853 = vcmp.eq.s32.totalorder %v4284, %v4844
        %vm4854 = vcmp.eq.s32.totalorder %v292, %v4845
        %vm4855 = vcmp.eq.s32.totalorder %v4284, %v4845
        %vm4856 = vcmp.eq.s32.totalorder %v292, %v4846
        %vm4857 = vcmp.eq.s32.totalorder %v4284, %v4846
        %vm4858 = vcmp.eq.s32.totalorder %v292, %v4847
        %vm4859 = vcmp.eq.s32.totalorder %v4284, %v4847
        %v4860 = vsel %vm4848, %v4373, -inf
        %v4861 = vsel %vm4849, %v4374, -inf
        %v4862 = vsel %vm4850, %v4375, -inf
        %v4863 = vsel %vm4851, %v4376, -inf
        %v4864 = vsel %vm4852, %v4377, -inf
        %v4865 = vsel %vm4853, %v4378, -inf
        %v4866 = vsel %vm4854, %v4379, -inf
        %v4867 = vsel %vm4855, %v4380, -inf
        %v4868 = vsel %vm4856, %v4381, -inf
        %v4869 = vsel %vm4857, %v4382, -inf
        %v4870 = vsel %vm4858, %v4383, -inf
        %v4871 = vsel %vm4859, %v4384, -inf
        %v4872 = vsel %vm4385, %v4861, -inf
        %v4873 = vmax.f32 %v4860, %v4872
        %4874 = vmax.xlane.f32.xlu0 %v4873
        %v4875 = vpop.xlane.xlu0 %4874
        %v4876 = vsel %vm4385, %v4863, -inf
        %v4877 = vmax.f32 %v4862, %v4876
        %4878 = vmax.xlane.f32.xlu0 %v4877
        %v4879 = vpop.xlane.xlu0 %4878
        %v4880 = vsel %vm4385, %v4865, -inf
        %v4881 = vmax.f32 %v4864, %v4880
        %4882 = vmax.xlane.f32.xlu0 %v4881
        %v4883 = vpop.xlane.xlu0 %4882
        %v4884 = vsel %vm4385, %v4867, -inf
        %v4885 = vmax.f32 %v4866, %v4884
        %4886 = vmax.xlane.f32.xlu0 %v4885
        %v4887 = vpop.xlane.xlu0 %4886
        %v4888 = vsel %vm4385, %v4869, -inf
        %v4889 = vmax.f32 %v4868, %v4888
        %4890 = vmax.xlane.f32.xlu0 %v4889
        %v4891 = vpop.xlane.xlu0 %4890
        %v4892 = vsel %vm4385, %v4871, -inf
        %v4893 = vmax.f32 %v4870, %v4892
        %4894 = vmax.xlane.f32.xlu0 %v4893
        %v4895 = vpop.xlane.xlu0 %4894
        %v4896 = vsel %vm4848, 2147483648, %v4722
        %v4897 = vsel %vm4849, 2147483648, %v4723
        %v4898 = vsel %vm4850, 2147483648, %v4724
        %v4899 = vsel %vm4851, 2147483648, %v4725
        %v4900 = vsel %vm4852, 2147483648, %v4726
        %v4901 = vsel %vm4853, 2147483648, %v4727
        %v4902 = vsel %vm4854, 2147483648, %v4728
        %v4903 = vsel %vm4855, 2147483648, %v4729
        %v4904 = vsel %vm4856, 2147483648, %v4730
        %v4905 = vsel %vm4857, 2147483648, %v4731
        %v4906 = vsel %vm4858, 2147483648, %v4732
        %v4907 = vsel %vm4859, 2147483648, %v4733
        %v4908 = vsel %vm4385, %v4897, 2147483648
        %vm4909 = vcmp.gt.s32.totalorder %v4896, %v4908
        %v4910 = vsel %vm4909, %v4896, %v4908
        %v4911 = vand.u32 %v4910, 65535
        %v4912 = vshra.s32 %v4910, 16
        %v4913 = vcvt.s32.f32 %v4911
        %v4914 = vcvt.s32.f32 %v4912
        %4915 = vmax.xlane.f32.xlu0 %v4914
        %v4916 = vpop.xlane.xlu0 %4915
        %vm4917 = vcmp.eq.f32.partialorder %v4914, %v4916
        %v4918 = vsel %vm4917, %v4913, -inf
        %4919 = vmax.xlane.f32.xlu0 %v4918
        %v4920 = vpop.xlane.xlu0 %4919
        %v4921 = vcvt.f32.s32 %v4920
        %v4922 = vcvt.f32.s32 %v4916
        %v4923 = vshll.u32 %v4922, 16
        %v4924 = vadd.s32 %v4923, %v4921
        %v4925 = vsel %vm4385, %v4899, 2147483648
        %vm4926 = vcmp.gt.s32.totalorder %v4898, %v4925
        %v4927 = vsel %vm4926, %v4898, %v4925
        %v4928 = vand.u32 %v4927, 65535
        %v4929 = vshra.s32 %v4927, 16
        %v4930 = vcvt.s32.f32 %v4928
        %v4931 = vcvt.s32.f32 %v4929
        %4932 = vmax.xlane.f32.xlu0 %v4931
        %v4933 = vpop.xlane.xlu0 %4932
        %vm4934 = vcmp.eq.f32.partialorder %v4931, %v4933
        %v4935 = vsel %vm4934, %v4930, -inf
        %4936 = vmax.xlane.f32.xlu0 %v4935
        %v4937 = vpop.xlane.xlu0 %4936
        %v4938 = vcvt.f32.s32 %v4937
        %v4939 = vcvt.f32.s32 %v4933
        %v4940 = vshll.u32 %v4939, 16
        %v4941 = vadd.s32 %v4940, %v4938
        %v4942 = vsel %vm4385, %v4901, 2147483648
        %vm4943 = vcmp.gt.s32.totalorder %v4900, %v4942
        %v4944 = vsel %vm4943, %v4900, %v4942
        %v4945 = vand.u32 %v4944, 65535
        %v4946 = vshra.s32 %v4944, 16
        %v4947 = vcvt.s32.f32 %v4945
        %v4948 = vcvt.s32.f32 %v4946
        %4949 = vmax.xlane.f32.xlu0 %v4948
        %v4950 = vpop.xlane.xlu0 %4949
        %vm4951 = vcmp.eq.f32.partialorder %v4948, %v4950
        %v4952 = vsel %vm4951, %v4947, -inf
        %4953 = vmax.xlane.f32.xlu0 %v4952
        %v4954 = vpop.xlane.xlu0 %4953
        %v4955 = vcvt.f32.s32 %v4954
        %v4956 = vcvt.f32.s32 %v4950
        %v4957 = vshll.u32 %v4956, 16
        %v4958 = vadd.s32 %v4957, %v4955
        %v4959 = vsel %vm4385, %v4903, 2147483648
        %vm4960 = vcmp.gt.s32.totalorder %v4902, %v4959
        %v4961 = vsel %vm4960, %v4902, %v4959
        %v4962 = vand.u32 %v4961, 65535
        %v4963 = vshra.s32 %v4961, 16
        %v4964 = vcvt.s32.f32 %v4962
        %v4965 = vcvt.s32.f32 %v4963
        %4966 = vmax.xlane.f32.xlu0 %v4965
        %v4967 = vpop.xlane.xlu0 %4966
        %vm4968 = vcmp.eq.f32.partialorder %v4965, %v4967
        %v4969 = vsel %vm4968, %v4964, -inf
        %4970 = vmax.xlane.f32.xlu0 %v4969
        %v4971 = vpop.xlane.xlu0 %4970
        %v4972 = vcvt.f32.s32 %v4971
        %v4973 = vcvt.f32.s32 %v4967
        %v4974 = vshll.u32 %v4973, 16
        %v4975 = vadd.s32 %v4974, %v4972
        %v4976 = vsel %vm4385, %v4905, 2147483648
        %vm4977 = vcmp.gt.s32.totalorder %v4904, %v4976
        %v4978 = vsel %vm4977, %v4904, %v4976
        %v4979 = vand.u32 %v4978, 65535
        %v4980 = vshra.s32 %v4978, 16
        %v4981 = vcvt.s32.f32 %v4979
        %v4982 = vcvt.s32.f32 %v4980
        %4983 = vmax.xlane.f32.xlu0 %v4982
        %v4984 = vpop.xlane.xlu0 %4983
        %vm4985 = vcmp.eq.f32.partialorder %v4982, %v4984
        %v4986 = vsel %vm4985, %v4981, -inf
        %4987 = vmax.xlane.f32.xlu0 %v4986
        %v4988 = vpop.xlane.xlu0 %4987
        %v4989 = vcvt.f32.s32 %v4988
        %v4990 = vcvt.f32.s32 %v4984
        %v4991 = vshll.u32 %v4990, 16
        %v4992 = vadd.s32 %v4991, %v4989
        %v4993 = vsel %vm4385, %v4907, 2147483648
        %vm4994 = vcmp.gt.s32.totalorder %v4906, %v4993
        %v4995 = vsel %vm4994, %v4906, %v4993
        %v4996 = vand.u32 %v4995, 65535
        %v4997 = vshra.s32 %v4995, 16
        %v4998 = vcvt.s32.f32 %v4996
        %v4999 = vcvt.s32.f32 %v4997
        %5000 = vmax.xlane.f32.xlu0 %v4999
        %v5001 = vpop.xlane.xlu0 %5000
        %vm5002 = vcmp.eq.f32.partialorder %v4999, %v5001
        %v5003 = vsel %vm5002, %v4998, -inf
        %5004 = vmax.xlane.f32.xlu0 %v5003
        %v5005 = vpop.xlane.xlu0 %5004
        %v5006 = vcvt.f32.s32 %v5005
        %v5007 = vcvt.f32.s32 %v5001
        %v5008 = vshll.u32 %v5007, 16
        %v5009 = vadd.s32 %v5008, %v5006
        %v5010 = vand.u32 %v4924, 255
        %v5011 = vand.u32 %v4941, 255
        %v5012 = vand.u32 %v4958, 255
        %v5013 = vand.u32 %v4975, 255
        %v5014 = vand.u32 %v4992, 255
        %v5015 = vand.u32 %v5009, 255
        %v5016 = vsub.s32 255, %v5010
        %v5017 = vsub.s32 255, %v5011
        %v5018 = vsub.s32 255, %v5012
        %v5019 = vsub.s32 255, %v5013
        %v5020 = vsub.s32 255, %v5014
        %v5021 = vsub.s32 255, %v5015
        %vm5022 = vcmp.eq.s32.totalorder %v292, %v5016
        %vm5023 = vcmp.eq.s32.totalorder %v4284, %v5016
        %vm5024 = vcmp.eq.s32.totalorder %v292, %v5017
        %vm5025 = vcmp.eq.s32.totalorder %v4284, %v5017
        %vm5026 = vcmp.eq.s32.totalorder %v292, %v5018
        %vm5027 = vcmp.eq.s32.totalorder %v4284, %v5018
        %vm5028 = vcmp.eq.s32.totalorder %v292, %v5019
        %vm5029 = vcmp.eq.s32.totalorder %v4284, %v5019
        %vm5030 = vcmp.eq.s32.totalorder %v292, %v5020
        %vm5031 = vcmp.eq.s32.totalorder %v4284, %v5020
        %vm5032 = vcmp.eq.s32.totalorder %v292, %v5021
        %vm5033 = vcmp.eq.s32.totalorder %v4284, %v5021
        %v5034 = vsel %vm5022, %v4373, -inf
        %v5035 = vsel %vm5023, %v4374, -inf
        %v5036 = vsel %vm5024, %v4375, -inf
        %v5037 = vsel %vm5025, %v4376, -inf
        %v5038 = vsel %vm5026, %v4377, -inf
        %v5039 = vsel %vm5027, %v4378, -inf
        %v5040 = vsel %vm5028, %v4379, -inf
        %v5041 = vsel %vm5029, %v4380, -inf
        %v5042 = vsel %vm5030, %v4381, -inf
        %v5043 = vsel %vm5031, %v4382, -inf
        %v5044 = vsel %vm5032, %v4383, -inf
        %v5045 = vsel %vm5033, %v4384, -inf
        %v5046 = vsel %vm4385, %v5035, -inf
        %v5047 = vmax.f32 %v5034, %v5046
        %5048 = vmax.xlane.f32.xlu0 %v5047
        %v5049 = vpop.xlane.xlu0 %5048
        %v5050 = vsel %vm4385, %v5037, -inf
        %v5051 = vmax.f32 %v5036, %v5050
        %5052 = vmax.xlane.f32.xlu0 %v5051
        %v5053 = vpop.xlane.xlu0 %5052
        %v5054 = vsel %vm4385, %v5039, -inf
        %v5055 = vmax.f32 %v5038, %v5054
        %5056 = vmax.xlane.f32.xlu0 %v5055
        %v5057 = vpop.xlane.xlu0 %5056
        %v5058 = vsel %vm4385, %v5041, -inf
        %v5059 = vmax.f32 %v5040, %v5058
        %5060 = vmax.xlane.f32.xlu0 %v5059
        %v5061 = vpop.xlane.xlu0 %5060
        %v5062 = vsel %vm4385, %v5043, -inf
        %v5063 = vmax.f32 %v5042, %v5062
        %5064 = vmax.xlane.f32.xlu0 %v5063
        %v5065 = vpop.xlane.xlu0 %5064
        %v5066 = vsel %vm4385, %v5045, -inf
        %v5067 = vmax.f32 %v5044, %v5066
        %5068 = vmax.xlane.f32.xlu0 %v5067
        %v5069 = vpop.xlane.xlu0 %5068
        %v5070 = vsel %vm5022, 2147483648, %v4896
        %v5071 = vsel %vm5023, 2147483648, %v4897
        %v5072 = vsel %vm5024, 2147483648, %v4898
        %v5073 = vsel %vm5025, 2147483648, %v4899
        %v5074 = vsel %vm5026, 2147483648, %v4900
        %v5075 = vsel %vm5027, 2147483648, %v4901
        %v5076 = vsel %vm5028, 2147483648, %v4902
        %v5077 = vsel %vm5029, 2147483648, %v4903
        %v5078 = vsel %vm5030, 2147483648, %v4904
        %v5079 = vsel %vm5031, 2147483648, %v4905
        %v5080 = vsel %vm5032, 2147483648, %v4906
        %v5081 = vsel %vm5033, 2147483648, %v4907
        %v5082 = vsel %vm4385, %v5071, 2147483648
        %vm5083 = vcmp.gt.s32.totalorder %v5070, %v5082
        %v5084 = vsel %vm5083, %v5070, %v5082
        %v5085 = vand.u32 %v5084, 65535
        %v5086 = vshra.s32 %v5084, 16
        %v5087 = vcvt.s32.f32 %v5085
        %v5088 = vcvt.s32.f32 %v5086
        %5089 = vmax.xlane.f32.xlu0 %v5088
        %v5090 = vpop.xlane.xlu0 %5089
        %vm5091 = vcmp.eq.f32.partialorder %v5088, %v5090
        %v5092 = vsel %vm5091, %v5087, -inf
        %5093 = vmax.xlane.f32.xlu0 %v5092
        %v5094 = vpop.xlane.xlu0 %5093
        %v5095 = vcvt.f32.s32 %v5094
        %v5096 = vcvt.f32.s32 %v5090
        %v5097 = vshll.u32 %v5096, 16
        %v5098 = vadd.s32 %v5097, %v5095
        %v5099 = vsel %vm4385, %v5073, 2147483648
        %vm5100 = vcmp.gt.s32.totalorder %v5072, %v5099
        %v5101 = vsel %vm5100, %v5072, %v5099
        %v5102 = vand.u32 %v5101, 65535
        %v5103 = vshra.s32 %v5101, 16
        %v5104 = vcvt.s32.f32 %v5102
        %v5105 = vcvt.s32.f32 %v5103
        %5106 = vmax.xlane.f32.xlu0 %v5105
        %v5107 = vpop.xlane.xlu0 %5106
        %vm5108 = vcmp.eq.f32.partialorder %v5105, %v5107
        %v5109 = vsel %vm5108, %v5104, -inf
        %5110 = vmax.xlane.f32.xlu0 %v5109
        %v5111 = vpop.xlane.xlu0 %5110
        %v5112 = vcvt.f32.s32 %v5111
        %v5113 = vcvt.f32.s32 %v5107
        %v5114 = vshll.u32 %v5113, 16
        %v5115 = vadd.s32 %v5114, %v5112
        %v5116 = vsel %vm4385, %v5075, 2147483648
        %vm5117 = vcmp.gt.s32.totalorder %v5074, %v5116
        %v5118 = vsel %vm5117, %v5074, %v5116
        %v5119 = vand.u32 %v5118, 65535
        %v5120 = vshra.s32 %v5118, 16
        %v5121 = vcvt.s32.f32 %v5119
        %v5122 = vcvt.s32.f32 %v5120
        %5123 = vmax.xlane.f32.xlu0 %v5122
        %v5124 = vpop.xlane.xlu0 %5123
        %vm5125 = vcmp.eq.f32.partialorder %v5122, %v5124
        %v5126 = vsel %vm5125, %v5121, -inf
        %5127 = vmax.xlane.f32.xlu0 %v5126
        %v5128 = vpop.xlane.xlu0 %5127
        %v5129 = vcvt.f32.s32 %v5128
        %v5130 = vcvt.f32.s32 %v5124
        %v5131 = vshll.u32 %v5130, 16
        %v5132 = vadd.s32 %v5131, %v5129
        %v5133 = vsel %vm4385, %v5077, 2147483648
        %vm5134 = vcmp.gt.s32.totalorder %v5076, %v5133
        %v5135 = vsel %vm5134, %v5076, %v5133
        %v5136 = vand.u32 %v5135, 65535
        %v5137 = vshra.s32 %v5135, 16
        %v5138 = vcvt.s32.f32 %v5136
        %v5139 = vcvt.s32.f32 %v5137
        %5140 = vmax.xlane.f32.xlu0 %v5139
        %v5141 = vpop.xlane.xlu0 %5140
        %vm5142 = vcmp.eq.f32.partialorder %v5139, %v5141
        %v5143 = vsel %vm5142, %v5138, -inf
        %5144 = vmax.xlane.f32.xlu0 %v5143
        %v5145 = vpop.xlane.xlu0 %5144
        %v5146 = vcvt.f32.s32 %v5145
        %v5147 = vcvt.f32.s32 %v5141
        %v5148 = vshll.u32 %v5147, 16
        %v5149 = vadd.s32 %v5148, %v5146
        %v5150 = vsel %vm4385, %v5079, 2147483648
        %vm5151 = vcmp.gt.s32.totalorder %v5078, %v5150
        %v5152 = vsel %vm5151, %v5078, %v5150
        %v5153 = vand.u32 %v5152, 65535
        %v5154 = vshra.s32 %v5152, 16
        %v5155 = vcvt.s32.f32 %v5153
        %v5156 = vcvt.s32.f32 %v5154
        %5157 = vmax.xlane.f32.xlu0 %v5156
        %v5158 = vpop.xlane.xlu0 %5157
        %vm5159 = vcmp.eq.f32.partialorder %v5156, %v5158
        %v5160 = vsel %vm5159, %v5155, -inf
        %5161 = vmax.xlane.f32.xlu0 %v5160
        %v5162 = vpop.xlane.xlu0 %5161
        %v5163 = vcvt.f32.s32 %v5162
        %v5164 = vcvt.f32.s32 %v5158
        %v5165 = vshll.u32 %v5164, 16
        %v5166 = vadd.s32 %v5165, %v5163
        %v5167 = vsel %vm4385, %v5081, 2147483648
        %vm5168 = vcmp.gt.s32.totalorder %v5080, %v5167
        %v5169 = vsel %vm5168, %v5080, %v5167
        %v5170 = vand.u32 %v5169, 65535
        %v5171 = vshra.s32 %v5169, 16
        %v5172 = vcvt.s32.f32 %v5170
        %v5173 = vcvt.s32.f32 %v5171
        %5174 = vmax.xlane.f32.xlu0 %v5173
        %v5175 = vpop.xlane.xlu0 %5174
        %vm5176 = vcmp.eq.f32.partialorder %v5173, %v5175
        %v5177 = vsel %vm5176, %v5172, -inf
        %5178 = vmax.xlane.f32.xlu0 %v5177
        %v5179 = vpop.xlane.xlu0 %5178
        %v5180 = vcvt.f32.s32 %v5179
        %v5181 = vcvt.f32.s32 %v5175
        %v5182 = vshll.u32 %v5181, 16
        %v5183 = vadd.s32 %v5182, %v5180
        %v5184 = vand.u32 %v5098, 255
        %v5185 = vand.u32 %v5115, 255
        %v5186 = vand.u32 %v5132, 255
        %v5187 = vand.u32 %v5149, 255
        %v5188 = vand.u32 %v5166, 255
        %v5189 = vand.u32 %v5183, 255
        %v5190 = vsub.s32 255, %v5184
        %v5191 = vsub.s32 255, %v5185
        %v5192 = vsub.s32 255, %v5186
        %v5193 = vsub.s32 255, %v5187
        %v5194 = vsub.s32 255, %v5188
        %v5195 = vsub.s32 255, %v5189
        %vm5196 = vcmp.eq.s32.totalorder %v292, %v5190
        %vm5197 = vcmp.eq.s32.totalorder %v4284, %v5190
        %vm5198 = vcmp.eq.s32.totalorder %v292, %v5191
        %vm5199 = vcmp.eq.s32.totalorder %v4284, %v5191
        %vm5200 = vcmp.eq.s32.totalorder %v292, %v5192
        %vm5201 = vcmp.eq.s32.totalorder %v4284, %v5192
        %vm5202 = vcmp.eq.s32.totalorder %v292, %v5193
        %vm5203 = vcmp.eq.s32.totalorder %v4284, %v5193
        %vm5204 = vcmp.eq.s32.totalorder %v292, %v5194
        %vm5205 = vcmp.eq.s32.totalorder %v4284, %v5194
        %vm5206 = vcmp.eq.s32.totalorder %v292, %v5195
        %vm5207 = vcmp.eq.s32.totalorder %v4284, %v5195
        %v5208 = vsel %vm5196, %v4373, -inf
        %v5209 = vsel %vm5197, %v4374, -inf
        %v5210 = vsel %vm5198, %v4375, -inf
        %v5211 = vsel %vm5199, %v4376, -inf
        %v5212 = vsel %vm5200, %v4377, -inf
        %v5213 = vsel %vm5201, %v4378, -inf
        %v5214 = vsel %vm5202, %v4379, -inf
        %v5215 = vsel %vm5203, %v4380, -inf
        %v5216 = vsel %vm5204, %v4381, -inf
        %v5217 = vsel %vm5205, %v4382, -inf
        %v5218 = vsel %vm5206, %v4383, -inf
        %v5219 = vsel %vm5207, %v4384, -inf
        %v5220 = vsel %vm4385, %v5209, -inf
        %v5221 = vmax.f32 %v5208, %v5220
        %5222 = vmax.xlane.f32.xlu0 %v5221
        %v5223 = vpop.xlane.xlu0 %5222
        %v5224 = vsel %vm4385, %v5211, -inf
        %v5225 = vmax.f32 %v5210, %v5224
        %5226 = vmax.xlane.f32.xlu0 %v5225
        %v5227 = vpop.xlane.xlu0 %5226
        %v5228 = vsel %vm4385, %v5213, -inf
        %v5229 = vmax.f32 %v5212, %v5228
        %5230 = vmax.xlane.f32.xlu0 %v5229
        %v5231 = vpop.xlane.xlu0 %5230
        %v5232 = vsel %vm4385, %v5215, -inf
        %v5233 = vmax.f32 %v5214, %v5232
        %5234 = vmax.xlane.f32.xlu0 %v5233
        %v5235 = vpop.xlane.xlu0 %5234
        %v5236 = vsel %vm4385, %v5217, -inf
        %v5237 = vmax.f32 %v5216, %v5236
        %5238 = vmax.xlane.f32.xlu0 %v5237
        %v5239 = vpop.xlane.xlu0 %5238
        %v5240 = vsel %vm4385, %v5219, -inf
        %v5241 = vmax.f32 %v5218, %v5240
        %5242 = vmax.xlane.f32.xlu0 %v5241
        %v5243 = vpop.xlane.xlu0 %5242
        %v5244 = vsel %vm5196, 2147483648, %v5070
        %v5245 = vsel %vm5197, 2147483648, %v5071
        %v5246 = vsel %vm5198, 2147483648, %v5072
        %v5247 = vsel %vm5199, 2147483648, %v5073
        %v5248 = vsel %vm5200, 2147483648, %v5074
        %v5249 = vsel %vm5201, 2147483648, %v5075
        %v5250 = vsel %vm5202, 2147483648, %v5076
        %v5251 = vsel %vm5203, 2147483648, %v5077
        %v5252 = vsel %vm5204, 2147483648, %v5078
        %v5253 = vsel %vm5205, 2147483648, %v5079
        %v5254 = vsel %vm5206, 2147483648, %v5080
        %v5255 = vsel %vm5207, 2147483648, %v5081
        %v5256 = vsel %vm4385, %v5245, 2147483648
        %vm5257 = vcmp.gt.s32.totalorder %v5244, %v5256
        %v5258 = vsel %vm5257, %v5244, %v5256
        %v5259 = vand.u32 %v5258, 65535
        %v5260 = vshra.s32 %v5258, 16
        %v5261 = vcvt.s32.f32 %v5259
        %v5262 = vcvt.s32.f32 %v5260
        %5263 = vmax.xlane.f32.xlu0 %v5262
        %v5264 = vpop.xlane.xlu0 %5263
        %vm5265 = vcmp.eq.f32.partialorder %v5262, %v5264
        %v5266 = vsel %vm5265, %v5261, -inf
        %5267 = vmax.xlane.f32.xlu0 %v5266
        %v5268 = vpop.xlane.xlu0 %5267
        %v5269 = vcvt.f32.s32 %v5268
        %v5270 = vcvt.f32.s32 %v5264
        %v5271 = vshll.u32 %v5270, 16
        %v5272 = vadd.s32 %v5271, %v5269
        %v5273 = vsel %vm4385, %v5247, 2147483648
        %vm5274 = vcmp.gt.s32.totalorder %v5246, %v5273
        %v5275 = vsel %vm5274, %v5246, %v5273
        %v5276 = vand.u32 %v5275, 65535
        %v5277 = vshra.s32 %v5275, 16
        %v5278 = vcvt.s32.f32 %v5276
        %v5279 = vcvt.s32.f32 %v5277
        %5280 = vmax.xlane.f32.xlu0 %v5279
        %v5281 = vpop.xlane.xlu0 %5280
        %vm5282 = vcmp.eq.f32.partialorder %v5279, %v5281
        %v5283 = vsel %vm5282, %v5278, -inf
        %5284 = vmax.xlane.f32.xlu0 %v5283
        %v5285 = vpop.xlane.xlu0 %5284
        %v5286 = vcvt.f32.s32 %v5285
        %v5287 = vcvt.f32.s32 %v5281
        %v5288 = vshll.u32 %v5287, 16
        %v5289 = vadd.s32 %v5288, %v5286
        %v5290 = vsel %vm4385, %v5249, 2147483648
        %vm5291 = vcmp.gt.s32.totalorder %v5248, %v5290
        %v5292 = vsel %vm5291, %v5248, %v5290
        %v5293 = vand.u32 %v5292, 65535
        %v5294 = vshra.s32 %v5292, 16
        %v5295 = vcvt.s32.f32 %v5293
        %v5296 = vcvt.s32.f32 %v5294
        %5297 = vmax.xlane.f32.xlu0 %v5296
        %v5298 = vpop.xlane.xlu0 %5297
        %vm5299 = vcmp.eq.f32.partialorder %v5296, %v5298
        %v5300 = vsel %vm5299, %v5295, -inf
        %5301 = vmax.xlane.f32.xlu0 %v5300
        %v5302 = vpop.xlane.xlu0 %5301
        %v5303 = vcvt.f32.s32 %v5302
        %v5304 = vcvt.f32.s32 %v5298
        %v5305 = vshll.u32 %v5304, 16
        %v5306 = vadd.s32 %v5305, %v5303
        %v5307 = vsel %vm4385, %v5251, 2147483648
        %vm5308 = vcmp.gt.s32.totalorder %v5250, %v5307
        %v5309 = vsel %vm5308, %v5250, %v5307
        %v5310 = vand.u32 %v5309, 65535
        %v5311 = vshra.s32 %v5309, 16
        %v5312 = vcvt.s32.f32 %v5310
        %v5313 = vcvt.s32.f32 %v5311
        %5314 = vmax.xlane.f32.xlu0 %v5313
        %v5315 = vpop.xlane.xlu0 %5314
        %vm5316 = vcmp.eq.f32.partialorder %v5313, %v5315
        %v5317 = vsel %vm5316, %v5312, -inf
        %5318 = vmax.xlane.f32.xlu0 %v5317
        %v5319 = vpop.xlane.xlu0 %5318
        %v5320 = vcvt.f32.s32 %v5319
        %v5321 = vcvt.f32.s32 %v5315
        %v5322 = vshll.u32 %v5321, 16
        %v5323 = vadd.s32 %v5322, %v5320
        %v5324 = vsel %vm4385, %v5253, 2147483648
        %vm5325 = vcmp.gt.s32.totalorder %v5252, %v5324
        %v5326 = vsel %vm5325, %v5252, %v5324
        %v5327 = vand.u32 %v5326, 65535
        %v5328 = vshra.s32 %v5326, 16
        %v5329 = vcvt.s32.f32 %v5327
        %v5330 = vcvt.s32.f32 %v5328
        %5331 = vmax.xlane.f32.xlu0 %v5330
        %v5332 = vpop.xlane.xlu0 %5331
        %vm5333 = vcmp.eq.f32.partialorder %v5330, %v5332
        %v5334 = vsel %vm5333, %v5329, -inf
        %5335 = vmax.xlane.f32.xlu0 %v5334
        %v5336 = vpop.xlane.xlu0 %5335
        %v5337 = vcvt.f32.s32 %v5336
        %v5338 = vcvt.f32.s32 %v5332
        %v5339 = vshll.u32 %v5338, 16
        %v5340 = vadd.s32 %v5339, %v5337
        %v5341 = vsel %vm4385, %v5255, 2147483648
        %vm5342 = vcmp.gt.s32.totalorder %v5254, %v5341
        %v5343 = vsel %vm5342, %v5254, %v5341
        %v5344 = vand.u32 %v5343, 65535
        %v5345 = vshra.s32 %v5343, 16
        %v5346 = vcvt.s32.f32 %v5344
        %v5347 = vcvt.s32.f32 %v5345
        %5348 = vmax.xlane.f32.xlu0 %v5347
        %v5349 = vpop.xlane.xlu0 %5348
        %vm5350 = vcmp.eq.f32.partialorder %v5347, %v5349
        %v5351 = vsel %vm5350, %v5346, -inf
        %5352 = vmax.xlane.f32.xlu0 %v5351
        %v5353 = vpop.xlane.xlu0 %5352
        %v5354 = vcvt.f32.s32 %v5353
        %v5355 = vcvt.f32.s32 %v5349
        %v5356 = vshll.u32 %v5355, 16
        %v5357 = vadd.s32 %v5356, %v5354
        %v5358 = vand.u32 %v5272, 255
        %v5359 = vand.u32 %v5289, 255
        %v5360 = vand.u32 %v5306, 255
        %v5361 = vand.u32 %v5323, 255
        %v5362 = vand.u32 %v5340, 255
        %v5363 = vand.u32 %v5357, 255
        %v5364 = vsub.s32 255, %v5358
        %v5365 = vsub.s32 255, %v5359
        %v5366 = vsub.s32 255, %v5360
        %v5367 = vsub.s32 255, %v5361
        %v5368 = vsub.s32 255, %v5362
        %v5369 = vsub.s32 255, %v5363
        %vm5370 = vcmp.eq.s32.totalorder %v292, %v5364
        %vm5371 = vcmp.eq.s32.totalorder %v4284, %v5364
        %vm5372 = vcmp.eq.s32.totalorder %v292, %v5365
        %vm5373 = vcmp.eq.s32.totalorder %v4284, %v5365
        %vm5374 = vcmp.eq.s32.totalorder %v292, %v5366
        %vm5375 = vcmp.eq.s32.totalorder %v4284, %v5366
        %vm5376 = vcmp.eq.s32.totalorder %v292, %v5367
        %vm5377 = vcmp.eq.s32.totalorder %v4284, %v5367
        %vm5378 = vcmp.eq.s32.totalorder %v292, %v5368
        %vm5379 = vcmp.eq.s32.totalorder %v4284, %v5368
        %vm5380 = vcmp.eq.s32.totalorder %v292, %v5369
        %vm5381 = vcmp.eq.s32.totalorder %v4284, %v5369
        %v5382 = vsel %vm5370, %v4373, -inf
        %v5383 = vsel %vm5371, %v4374, -inf
        %v5384 = vsel %vm5372, %v4375, -inf
        %v5385 = vsel %vm5373, %v4376, -inf
        %v5386 = vsel %vm5374, %v4377, -inf
        %v5387 = vsel %vm5375, %v4378, -inf
        %v5388 = vsel %vm5376, %v4379, -inf
        %v5389 = vsel %vm5377, %v4380, -inf
        %v5390 = vsel %vm5378, %v4381, -inf
        %v5391 = vsel %vm5379, %v4382, -inf
        %v5392 = vsel %vm5380, %v4383, -inf
        %v5393 = vsel %vm5381, %v4384, -inf
        %v5394 = vsel %vm4385, %v5383, -inf
        %v5395 = vmax.f32 %v5382, %v5394
        %5396 = vmax.xlane.f32.xlu0 %v5395
        %v5397 = vpop.xlane.xlu0 %5396
        %v5398 = vsel %vm4385, %v5385, -inf
        %v5399 = vmax.f32 %v5384, %v5398
        %5400 = vmax.xlane.f32.xlu0 %v5399
        %v5401 = vpop.xlane.xlu0 %5400
        %v5402 = vsel %vm4385, %v5387, -inf
        %v5403 = vmax.f32 %v5386, %v5402
        %5404 = vmax.xlane.f32.xlu0 %v5403
        %v5405 = vpop.xlane.xlu0 %5404
        %v5406 = vsel %vm4385, %v5389, -inf
        %v5407 = vmax.f32 %v5388, %v5406
        %5408 = vmax.xlane.f32.xlu0 %v5407
        %v5409 = vpop.xlane.xlu0 %5408
        %v5410 = vsel %vm4385, %v5391, -inf
        %v5411 = vmax.f32 %v5390, %v5410
        %5412 = vmax.xlane.f32.xlu0 %v5411
        %v5413 = vpop.xlane.xlu0 %5412
        %v5414 = vsel %vm4385, %v5393, -inf
        %v5415 = vmax.f32 %v5392, %v5414
        %5416 = vmax.xlane.f32.xlu0 %v5415
        %v5417 = vpop.xlane.xlu0 %5416
        %v5418 = vsel %vm5370, 2147483648, %v5244
        %v5419 = vsel %vm5371, 2147483648, %v5245
        %v5420 = vsel %vm5372, 2147483648, %v5246
        %v5421 = vsel %vm5373, 2147483648, %v5247
        %v5422 = vsel %vm5374, 2147483648, %v5248
        %v5423 = vsel %vm5375, 2147483648, %v5249
        %v5424 = vsel %vm5376, 2147483648, %v5250
        %v5425 = vsel %vm5377, 2147483648, %v5251
        %v5426 = vsel %vm5378, 2147483648, %v5252
        %v5427 = vsel %vm5379, 2147483648, %v5253
        %v5428 = vsel %vm5380, 2147483648, %v5254
        %v5429 = vsel %vm5381, 2147483648, %v5255
        %v5430 = vsel %vm4385, %v5419, 2147483648
        %vm5431 = vcmp.gt.s32.totalorder %v5418, %v5430
        %v5432 = vsel %vm5431, %v5418, %v5430
        %v5433 = vand.u32 %v5432, 65535
        %v5434 = vshra.s32 %v5432, 16
        %v5435 = vcvt.s32.f32 %v5433
        %v5436 = vcvt.s32.f32 %v5434
        %5437 = vmax.xlane.f32.xlu0 %v5436
        %v5438 = vpop.xlane.xlu0 %5437
        %vm5439 = vcmp.eq.f32.partialorder %v5436, %v5438
        %v5440 = vsel %vm5439, %v5435, -inf
        %5441 = vmax.xlane.f32.xlu0 %v5440
        %v5442 = vpop.xlane.xlu0 %5441
        %v5443 = vcvt.f32.s32 %v5442
        %v5444 = vcvt.f32.s32 %v5438
        %v5445 = vshll.u32 %v5444, 16
        %v5446 = vadd.s32 %v5445, %v5443
        %v5447 = vsel %vm4385, %v5421, 2147483648
        %vm5448 = vcmp.gt.s32.totalorder %v5420, %v5447
        %v5449 = vsel %vm5448, %v5420, %v5447
        %v5450 = vand.u32 %v5449, 65535
        %v5451 = vshra.s32 %v5449, 16
        %v5452 = vcvt.s32.f32 %v5450
        %v5453 = vcvt.s32.f32 %v5451
        %5454 = vmax.xlane.f32.xlu0 %v5453
        %v5455 = vpop.xlane.xlu0 %5454
        %vm5456 = vcmp.eq.f32.partialorder %v5453, %v5455
        %v5457 = vsel %vm5456, %v5452, -inf
        %5458 = vmax.xlane.f32.xlu0 %v5457
        %v5459 = vpop.xlane.xlu0 %5458
        %v5460 = vcvt.f32.s32 %v5459
        %v5461 = vcvt.f32.s32 %v5455
        %v5462 = vshll.u32 %v5461, 16
        %v5463 = vadd.s32 %v5462, %v5460
        %v5464 = vsel %vm4385, %v5423, 2147483648
        %vm5465 = vcmp.gt.s32.totalorder %v5422, %v5464
        %v5466 = vsel %vm5465, %v5422, %v5464
        %v5467 = vand.u32 %v5466, 65535
        %v5468 = vshra.s32 %v5466, 16
        %v5469 = vcvt.s32.f32 %v5467
        %v5470 = vcvt.s32.f32 %v5468
        %5471 = vmax.xlane.f32.xlu0 %v5470
        %v5472 = vpop.xlane.xlu0 %5471
        %vm5473 = vcmp.eq.f32.partialorder %v5470, %v5472
        %v5474 = vsel %vm5473, %v5469, -inf
        %5475 = vmax.xlane.f32.xlu0 %v5474
        %v5476 = vpop.xlane.xlu0 %5475
        %v5477 = vcvt.f32.s32 %v5476
        %v5478 = vcvt.f32.s32 %v5472
        %v5479 = vshll.u32 %v5478, 16
        %v5480 = vadd.s32 %v5479, %v5477
        %v5481 = vsel %vm4385, %v5425, 2147483648
        %vm5482 = vcmp.gt.s32.totalorder %v5424, %v5481
        %v5483 = vsel %vm5482, %v5424, %v5481
        %v5484 = vand.u32 %v5483, 65535
        %v5485 = vshra.s32 %v5483, 16
        %v5486 = vcvt.s32.f32 %v5484
        %v5487 = vcvt.s32.f32 %v5485
        %5488 = vmax.xlane.f32.xlu0 %v5487
        %v5489 = vpop.xlane.xlu0 %5488
        %vm5490 = vcmp.eq.f32.partialorder %v5487, %v5489
        %v5491 = vsel %vm5490, %v5486, -inf
        %5492 = vmax.xlane.f32.xlu0 %v5491
        %v5493 = vpop.xlane.xlu0 %5492
        %v5494 = vcvt.f32.s32 %v5493
        %v5495 = vcvt.f32.s32 %v5489
        %v5496 = vshll.u32 %v5495, 16
        %v5497 = vadd.s32 %v5496, %v5494
        %v5498 = vsel %vm4385, %v5427, 2147483648
        %vm5499 = vcmp.gt.s32.totalorder %v5426, %v5498
        %v5500 = vsel %vm5499, %v5426, %v5498
        %v5501 = vand.u32 %v5500, 65535
        %v5502 = vshra.s32 %v5500, 16
        %v5503 = vcvt.s32.f32 %v5501
        %v5504 = vcvt.s32.f32 %v5502
        %5505 = vmax.xlane.f32.xlu0 %v5504
        %v5506 = vpop.xlane.xlu0 %5505
        %vm5507 = vcmp.eq.f32.partialorder %v5504, %v5506
        %v5508 = vsel %vm5507, %v5503, -inf
        %5509 = vmax.xlane.f32.xlu0 %v5508
        %v5510 = vpop.xlane.xlu0 %5509
        %v5511 = vcvt.f32.s32 %v5510
        %v5512 = vcvt.f32.s32 %v5506
        %v5513 = vshll.u32 %v5512, 16
        %v5514 = vadd.s32 %v5513, %v5511
        %v5515 = vsel %vm4385, %v5429, 2147483648
        %vm5516 = vcmp.gt.s32.totalorder %v5428, %v5515
        %v5517 = vsel %vm5516, %v5428, %v5515
        %v5518 = vand.u32 %v5517, 65535
        %v5519 = vshra.s32 %v5517, 16
        %v5520 = vcvt.s32.f32 %v5518
        %v5521 = vcvt.s32.f32 %v5519
        %5522 = vmax.xlane.f32.xlu0 %v5521
        %v5523 = vpop.xlane.xlu0 %5522
        %vm5524 = vcmp.eq.f32.partialorder %v5521, %v5523
        %v5525 = vsel %vm5524, %v5520, -inf
        %5526 = vmax.xlane.f32.xlu0 %v5525
        %v5527 = vpop.xlane.xlu0 %5526
        %v5528 = vcvt.f32.s32 %v5527
        %v5529 = vcvt.f32.s32 %v5523
        %v5530 = vshll.u32 %v5529, 16
        %v5531 = vadd.s32 %v5530, %v5528
        %v5532 = vand.u32 %v5446, 255
        %v5533 = vand.u32 %v5463, 255
        %v5534 = vand.u32 %v5480, 255
        %v5535 = vand.u32 %v5497, 255
        %v5536 = vand.u32 %v5514, 255
        %v5537 = vand.u32 %v5531, 255
        %v5538 = vsub.s32 255, %v5532
        %v5539 = vsub.s32 255, %v5533
        %v5540 = vsub.s32 255, %v5534
        %v5541 = vsub.s32 255, %v5535
        %v5542 = vsub.s32 255, %v5536
        %v5543 = vsub.s32 255, %v5537
        %vm5544 = vcmp.eq.s32.totalorder %v292, %v5538
        %vm5545 = vcmp.eq.s32.totalorder %v4284, %v5538
        %vm5546 = vcmp.eq.s32.totalorder %v292, %v5539
        %vm5547 = vcmp.eq.s32.totalorder %v4284, %v5539
        %vm5548 = vcmp.eq.s32.totalorder %v292, %v5540
        %vm5549 = vcmp.eq.s32.totalorder %v4284, %v5540
        %vm5550 = vcmp.eq.s32.totalorder %v292, %v5541
        %vm5551 = vcmp.eq.s32.totalorder %v4284, %v5541
        %vm5552 = vcmp.eq.s32.totalorder %v292, %v5542
        %vm5553 = vcmp.eq.s32.totalorder %v4284, %v5542
        %vm5554 = vcmp.eq.s32.totalorder %v292, %v5543
        %vm5555 = vcmp.eq.s32.totalorder %v4284, %v5543
        %v5556 = vsel %vm5544, %v4373, -inf
        %v5557 = vsel %vm5545, %v4374, -inf
        %v5558 = vsel %vm5546, %v4375, -inf
        %v5559 = vsel %vm5547, %v4376, -inf
        %v5560 = vsel %vm5548, %v4377, -inf
        %v5561 = vsel %vm5549, %v4378, -inf
        %v5562 = vsel %vm5550, %v4379, -inf
        %v5563 = vsel %vm5551, %v4380, -inf
        %v5564 = vsel %vm5552, %v4381, -inf
        %v5565 = vsel %vm5553, %v4382, -inf
        %v5566 = vsel %vm5554, %v4383, -inf
        %v5567 = vsel %vm5555, %v4384, -inf
        %v5568 = vsel %vm4385, %v5557, -inf
        %v5569 = vmax.f32 %v5556, %v5568
        %5570 = vmax.xlane.f32.xlu0 %v5569
        %v5571 = vpop.xlane.xlu0 %5570
        %v5572 = vsel %vm4385, %v5559, -inf
        %v5573 = vmax.f32 %v5558, %v5572
        %5574 = vmax.xlane.f32.xlu0 %v5573
        %v5575 = vpop.xlane.xlu0 %5574
        %v5576 = vsel %vm4385, %v5561, -inf
        %v5577 = vmax.f32 %v5560, %v5576
        %5578 = vmax.xlane.f32.xlu0 %v5577
        %v5579 = vpop.xlane.xlu0 %5578
        %v5580 = vsel %vm4385, %v5563, -inf
        %v5581 = vmax.f32 %v5562, %v5580
        %5582 = vmax.xlane.f32.xlu0 %v5581
        %v5583 = vpop.xlane.xlu0 %5582
        %v5584 = vsel %vm4385, %v5565, -inf
        %v5585 = vmax.f32 %v5564, %v5584
        %5586 = vmax.xlane.f32.xlu0 %v5585
        %v5587 = vpop.xlane.xlu0 %5586
        %v5588 = vsel %vm4385, %v5567, -inf
        %v5589 = vmax.f32 %v5566, %v5588
        %5590 = vmax.xlane.f32.xlu0 %v5589
        %v5591 = vpop.xlane.xlu0 %5590
        %v5592 = vsel %vm5544, 2147483648, %v5418
        %v5593 = vsel %vm5545, 2147483648, %v5419
        %v5594 = vsel %vm5546, 2147483648, %v5420
        %v5595 = vsel %vm5547, 2147483648, %v5421
        %v5596 = vsel %vm5548, 2147483648, %v5422
        %v5597 = vsel %vm5549, 2147483648, %v5423
        %v5598 = vsel %vm5550, 2147483648, %v5424
        %v5599 = vsel %vm5551, 2147483648, %v5425
        %v5600 = vsel %vm5552, 2147483648, %v5426
        %v5601 = vsel %vm5553, 2147483648, %v5427
        %v5602 = vsel %vm5554, 2147483648, %v5428
        %v5603 = vsel %vm5555, 2147483648, %v5429
        %v5604 = vsel %vm4385, %v5593, 2147483648
        %vm5605 = vcmp.gt.s32.totalorder %v5592, %v5604
        %v5606 = vsel %vm5605, %v5592, %v5604
        %v5607 = vand.u32 %v5606, 65535
        %v5608 = vshra.s32 %v5606, 16
        %v5609 = vcvt.s32.f32 %v5607
        %v5610 = vcvt.s32.f32 %v5608
        %5611 = vmax.xlane.f32.xlu0 %v5610
        %v5612 = vpop.xlane.xlu0 %5611
        %vm5613 = vcmp.eq.f32.partialorder %v5610, %v5612
        %v5614 = vsel %vm5613, %v5609, -inf
        %5615 = vmax.xlane.f32.xlu0 %v5614
        %v5616 = vpop.xlane.xlu0 %5615
        %v5617 = vcvt.f32.s32 %v5616
        %v5618 = vcvt.f32.s32 %v5612
        %v5619 = vshll.u32 %v5618, 16
        %v5620 = vadd.s32 %v5619, %v5617
        %v5621 = vsel %vm4385, %v5595, 2147483648
        %vm5622 = vcmp.gt.s32.totalorder %v5594, %v5621
        %v5623 = vsel %vm5622, %v5594, %v5621
        %v5624 = vand.u32 %v5623, 65535
        %v5625 = vshra.s32 %v5623, 16
        %v5626 = vcvt.s32.f32 %v5624
        %v5627 = vcvt.s32.f32 %v5625
        %5628 = vmax.xlane.f32.xlu0 %v5627
        %v5629 = vpop.xlane.xlu0 %5628
        %vm5630 = vcmp.eq.f32.partialorder %v5627, %v5629
        %v5631 = vsel %vm5630, %v5626, -inf
        %5632 = vmax.xlane.f32.xlu0 %v5631
        %v5633 = vpop.xlane.xlu0 %5632
        %v5634 = vcvt.f32.s32 %v5633
        %v5635 = vcvt.f32.s32 %v5629
        %v5636 = vshll.u32 %v5635, 16
        %v5637 = vadd.s32 %v5636, %v5634
        %v5638 = vsel %vm4385, %v5597, 2147483648
        %vm5639 = vcmp.gt.s32.totalorder %v5596, %v5638
        %v5640 = vsel %vm5639, %v5596, %v5638
        %v5641 = vand.u32 %v5640, 65535
        %v5642 = vshra.s32 %v5640, 16
        %v5643 = vcvt.s32.f32 %v5641
        %v5644 = vcvt.s32.f32 %v5642
        %5645 = vmax.xlane.f32.xlu0 %v5644
        %v5646 = vpop.xlane.xlu0 %5645
        %vm5647 = vcmp.eq.f32.partialorder %v5644, %v5646
        %v5648 = vsel %vm5647, %v5643, -inf
        %5649 = vmax.xlane.f32.xlu0 %v5648
        %v5650 = vpop.xlane.xlu0 %5649
        %v5651 = vcvt.f32.s32 %v5650
        %v5652 = vcvt.f32.s32 %v5646
        %v5653 = vshll.u32 %v5652, 16
        %v5654 = vadd.s32 %v5653, %v5651
        %v5655 = vsel %vm4385, %v5599, 2147483648
        %vm5656 = vcmp.gt.s32.totalorder %v5598, %v5655
        %v5657 = vsel %vm5656, %v5598, %v5655
        %v5658 = vand.u32 %v5657, 65535
        %v5659 = vshra.s32 %v5657, 16
        %v5660 = vcvt.s32.f32 %v5658
        %v5661 = vcvt.s32.f32 %v5659
        %5662 = vmax.xlane.f32.xlu0 %v5661
        %v5663 = vpop.xlane.xlu0 %5662
        %vm5664 = vcmp.eq.f32.partialorder %v5661, %v5663
        %v5665 = vsel %vm5664, %v5660, -inf
        %5666 = vmax.xlane.f32.xlu0 %v5665
        %v5667 = vpop.xlane.xlu0 %5666
        %v5668 = vcvt.f32.s32 %v5667
        %v5669 = vcvt.f32.s32 %v5663
        %v5670 = vshll.u32 %v5669, 16
        %v5671 = vadd.s32 %v5670, %v5668
        %v5672 = vsel %vm4385, %v5601, 2147483648
        %vm5673 = vcmp.gt.s32.totalorder %v5600, %v5672
        %v5674 = vsel %vm5673, %v5600, %v5672
        %v5675 = vand.u32 %v5674, 65535
        %v5676 = vshra.s32 %v5674, 16
        %v5677 = vcvt.s32.f32 %v5675
        %v5678 = vcvt.s32.f32 %v5676
        %5679 = vmax.xlane.f32.xlu0 %v5678
        %v5680 = vpop.xlane.xlu0 %5679
        %vm5681 = vcmp.eq.f32.partialorder %v5678, %v5680
        %v5682 = vsel %vm5681, %v5677, -inf
        %5683 = vmax.xlane.f32.xlu0 %v5682
        %v5684 = vpop.xlane.xlu0 %5683
        %v5685 = vcvt.f32.s32 %v5684
        %v5686 = vcvt.f32.s32 %v5680
        %v5687 = vshll.u32 %v5686, 16
        %v5688 = vadd.s32 %v5687, %v5685
        %v5689 = vsel %vm4385, %v5603, 2147483648
        %vm5690 = vcmp.gt.s32.totalorder %v5602, %v5689
        %v5691 = vsel %vm5690, %v5602, %v5689
        %v5692 = vand.u32 %v5691, 65535
        %v5693 = vshra.s32 %v5691, 16
        %v5694 = vcvt.s32.f32 %v5692
        %v5695 = vcvt.s32.f32 %v5693
        %5696 = vmax.xlane.f32.xlu0 %v5695
        %v5697 = vpop.xlane.xlu0 %5696
        %vm5698 = vcmp.eq.f32.partialorder %v5695, %v5697
        %v5699 = vsel %vm5698, %v5694, -inf
        %5700 = vmax.xlane.f32.xlu0 %v5699
        %v5701 = vpop.xlane.xlu0 %5700
        %v5702 = vcvt.f32.s32 %v5701
        %v5703 = vcvt.f32.s32 %v5697
        %v5704 = vshll.u32 %v5703, 16
        %v5705 = vadd.s32 %v5704, %v5702
        %v5706 = vand.u32 %v5620, 255
        %v5707 = vand.u32 %v5637, 255
        %v5708 = vand.u32 %v5654, 255
        %v5709 = vand.u32 %v5671, 255
        %v5710 = vand.u32 %v5688, 255
        %v5711 = vand.u32 %v5705, 255
        %v5712 = vsub.s32 255, %v5706
        %v5713 = vsub.s32 255, %v5707
        %v5714 = vsub.s32 255, %v5708
        %v5715 = vsub.s32 255, %v5709
        %v5716 = vsub.s32 255, %v5710
        %v5717 = vsub.s32 255, %v5711
        %vm5718 = vcmp.eq.s32.totalorder %v292, %v5712
        %vm5719 = vcmp.eq.s32.totalorder %v4284, %v5712
        %vm5720 = vcmp.eq.s32.totalorder %v292, %v5713
        %vm5721 = vcmp.eq.s32.totalorder %v4284, %v5713
        %vm5722 = vcmp.eq.s32.totalorder %v292, %v5714
        %vm5723 = vcmp.eq.s32.totalorder %v4284, %v5714
        %vm5724 = vcmp.eq.s32.totalorder %v292, %v5715
        %vm5725 = vcmp.eq.s32.totalorder %v4284, %v5715
        %vm5726 = vcmp.eq.s32.totalorder %v292, %v5716
        %vm5727 = vcmp.eq.s32.totalorder %v4284, %v5716
        %vm5728 = vcmp.eq.s32.totalorder %v292, %v5717
        %vm5729 = vcmp.eq.s32.totalorder %v4284, %v5717
        %v5730 = vsel %vm5718, %v4373, -inf
        %v5731 = vsel %vm5719, %v4374, -inf
        %v5732 = vsel %vm5720, %v4375, -inf
        %v5733 = vsel %vm5721, %v4376, -inf
        %v5734 = vsel %vm5722, %v4377, -inf
        %v5735 = vsel %vm5723, %v4378, -inf
        %v5736 = vsel %vm5724, %v4379, -inf
        %v5737 = vsel %vm5725, %v4380, -inf
        %v5738 = vsel %vm5726, %v4381, -inf
        %v5739 = vsel %vm5727, %v4382, -inf
        %v5740 = vsel %vm5728, %v4383, -inf
        %v5741 = vsel %vm5729, %v4384, -inf
        %v5742 = vsel %vm4385, %v5731, -inf
        %v5743 = vmax.f32 %v5730, %v5742
        %5744 = vmax.xlane.f32.xlu0 %v5743
        %v5745 = vpop.xlane.xlu0 %5744
        %v5746 = vsel %vm4385, %v5733, -inf
        %v5747 = vmax.f32 %v5732, %v5746
        %5748 = vmax.xlane.f32.xlu0 %v5747
        %v5749 = vpop.xlane.xlu0 %5748
        %v5750 = vsel %vm4385, %v5735, -inf
        %v5751 = vmax.f32 %v5734, %v5750
        %5752 = vmax.xlane.f32.xlu0 %v5751
        %v5753 = vpop.xlane.xlu0 %5752
        %v5754 = vsel %vm4385, %v5737, -inf
        %v5755 = vmax.f32 %v5736, %v5754
        %5756 = vmax.xlane.f32.xlu0 %v5755
        %v5757 = vpop.xlane.xlu0 %5756
        %v5758 = vsel %vm4385, %v5739, -inf
        %v5759 = vmax.f32 %v5738, %v5758
        %5760 = vmax.xlane.f32.xlu0 %v5759
        %v5761 = vpop.xlane.xlu0 %5760
        %v5762 = vsel %vm4385, %v5741, -inf
        %v5763 = vmax.f32 %v5740, %v5762
        %5764 = vmax.xlane.f32.xlu0 %v5763
        %v5765 = vpop.xlane.xlu0 %5764
        %vm5766 = vcmask 7168
        %v5767 = vsel %vm5766, %v4527, %v4701
        %v5768 = vsel %vm5766, %v4531, %v4705
        %v5769 = vsel %vm5766, %v4535, %v4709
        %v5770 = vsel %vm5766, %v4539, %v4713
        %v5771 = vsel %vm5766, %v4543, %v4717
        %v5772 = vsel %vm5766, %v4547, %v4721
        %vm5773 = vcmask 15360
        %v5774 = vsel %vm5773, %v5767, %v4875
        %v5775 = vsel %vm5773, %v5768, %v4879
        %v5776 = vsel %vm5773, %v5769, %v4883
        %v5777 = vsel %vm5773, %v5770, %v4887
        %v5778 = vsel %vm5773, %v5771, %v4891
        %v5779 = vsel %vm5773, %v5772, %v4895
        %vm5780 = vcmask 23552
        %v5781 = vsel %vm5780, %v5774, %v5049
        %v5782 = vsel %vm5780, %v5775, %v5053
        %v5783 = vsel %vm5780, %v5776, %v5057
        %v5784 = vsel %vm5780, %v5777, %v5061
        %v5785 = vsel %vm5780, %v5778, %v5065
        %v5786 = vsel %vm5780, %v5779, %v5069
        %vm5787 = vcmask 31744
        %v5788 = vsel %vm5787, %v5781, %v5223
        %v5789 = vsel %vm5787, %v5782, %v5227
        %v5790 = vsel %vm5787, %v5783, %v5231
        %v5791 = vsel %vm5787, %v5784, %v5235
        %v5792 = vsel %vm5787, %v5785, %v5239
        %v5793 = vsel %vm5787, %v5786, %v5243
        %vm5794 = vcmask 39936
        %v5795 = vsel %vm5794, %v5788, %v5397
        %v5796 = vsel %vm5794, %v5789, %v5401
        %v5797 = vsel %vm5794, %v5790, %v5405
        %v5798 = vsel %vm5794, %v5791, %v5409
        %v5799 = vsel %vm5794, %v5792, %v5413
        %v5800 = vsel %vm5794, %v5793, %v5417
        %vm5801 = vcmask 48128
        %v5802 = vsel %vm5801, %v5795, %v5571
        %v5803 = vsel %vm5801, %v5796, %v5575
        %v5804 = vsel %vm5801, %v5797, %v5579
        %v5805 = vsel %vm5801, %v5798, %v5583
        %v5806 = vsel %vm5801, %v5799, %v5587
        %v5807 = vsel %vm5801, %v5800, %v5591
        %vm5808 = vcmask 56320
        %v5809 = vsel %vm5808, %v5802, %v5745
        %v5810 = vsel %vm5808, %v5803, %v5749
        %v5811 = vsel %vm5808, %v5804, %v5753
        %v5812 = vsel %vm5808, %v5805, %v5757
        %v5813 = vsel %vm5808, %v5806, %v5761
        %v5814 = vsel %vm5808, %v5807, %v5765
        %vm5815 = vcmask 64512
        %5816 = vst.msk [vmem:[%s278] sm:$0xff] %vm5815, %v5809
        %5817 = vst.msk [vmem:[%s278 + $0x8] sm:$0xff] %vm5815, %v5810
        %5818 = vst.msk [vmem:[%s278 + $0x10] sm:$0xff] %vm5815, %v5811
        %5819 = vst.msk [vmem:[%s278 + $0x18] sm:$0xff] %vm5815, %v5812
        %5820 = vst.msk [vmem:[%s278 + $0x20] sm:$0xff] %vm5815, %v5813
        %5821 = vst.msk [vmem:[%s278 + $0x28] sm:$0xff] %vm5815, %v5814
        %v5822 = vsel %vm5766, %v4494, %v4668
        %v5823 = vsel %vm5766, %v4495, %v4669
        %v5824 = vsel %vm5766, %v4496, %v4670
        %v5825 = vsel %vm5766, %v4497, %v4671
        %v5826 = vsel %vm5766, %v4498, %v4672
        %v5827 = vsel %vm5766, %v4499, %v4673
        %v5828 = vsel %vm5773, %v5822, %v4842
        %v5829 = vsel %vm5773, %v5823, %v4843
        %v5830 = vsel %vm5773, %v5824, %v4844
        %v5831 = vsel %vm5773, %v5825, %v4845
        %v5832 = vsel %vm5773, %v5826, %v4846
        %v5833 = vsel %vm5773, %v5827, %v4847
        %v5834 = vsel %vm5780, %v5828, %v5016
        %v5835 = vsel %vm5780, %v5829, %v5017
        %v5836 = vsel %vm5780, %v5830, %v5018
        %v5837 = vsel %vm5780, %v5831, %v5019
        %v5838 = vsel %vm5780, %v5832, %v5020
        %v5839 = vsel %vm5780, %v5833, %v5021
        %v5840 = vsel %vm5787, %v5834, %v5190
        %v5841 = vsel %vm5787, %v5835, %v5191
        %v5842 = vsel %vm5787, %v5836, %v5192
        %v5843 = vsel %vm5787, %v5837, %v5193
        %v5844 = vsel %vm5787, %v5838, %v5194
        %v5845 = vsel %vm5787, %v5839, %v5195
        %v5846 = vsel %vm5794, %v5840, %v5364
        %v5847 = vsel %vm5794, %v5841, %v5365
        %v5848 = vsel %vm5794, %v5842, %v5366
        %v5849 = vsel %vm5794, %v5843, %v5367
        %v5850 = vsel %vm5794, %v5844, %v5368
        %v5851 = vsel %vm5794, %v5845, %v5369
        %v5852 = vsel %vm5801, %v5846, %v5538
        %v5853 = vsel %vm5801, %v5847, %v5539
        %v5854 = vsel %vm5801, %v5848, %v5540
        %v5855 = vsel %vm5801, %v5849, %v5541
        %v5856 = vsel %vm5801, %v5850, %v5542
        %v5857 = vsel %vm5801, %v5851, %v5543
        %v5858 = vsel %vm5808, %v5852, %v5712
        %v5859 = vsel %vm5808, %v5853, %v5713
        %v5860 = vsel %vm5808, %v5854, %v5714
        %v5861 = vsel %vm5808, %v5855, %v5715
        %v5862 = vsel %vm5808, %v5856, %v5716
        %v5863 = vsel %vm5808, %v5857, %v5717
        %5864 = vst.msk [vmem:[%s288] sm:$0xff] %vm5815, %v5858
        %5865 = vst.msk [vmem:[%s288 + $0x8] sm:$0xff] %vm5815, %v5859
        %5866 = vst.msk [vmem:[%s288 + $0x10] sm:$0xff] %vm5815, %v5860
        %5867 = vst.msk [vmem:[%s288 + $0x18] sm:$0xff] %vm5815, %v5861
        %5868 = vst.msk [vmem:[%s288 + $0x20] sm:$0xff] %vm5815, %v5862
        %5869 = vst.msk [vmem:[%s288 + $0x28] sm:$0xff] %vm5815, %v5863
        %s5870 = smul.u32 6, %s26
        %p5871 = scmp.lt.s32.totalorder %s25, 1
        %s5872 = scalar_select %p5871, %s25, 1
        %p5873 = scmp.lt.s32.totalorder %s5870, 5
        %s5874 = scalar_select %p5873, %s5870, 5
        %s5875 = smul.addr %s5872, 6
        %s5876 = sadd.s32 %s5874, %s5875
        %s5877 = smul.addr %s5876, 8
        %s5878 = scalar_lea.vmem %s2, %s5877
        %s5879 = smul.u32 6, %s26
        %p5880 = scmp.lt.s32.totalorder %s25, 1
        %s5881 = scalar_select %p5880, %s25, 1
        %p5882 = scmp.lt.s32.totalorder %s5879, 5
        %s5883 = scalar_select %p5882, %s5879, 5
        %s5884 = smul.addr %s5881, 6
        %s5885 = sadd.s32 %s5883, %s5884
        %s5886 = smul.addr %s5885, 8
        %s5887 = scalar_lea.vmem %s3, %s5886
        // Predicated region
        $region44: #{tpu_custom_call.1} parent=27 // pred_check
          %p5888 = pneg %p109
        $region45: #{tpu_custom_call.1} parent=27 // pred_check_branch
          %5890 = sbr.rel (%p5888) target = $region47
        $region46: #{tpu_custom_call.1} parent=27 // pred_region
          %s5891 = smul.u32 6, %s26
        $region47: #{tpu_custom_call.1} parent=27 // pred_fallthru
          _
        // Predicated region
        $region48: #{tpu_custom_call.1} parent=27 // pred_check
          %p5892 = pneg %p137
        $region49: #{tpu_custom_call.1} parent=27 // pred_check_branch
          %5894 = sbr.rel (%p5892) target = $region51
        $region50: #{tpu_custom_call.1} parent=27 // pred_region
          %s5895 = smul.u32 6, %s26
        $region51: #{tpu_custom_call.1} parent=27 // pred_fallthru
          _
      $region28: #{tpu_custom_call.1} parent=5 // pred_fallthru
        _
      %p5896 = scmp.le.s32.totalorder 2, %s16
      // Predicated region
      $region52: #{tpu_custom_call.1} parent=5 // pred_check
        %p5897 = pneg %p5896
      $region53: #{tpu_custom_call.1} parent=5 // pred_check_branch
        %5899 = sbr.rel (%p5897) target = $region55
      $region54: #{tpu_custom_call.1} parent=5 // pred_region
        %s5900 = ssub.s32 %s16, 2
        // Predicated region
        $region56: #{tpu_custom_call.1} parent=54 // pred_check
          %p5901 = pneg %p115
        $region57: #{tpu_custom_call.1} parent=54 // pred_check_branch
          %5903 = sbr.rel (%p5901) target = $region59
        $region58: #{tpu_custom_call.1} parent=54 // pred_region
          %s5904 = smul.u32 6, %s28
          %p5905 = scmp.lt.s32.totalorder %s27, 1
          %s5906 = scalar_select %p5905, %s27, 1
          %p5907 = scmp.lt.s32.totalorder %s5904, 5
          %s5908 = scalar_select %p5907, %s5904, 5
          %s5909 = smul.addr %s5906, 6
          %s5910 = sadd.s32 %s5908, %s5909
          %s5911 = smul.addr %s5910, 8
          %s5912 = scalar_lea.vmem %s2, %s5911
        $region59: #{tpu_custom_call.1} parent=54 // pred_fallthru
          _
        // Predicated region
        $region60: #{tpu_custom_call.1} parent=54 // pred_check
          %p5913 = pneg %p143
        $region61: #{tpu_custom_call.1} parent=54 // pred_check_branch
          %5915 = sbr.rel (%p5913) target = $region63
        $region62: #{tpu_custom_call.1} parent=54 // pred_region
          %s5916 = smul.u32 6, %s28
          %p5917 = scmp.lt.s32.totalorder %s27, 1
          %s5918 = scalar_select %p5917, %s27, 1
          %p5919 = scmp.lt.s32.totalorder %s5916, 5
          %s5920 = scalar_select %p5919, %s5916, 5
          %s5921 = smul.addr %s5918, 6
          %s5922 = sadd.s32 %s5920, %s5921
          %s5923 = smul.addr %s5922, 8
          %s5924 = scalar_lea.vmem %s3, %s5923
        $region63: #{tpu_custom_call.1} parent=54 // pred_fallthru
          _
      $region55: #{tpu_custom_call.1} parent=5 // pred_fallthru
        _
    $region6: #{tpu_custom_call.1} parent=1 // loop_footer
      %s20 = sadd.s32 1, %s16
    $region7: #{tpu_custom_call.1} parent=1 // loop_footer_branch
      %15 = sbr.rel target = $region3
    $region8: #{tpu_custom_call.1} parent=1 // loop_exit
      _
    %5925 = vsyncpa [#allocation4], 1
    %s5926 = scalar_lea.sflag [#allocation4], 1
    %5927 = vsyncpa %s5926, 1
    %5928 = vsyncpa [#allocation6], 1
    %s5929 = scalar_lea.sflag [#allocation6], 1
    %5930 = vsyncpa %s5929, 1

</llo_original>
